<compile_context>
chip_gen: v7x
topology: tpu7x:2x2x1
jax: 0.10.0
libtpu: 0.0.40
codegen_flags: <defaults>
</compile_context>

<pallas_src>
import functools
import math

import jax
import jax.numpy as jnp
from jax.experimental import pallas as pl
from jax.experimental.pallas import tpu as pltpu


def _layer_norm(x, gamma, beta, eps=1e-5):
    # x: (TQ, D) f32, gamma/beta: (1, D) f32
    mean = jnp.mean(x, axis=-1, keepdims=True)
    var = jnp.mean((x - mean) ** 2, axis=-1, keepdims=True)
    inv = jax.lax.rsqrt(var + eps)
    return (x - mean) * inv * gamma + beta


def encoder_block_kernel(
    x_ref,          # (1, TQ, D) f32   query-row tile of x (residual / LN path)
    k_ref,          # (1, S, D)  bf16  pre-projected K (full sequence)
    v_ref,          # (1, S, D)  bf16  pre-projected V (full sequence)
    wq_ref, bq_ref, wo_ref, bo_ref,
    g1_ref, be1_ref, g2_ref, be2_ref,
    wf1_ref, bf1_ref, wf2_ref, bf2_ref,
    o_ref,          # (1, TQ, D)
    ctx_s,          # (TQ, D) bf16 VMEM scratch: per-head context assembly
    *, num_heads: int,
):
    xq = x_ref[0]                                                   # (TQ, D) f32
    TQ, D = xq.shape
    Dh = D // num_heads
    scale = 1.0 / math.sqrt(Dh)

    # ---- Q projection for this row tile (bf16 MXU, f32 accumulate) ----
    q = jnp.dot(xq.astype(jnp.bfloat16), wq_ref[...],
                preferred_element_type=jnp.float32) + bq_ref[...]   # (TQ, D) f32
    qb = (q * scale).astype(jnp.bfloat16)                           # scale hoisted out of head loop

    kb = k_ref[0]                                                   # (S, D) bf16
    vb = v_ref[0]                                                   # (S, D) bf16

    # ---- Multi-head attention: per-head matmuls, heads written straight into
    #      ctx_s at their column offset (no transpose, no concatenate) ----
    # TODO(synk): for Dh < 128 the per-head lane slices / ctx_s stores are not
    # 128-lane aligned; a head-grouped / head-major layout would make them
    # lane-dense but pads K/V lanes to 128 when Dh < 128 — left as a static loop
    # here (num_heads is small; use lax.fori_loop(unroll=2) for very large H).
    for h in range(num_heads):                                      # static head loop
        lo = h * Dh
        qh = qb[:, lo:lo + Dh]                                      # (TQ, Dh) bf16
        kh = kb[:, lo:lo + Dh]                                      # (S,  Dh) bf16
        vh = vb[:, lo:lo + Dh]                                      # (S,  Dh) bf16
        # scores = qh @ kh^T without materializing a transpose.
        scores = jax.lax.dot_general(
            qh, kh, (((1,), (1,)), ((), ())),
            preferred_element_type=jnp.float32)                     # (TQ, S) f32
        scores = scores - jnp.max(scores, axis=-1, keepdims=True)
        p = jnp.exp(scores.astype(jnp.bfloat16))                    # bf16 EUP path (v6e/v7x)
        denom = jnp.sum(p.astype(jnp.float32), axis=-1, keepdims=True)   # row-sum in f32
        inv = pl.reciprocal(denom, approx=True)                     # EUP reciprocal
        ctx_h = jnp.dot(p, vh, preferred_element_type=jnp.float32) * inv  # normalize after PV
        ctx_s[:, pl.ds(lo, Dh)] = ctx_h.astype(jnp.bfloat16)

    attn = jnp.dot(ctx_s[...], wo_ref[...],
                   preferred_element_type=jnp.float32) + bo_ref[...]   # (TQ, D) f32

    # ---- Residual + LayerNorm 1 (f32) ----
    y1 = _layer_norm(xq + attn, g1_ref[...], be1_ref[...])

    # ---- FeedForward: Linear -> ReLU -> Linear (bf16 MXU, f32 accumulate) ----
    h1 = jnp.dot(y1.astype(jnp.bfloat16), wf1_ref[...],
                 preferred_element_type=jnp.float32) + bf1_ref[...]
    h1 = jnp.maximum(h1, 0.0)
    ff = jnp.dot(h1.astype(jnp.bfloat16), wf2_ref[...],
                 preferred_element_type=jnp.float32) + bf2_ref[...]

    # ---- Residual + LayerNorm 2 (f32) ----
    y2 = _layer_norm(y1 + ff, g2_ref[...], be2_ref[...])

    o_ref[0] = y2.astype(o_ref.dtype)


def encoder_block(x, params, num_heads):
    B, S, D = x.shape
    assert D % num_heads == 0, "d_model must be divisible by num_heads"
    (wq, bq, wk, bk, wv, bv, wo, bo,
     g1, be1, g2, be2, wf1, bf1, wf2, bf2) = params
    d_ff = wf1.shape[1]
    bf16 = jnp.bfloat16

    # bf16 weights for the MXU (halves weight DMA bytes and VMEM footprint).
    # Biases / LayerNorm params stay f32 (added / applied in f32 on the VPU).
    wq_b, wo_b = wq.astype(bf16), wo.astype(bf16)
    wf1_b, wf2_b = wf1.astype(bf16), wf2.astype(bf16)

    # K/V projections for the whole sequence, hoisted out of the kernel
    # (plain XLA matmuls with bf16 operands / f32 accumulation, emitted as bf16).
    # TODO(synk): for very long S, tile K/V along S with an online-softmax inner
    # loop instead of keeping the full-S (1,S,D) K/V blocks resident.
    xb = x.astype(bf16)
    k = (jnp.dot(xb, wk.astype(bf16), preferred_element_type=jnp.float32) + bk).astype(bf16)
    v = (jnp.dot(xb, wv.astype(bf16), preferred_element_type=jnp.float32) + bv).astype(bf16)

    # Query-row tile size: keep activation VMEM bounded for long sequences;
    # degenerate to TQ=S for short sequences.
    if S % 256 == 0:
        TQ = 256
    elif S % 128 == 0:
        TQ = 128
    else:
        TQ = S
    n_q = S // TQ

    # Generation-aware VMEM limit: ~85% of physical capacity (≈54 MiB on v7x,
    # ≈108 MiB on v5e/v6e) instead of a hard-coded 64 MiB.
    try:
        cap = getattr(pltpu.get_tpu_info(), "vmem_capacity_bytes", None)
        vmem_limit = int(cap * 0.85) if cap else 64 * 1024 * 1024
    except Exception:
        vmem_limit = 64 * 1024 * 1024

    kernel = functools.partial(encoder_block_kernel, num_heads=num_heads)
    cost = pl.CostEstimate(
        flops=int(4 * B * S * D * (D + S + d_ff)),
        transcendentals=int(B * num_heads * S * S),
        bytes_accessed=int(12 * B * S * D + 4 * D * (D + d_ff)),
    )

    def call(weight_mode):
        # Constant (never re-indexed) weight / bias / LayerNorm blocks.
        const = lambda shape: pl.BlockSpec(
            shape, lambda b, qt: (0,) * len(shape), pipeline_mode=weight_mode)
        in_specs = [
            pl.BlockSpec((1, TQ, D), lambda b, qt: (b, qt, 0)),   # x (query rows)
            pl.BlockSpec((1, S, D), lambda b, qt: (b, 0, 0)),     # K (full seq, bf16)
            pl.BlockSpec((1, S, D), lambda b, qt: (b, 0, 0)),     # V (full seq, bf16)
            const((D, D)), const((1, D)),                         # Wq, bq
            const((D, D)), const((1, D)),                         # Wo, bo
            const((1, D)), const((1, D)),                         # ln1 gamma, beta
            const((1, D)), const((1, D)),                         # ln2 gamma, beta
            const((D, d_ff)), const((1, d_ff)),                   # FFN W1, b1
            const((d_ff, D)), const((1, D)),                      # FFN W2, b2
        ]
        return pl.pallas_call(
            kernel,
            out_shape=jax.ShapeDtypeStruct((B, S, D), x.dtype),
            grid_spec=pltpu.PrefetchScalarGridSpec(
                num_scalar_prefetch=0,
                grid=(B, n_q),
                in_specs=in_specs,
                out_specs=pl.BlockSpec((1, TQ, D), lambda b, qt: (b, qt, 0)),
                scratch_shapes=[
                    pltpu.VMEM((TQ, D), jnp.bfloat16),   # per-head context assembly (bf16)
                ],
            ),
            compiler_params=pltpu.CompilerParams(
                # No cross-step state: both batch and query-tile axes are parallel
                # (megacore sharding on v7x even when B is small).
                dimension_semantics=("parallel", "parallel"),
                vmem_limit_bytes=vmem_limit,
            ),
            cost_estimate=cost,
        )(x, k, v,
          wq_b, bq, wo_b, bo,
          g1, be1, g2, be2,
          wf1_b, bf1, wf2_b, bf2)

    try:
        # Single-buffer the constant weight blocks (they are never re-fetched;
        # default double-buffering would duplicate all weight VMEM).
        return call(pl.Buffered(1))
    except Exception:
        # TODO(synk): fallback to default pipelining if Buffered(1) is rejected
        # by this Pallas/Mosaic version.
        return call(None)


# ----- pure-JAX f32 reference for correctness check -----
def encoder_block_ref(x, params, num_heads):
    (wq, bq, wk, bk, wv, bv, wo, bo,
     g1, be1, g2, be2, wf1, bf1, wf2, bf2) = params
    B, S, D = x.shape
    Dh = D // num_heads

    def ln(v, g, b, eps=1e-5):
        m = jnp.mean(v, -1, keepdims=True)
        var = jnp.mean((v - m) ** 2, -1, keepdims=True)
        return (v - m) * jax.lax.rsqrt(var + eps) * g + b

    q = x @ wq + bq
    k = x @ wk + bk
    v = x @ wv + bv
    q = q.reshape(B, S, num_heads, Dh).transpose(0, 2, 1, 3)
    k = k.reshape(B, S, num_heads, Dh).transpose(0, 2, 1, 3)
    v = v.reshape(B, S, num_heads, Dh).transpose(0, 2, 1, 3)
    scores = jnp.einsum("bhqd,bhkd->bhqk", q, k) / math.sqrt(Dh)
    p = jax.nn.softmax(scores, axis=-1)
    ctx = jnp.einsum("bhqk,bhkd->bhqd", p, v).transpose(0, 2, 1, 3).reshape(B, S, D)
    attn_out = ctx @ wo + bo
    y1 = ln(x + attn_out, g1, be1)
    ff = jnp.maximum(y1 @ wf1 + bf1, 0.0) @ wf2 + bf2
    return ln(y1 + ff, g2, be2)


def init_params(key, d_model, d_ff):
    ks = jax.random.split(key, 10)
    s = 0.05
    wq = jax.random.normal(ks[0], (d_model, d_model), jnp.float32) * s
    wk = jax.random.normal(ks[1], (d_model, d_model), jnp.float32) * s
    wv = jax.random.normal(ks[2], (d_model, d_model), jnp.float32) * s
    wo = jax.random.normal(ks[3], (d_model, d_model), jnp.float32) * s
    bq = jax.random.normal(ks[4], (1, d_model), jnp.float32) * s
    bk = jax.random.normal(ks[5], (1, d_model), jnp.float32) * s
    bv = jax.random.normal(ks[6], (1, d_model), jnp.float32) * s
    bo = jax.random.normal(ks[7], (1, d_model), jnp.float32) * s
    g1 = jnp.ones((1, d_model), jnp.float32)        # LayerNorm defaults
    be1 = jnp.zeros((1, d_model), jnp.float32)
    g2 = jnp.ones((1, d_model), jnp.float32)
    be2 = jnp.zeros((1, d_model), jnp.float32)
    wf1 = jax.random.normal(ks[8], (d_model, d_ff), jnp.float32) * s
    bf1 = jnp.zeros((1, d_ff), jnp.float32)
    wf2 = jax.random.normal(ks[9], (d_ff, d_model), jnp.float32) * s
    bf2 = jnp.zeros((1, d_model), jnp.float32)
    return (wq, bq, wk, bk, wv, bv, wo, bo,
            g1, be1, g2, be2, wf1, bf1, wf2, bf2)


if __name__ == "__main__":
    B, S, d_model, d_ff, num_heads = 2, 8, 32, 64, 4
    key = jax.random.PRNGKey(0)
    kx, kp = jax.random.split(key)
    x = jax.random.normal(kx, (B, S, d_model), jnp.float32)
    params = init_params(kp, d_model, d_ff)

    out = encoder_block(x, params, num_heads)
    out = jax.block_until_ready(out)

    ref = encoder_block_ref(x, params, num_heads)
    assert out.shape == (B, S, d_model)
    # bf16 matmul operands + bf16 exp + approx reciprocal -> relaxed tolerance vs f32 reference.
    assert jnp.allclose(out, ref, atol=2e-2, rtol=2e-2), "mismatch vs reference"
    print("KERNEL_OK")
</pallas_src>

<mosaic_0001>
module attributes {stable_mosaic.version = 11 : i64} {
  func.func @encoder_block_kernel(%arg0: i32, %arg1: i32, %arg2: memref<1x8x32xf32, #tpu.memory_space<vmem>>, %arg3: memref<1x8x32xbf16, #tpu.memory_space<vmem>>, %arg4: memref<1x8x32xbf16, #tpu.memory_space<vmem>>, %arg5: memref<32x32xbf16, #tpu.memory_space<vmem>>, %arg6: memref<1x32xf32, #tpu.memory_space<vmem>>, %arg7: memref<32x32xbf16, #tpu.memory_space<vmem>>, %arg8: memref<1x32xf32, #tpu.memory_space<vmem>>, %arg9: memref<1x32xf32, #tpu.memory_space<vmem>>, %arg10: memref<1x32xf32, #tpu.memory_space<vmem>>, %arg11: memref<1x32xf32, #tpu.memory_space<vmem>>, %arg12: memref<1x32xf32, #tpu.memory_space<vmem>>, %arg13: memref<32x64xbf16, #tpu.memory_space<vmem>>, %arg14: memref<1x64xf32, #tpu.memory_space<vmem>>, %arg15: memref<64x32xbf16, #tpu.memory_space<vmem>>, %arg16: memref<1x32xf32, #tpu.memory_space<vmem>>, %arg17: memref<1x8x32xf32, #tpu.memory_space<vmem>>, %arg18: memref<8x32xbf16, #tpu.memory_space<vmem>>) attributes {dimension_semantics = [#tpu.dimension_semantics<parallel>, #tpu.dimension_semantics<parallel>], iteration_bounds = array<i64: 2, 1>, scalar_prefetch = 0 : i64, scratch_operands = 1 : i64, tpu.core_type = #tpu.core_type<tc>, window_params = [{transform_indices = @transform_0, window_bounds = array<i64: 1, 8, 32>}, {transform_indices = @transform_1, window_bounds = array<i64: 1, 8, 32>}, {transform_indices = @transform_2, window_bounds = array<i64: 1, 8, 32>}, {pipeline_mode = #tpu.pipeline_mode<synchronous>, transform_indices = @transform_3, window_bounds = array<i64: 32, 32>}, {pipeline_mode = #tpu.pipeline_mode<synchronous>, transform_indices = @transform_4, window_bounds = array<i64: 1, 32>}, {pipeline_mode = #tpu.pipeline_mode<synchronous>, transform_indices = @transform_5, window_bounds = array<i64: 32, 32>}, {pipeline_mode = #tpu.pipeline_mode<synchronous>, transform_indices = @transform_6, window_bounds = array<i64: 1, 32>}, {pipeline_mode = #tpu.pipeline_mode<synchronous>, transform_indices = @transform_7, window_bounds = array<i64: 1, 32>}, {pipeline_mode = #tpu.pipeline_mode<synchronous>, transform_indices = @transform_8, window_bounds = array<i64: 1, 32>}, {pipeline_mode = #tpu.pipeline_mode<synchronous>, transform_indices = @transform_9, window_bounds = array<i64: 1, 32>}, {pipeline_mode = #tpu.pipeline_mode<synchronous>, transform_indices = @transform_10, window_bounds = array<i64: 1, 32>}, {pipeline_mode = #tpu.pipeline_mode<synchronous>, transform_indices = @transform_11, window_bounds = array<i64: 32, 64>}, {pipeline_mode = #tpu.pipeline_mode<synchronous>, transform_indices = @transform_12, window_bounds = array<i64: 1, 64>}, {pipeline_mode = #tpu.pipeline_mode<synchronous>, transform_indices = @transform_13, window_bounds = array<i64: 64, 32>}, {pipeline_mode = #tpu.pipeline_mode<synchronous>, transform_indices = @transform_14, window_bounds = array<i64: 1, 32>}, {transform_indices = @transform_15, window_bounds = array<i64: 1, 8, 32>}]} {
    %c0 = arith.constant 0 : index
    %c0_0 = arith.constant 0 : index
    %c0_1 = arith.constant 0 : index
    %0 = vector.load %arg2[%c0, %c0_0, %c0_1] : memref<1x8x32xf32, #tpu.memory_space<vmem>>, vector<1x8x32xf32>
    %1 = vector.shape_cast %0 : vector<1x8x32xf32> to vector<8x32xf32>
    %2 = arith.truncf %1 : vector<8x32xf32> to vector<8x32xbf16>
    %c0_2 = arith.constant 0 : index
    %c0_3 = arith.constant 0 : index
    %3 = vector.load %arg5[%c0_2, %c0_3] : memref<32x32xbf16, #tpu.memory_space<vmem>>, vector<32x32xbf16>
    %cst = arith.constant dense<0.000000e+00> : vector<8x32xf32>
    %4 = tpu.matmul %2, %3, %cst {dimension_numbers = #tpu.dot_dimension_numbers<[1], [0], [0], [1], [0, 0, 1, 1], [], []>} : vector<8x32xbf16>, vector<32x32xbf16>, vector<8x32xf32> -> vector<8x32xf32>
    %c0_4 = arith.constant 0 : index
    %c0_5 = arith.constant 0 : index
    %5 = vector.load %arg6[%c0_4, %c0_5] : memref<1x32xf32, #tpu.memory_space<vmem>>, vector<1x32xf32>
    %6 = vector.broadcast %5 : vector<1x32xf32> to vector<8x32xf32>
    %7 = arith.addf %4, %6 : vector<8x32xf32>
    %cst_6 = arith.constant 0.353553385 : f32
    %8 = vector.broadcast %cst_6 : f32 to vector<8x32xf32>
    %9 = arith.mulf %7, %8 : vector<8x32xf32>
    %10 = arith.truncf %9 : vector<8x32xf32> to vector<8x32xbf16>
    %c0_7 = arith.constant 0 : index
    %c0_8 = arith.constant 0 : index
    %c0_9 = arith.constant 0 : index
    %11 = vector.load %arg3[%c0_7, %c0_8, %c0_9] : memref<1x8x32xbf16, #tpu.memory_space<vmem>>, vector<1x8x32xbf16>
    %12 = vector.shape_cast %11 : vector<1x8x32xbf16> to vector<8x32xbf16>
    %c0_10 = arith.constant 0 : index
    %c0_11 = arith.constant 0 : index
    %c0_12 = arith.constant 0 : index
    %13 = vector.load %arg4[%c0_10, %c0_11, %c0_12] : memref<1x8x32xbf16, #tpu.memory_space<vmem>>, vector<1x8x32xbf16>
    %14 = vector.shape_cast %13 : vector<1x8x32xbf16> to vector<8x32xbf16>
    %15 = vector.extract_strided_slice %10 {offsets = [0, 0], sizes = [8, 8], strides = [1, 1]} : vector<8x32xbf16> to vector<8x8xbf16>
    %16 = vector.extract_strided_slice %12 {offsets = [0, 0], sizes = [8, 8], strides = [1, 1]} : vector<8x32xbf16> to vector<8x8xbf16>
    %17 = vector.extract_strided_slice %14 {offsets = [0, 0], sizes = [8, 8], strides = [1, 1]} : vector<8x32xbf16> to vector<8x8xbf16>
    %cst_13 = arith.constant dense<0.000000e+00> : vector<8x8xf32>
    %18 = tpu.matmul %15, %16, %cst_13 {dimension_numbers = #tpu.dot_dimension_numbers<[1], [1], [0], [0], [0, 0, 1, 0], [], []>} : vector<8x8xbf16>, vector<8x8xbf16>, vector<8x8xf32> -> vector<8x8xf32>
    %cst_14 = arith.constant dense<0xFF800000> : vector<8xf32>
    %19 = vector.multi_reduction <maximumf>, %18, %cst_14 [1] : vector<8x8xf32> to vector<8xf32>
    %20 = vector.shape_cast %19 : vector<8xf32> to vector<8x1xf32>
    %21 = vector.broadcast %20 : vector<8x1xf32> to vector<8x8xf32>
    %22 = arith.subf %18, %21 : vector<8x8xf32>
    %23 = arith.truncf %22 : vector<8x8xf32> to vector<8x8xbf16>
    %24 = math.exp %23 : vector<8x8xbf16>
    %25 = arith.extf %24 : vector<8x8xbf16> to vector<8x8xf32>
    %cst_15 = arith.constant dense<0.000000e+00> : vector<8xf32>
    %26 = vector.multi_reduction <add>, %25, %cst_15 [1] : vector<8x8xf32> to vector<8xf32>
    %27 = vector.shape_cast %26 : vector<8xf32> to vector<8x1xf32>
    %28 = tpu.reciprocal %27 {approx = true} : vector<8x1xf32> -> vector<8x1xf32>
    %cst_16 = arith.constant dense<0.000000e+00> : vector<8x8xf32>
    %29 = tpu.matmul %24, %17, %cst_16 {dimension_numbers = #tpu.dot_dimension_numbers<[1], [0], [0], [1], [0, 0, 1, 1], [], []>} : vector<8x8xbf16>, vector<8x8xbf16>, vector<8x8xf32> -> vector<8x8xf32>
    %30 = vector.broadcast %28 : vector<8x1xf32> to vector<8x8xf32>
    %31 = arith.mulf %29, %30 : vector<8x8xf32>
    %32 = arith.truncf %31 : vector<8x8xf32> to vector<8x8xbf16>
    %c0_17 = arith.constant 0 : index
    %c0_18 = arith.constant 0 : index
    %33 = vector.load %arg18[%c0_17, %c0_18] : memref<8x32xbf16, #tpu.memory_space<vmem>>, vector<8x8xbf16>
    tpu.vector_store %arg18[%c0_17, %c0_18], %32 {strides = array<i32>} : memref<8x32xbf16, #tpu.memory_space<vmem>>, vector<8x8xbf16>,
    %34 = vector.extract_strided_slice %10 {offsets = [0, 8], sizes = [8, 8], strides = [1, 1]} : vector<8x32xbf16> to vector<8x8xbf16>
    %35 = vector.extract_strided_slice %12 {offsets = [0, 8], sizes = [8, 8], strides = [1, 1]} : vector<8x32xbf16> to vector<8x8xbf16>
    %36 = vector.extract_strided_slice %14 {offsets = [0, 8], sizes = [8, 8], strides = [1, 1]} : vector<8x32xbf16> to vector<8x8xbf16>
    %cst_19 = arith.constant dense<0.000000e+00> : vector<8x8xf32>
    %37 = tpu.matmul %34, %35, %cst_19 {dimension_numbers = #tpu.dot_dimension_numbers<[1], [1], [0], [0], [0, 0, 1, 0], [], []>} : vector<8x8xbf16>, vector<8x8xbf16>, vector<8x8xf32> -> vector<8x8xf32>
    %cst_20 = arith.constant dense<0xFF800000> : vector<8xf32>
    %38 = vector.multi_reduction <maximumf>, %37, %cst_20 [1] : vector<8x8xf32> to vector<8xf32>
    %39 = vector.shape_cast %38 : vector<8xf32> to vector<8x1xf32>
    %40 = vector.broadcast %39 : vector<8x1xf32> to vector<8x8xf32>
    %41 = arith.subf %37, %40 : vector<8x8xf32>
    %42 = arith.truncf %41 : vector<8x8xf32> to vector<8x8xbf16>
    %43 = math.exp %42 : vector<8x8xbf16>
    %44 = arith.extf %43 : vector<8x8xbf16> to vector<8x8xf32>
    %cst_21 = arith.constant dense<0.000000e+00> : vector<8xf32>
    %45 = vector.multi_reduction <add>, %44, %cst_21 [1] : vector<8x8xf32> to vector<8xf32>
    %46 = vector.shape_cast %45 : vector<8xf32> to vector<8x1xf32>
    %47 = tpu.reciprocal %46 {approx = true} : vector<8x1xf32> -> vector<8x1xf32>
    %cst_22 = arith.constant dense<0.000000e+00> : vector<8x8xf32>
    %48 = tpu.matmul %43, %36, %cst_22 {dimension_numbers = #tpu.dot_dimension_numbers<[1], [0], [0], [1], [0, 0, 1, 1], [], []>} : vector<8x8xbf16>, vector<8x8xbf16>, vector<8x8xf32> -> vector<8x8xf32>
    %49 = vector.broadcast %47 : vector<8x1xf32> to vector<8x8xf32>
    %50 = arith.mulf %48, %49 : vector<8x8xf32>
    %51 = arith.truncf %50 : vector<8x8xf32> to vector<8x8xbf16>
    %c0_23 = arith.constant 0 : index
    %c8 = arith.constant 8 : index
    %52 = vector.load %arg18[%c0_23, %c8] : memref<8x32xbf16, #tpu.memory_space<vmem>>, vector<8x8xbf16>
    tpu.vector_store %arg18[%c0_23, %c8], %51 {strides = array<i32>} : memref<8x32xbf16, #tpu.memory_space<vmem>>, vector<8x8xbf16>,
    %53 = vector.extract_strided_slice %10 {offsets = [0, 16], sizes = [8, 8], strides = [1, 1]} : vector<8x32xbf16> to vector<8x8xbf16>
    %54 = vector.extract_strided_slice %12 {offsets = [0, 16], sizes = [8, 8], strides = [1, 1]} : vector<8x32xbf16> to vector<8x8xbf16>
    %55 = vector.extract_strided_slice %14 {offsets = [0, 16], sizes = [8, 8], strides = [1, 1]} : vector<8x32xbf16> to vector<8x8xbf16>
    %cst_24 = arith.constant dense<0.000000e+00> : vector<8x8xf32>
    %56 = tpu.matmul %53, %54, %cst_24 {dimension_numbers = #tpu.dot_dimension_numbers<[1], [1], [0], [0], [0, 0, 1, 0], [], []>} : vector<8x8xbf16>, vector<8x8xbf16>, vector<8x8xf32> -> vector<8x8xf32>
    %cst_25 = arith.constant dense<0xFF800000> : vector<8xf32>
    %57 = vector.multi_reduction <maximumf>, %56, %cst_25 [1] : vector<8x8xf32> to vector<8xf32>
    %58 = vector.shape_cast %57 : vector<8xf32> to vector<8x1xf32>
    %59 = vector.broadcast %58 : vector<8x1xf32> to vector<8x8xf32>
    %60 = arith.subf %56, %59 : vector<8x8xf32>
    %61 = arith.truncf %60 : vector<8x8xf32> to vector<8x8xbf16>
    %62 = math.exp %61 : vector<8x8xbf16>
    %63 = arith.extf %62 : vector<8x8xbf16> to vector<8x8xf32>
    %cst_26 = arith.constant dense<0.000000e+00> : vector<8xf32>
    %64 = vector.multi_reduction <add>, %63, %cst_26 [1] : vector<8x8xf32> to vector<8xf32>
    %65 = vector.shape_cast %64 : vector<8xf32> to vector<8x1xf32>
    %66 = tpu.reciprocal %65 {approx = true} : vector<8x1xf32> -> vector<8x1xf32>
    %cst_27 = arith.constant dense<0.000000e+00> : vector<8x8xf32>
    %67 = tpu.matmul %62, %55, %cst_27 {dimension_numbers = #tpu.dot_dimension_numbers<[1], [0], [0], [1], [0, 0, 1, 1], [], []>} : vector<8x8xbf16>, vector<8x8xbf16>, vector<8x8xf32> -> vector<8x8xf32>
    %68 = vector.broadcast %66 : vector<8x1xf32> to vector<8x8xf32>
    %69 = arith.mulf %67, %68 : vector<8x8xf32>
    %70 = arith.truncf %69 : vector<8x8xf32> to vector<8x8xbf16>
    %c0_28 = arith.constant 0 : index
    %c16 = arith.constant 16 : index
    %71 = vector.load %arg18[%c0_28, %c16] : memref<8x32xbf16, #tpu.memory_space<vmem>>, vector<8x8xbf16>
    tpu.vector_store %arg18[%c0_28, %c16], %70 {strides = array<i32>} : memref<8x32xbf16, #tpu.memory_space<vmem>>, vector<8x8xbf16>,
    %72 = vector.extract_strided_slice %10 {offsets = [0, 24], sizes = [8, 8], strides = [1, 1]} : vector<8x32xbf16> to vector<8x8xbf16>
    %73 = vector.extract_strided_slice %12 {offsets = [0, 24], sizes = [8, 8], strides = [1, 1]} : vector<8x32xbf16> to vector<8x8xbf16>
    %74 = vector.extract_strided_slice %14 {offsets = [0, 24], sizes = [8, 8], strides = [1, 1]} : vector<8x32xbf16> to vector<8x8xbf16>
    %cst_29 = arith.constant dense<0.000000e+00> : vector<8x8xf32>
    %75 = tpu.matmul %72, %73, %cst_29 {dimension_numbers = #tpu.dot_dimension_numbers<[1], [1], [0], [0], [0, 0, 1, 0], [], []>} : vector<8x8xbf16>, vector<8x8xbf16>, vector<8x8xf32> -> vector<8x8xf32>
    %cst_30 = arith.constant dense<0xFF800000> : vector<8xf32>
    %76 = vector.multi_reduction <maximumf>, %75, %cst_30 [1] : vector<8x8xf32> to vector<8xf32>
    %77 = vector.shape_cast %76 : vector<8xf32> to vector<8x1xf32>
    %78 = vector.broadcast %77 : vector<8x1xf32> to vector<8x8xf32>
    %79 = arith.subf %75, %78 : vector<8x8xf32>
    %80 = arith.truncf %79 : vector<8x8xf32> to vector<8x8xbf16>
    %81 = math.exp %80 : vector<8x8xbf16>
    %82 = arith.extf %81 : vector<8x8xbf16> to vector<8x8xf32>
    %cst_31 = arith.constant dense<0.000000e+00> : vector<8xf32>
    %83 = vector.multi_reduction <add>, %82, %cst_31 [1] : vector<8x8xf32> to vector<8xf32>
    %84 = vector.shape_cast %83 : vector<8xf32> to vector<8x1xf32>
    %85 = tpu.reciprocal %84 {approx = true} : vector<8x1xf32> -> vector<8x1xf32>
    %cst_32 = arith.constant dense<0.000000e+00> : vector<8x8xf32>
    %86 = tpu.matmul %81, %74, %cst_32 {dimension_numbers = #tpu.dot_dimension_numbers<[1], [0], [0], [1], [0, 0, 1, 1], [], []>} : vector<8x8xbf16>, vector<8x8xbf16>, vector<8x8xf32> -> vector<8x8xf32>
    %87 = vector.broadcast %85 : vector<8x1xf32> to vector<8x8xf32>
    %88 = arith.mulf %86, %87 : vector<8x8xf32>
    %89 = arith.truncf %88 : vector<8x8xf32> to vector<8x8xbf16>
    %c0_33 = arith.constant 0 : index
    %c24 = arith.constant 24 : index
    %90 = vector.load %arg18[%c0_33, %c24] : memref<8x32xbf16, #tpu.memory_space<vmem>>, vector<8x8xbf16>
    tpu.vector_store %arg18[%c0_33, %c24], %89 {strides = array<i32>} : memref<8x32xbf16, #tpu.memory_space<vmem>>, vector<8x8xbf16>,
    %c0_34 = arith.constant 0 : index
    %c0_35 = arith.constant 0 : index
    %91 = vector.load %arg18[%c0_34, %c0_35] : memref<8x32xbf16, #tpu.memory_space<vmem>>, vector<8x32xbf16>
    %c0_36 = arith.constant 0 : index
    %c0_37 = arith.constant 0 : index
    %92 = vector.load %arg7[%c0_36, %c0_37] : memref<32x32xbf16, #tpu.memory_space<vmem>>, vector<32x32xbf16>
    %cst_38 = arith.constant dense<0.000000e+00> : vector<8x32xf32>
    %93 = tpu.matmul %91, %92, %cst_38 {dimension_numbers = #tpu.dot_dimension_numbers<[1], [0], [0], [1], [0, 0, 1, 1], [], []>} : vector<8x32xbf16>, vector<32x32xbf16>, vector<8x32xf32> -> vector<8x32xf32>
    %c0_39 = arith.constant 0 : index
    %c0_40 = arith.constant 0 : index
    %94 = vector.load %arg8[%c0_39, %c0_40] : memref<1x32xf32, #tpu.memory_space<vmem>>, vector<1x32xf32>
    %95 = vector.broadcast %94 : vector<1x32xf32> to vector<8x32xf32>
    %96 = arith.addf %93, %95 : vector<8x32xf32>
    %97 = arith.addf %1, %96 : vector<8x32xf32>
    %c0_41 = arith.constant 0 : index
    %c0_42 = arith.constant 0 : index
    %98 = vector.load %arg9[%c0_41, %c0_42] : memref<1x32xf32, #tpu.memory_space<vmem>>, vector<1x32xf32>
    %c0_43 = arith.constant 0 : index
    %c0_44 = arith.constant 0 : index
    %99 = vector.load %arg10[%c0_43, %c0_44] : memref<1x32xf32, #tpu.memory_space<vmem>>, vector<1x32xf32>
    %cst_45 = arith.constant dense<0.000000e+00> : vector<8xf32>
    %100 = vector.multi_reduction <add>, %97, %cst_45 [1] : vector<8x32xf32> to vector<8xf32>
    %101 = vector.shape_cast %100 : vector<8xf32> to vector<8x1xf32>
    %cst_46 = arith.constant 3.200000e+01 : f32
    %102 = vector.broadcast %cst_46 : f32 to vector<8x1xf32>
    %103 = arith.divf %101, %102 : vector<8x1xf32>
    %104 = vector.broadcast %103 : vector<8x1xf32> to vector<8x32xf32>
    %105 = arith.subf %97, %104 : vector<8x32xf32>
    %106 = arith.mulf %105, %105 : vector<8x32xf32>
    %cst_47 = arith.constant dense<0.000000e+00> : vector<8xf32>
    %107 = vector.multi_reduction <add>, %106, %cst_47 [1] : vector<8x32xf32> to vector<8xf32>
    %108 = vector.shape_cast %107 : vector<8xf32> to vector<8x1xf32>
    %cst_48 = arith.constant 3.200000e+01 : f32
    %109 = vector.broadcast %cst_48 : f32 to vector<8x1xf32>
    %110 = arith.divf %108, %109 : vector<8x1xf32>
    %cst_49 = arith.constant 9.99999974E-6 : f32
    %111 = vector.broadcast %cst_49 : f32 to vector<8x1xf32>
    %112 = arith.addf %110, %111 : vector<8x1xf32>
    %113 = math.rsqrt %112 : vector<8x1xf32>
    %114 = vector.broadcast %103 : vector<8x1xf32> to vector<8x32xf32>
    %115 = arith.subf %97, %114 : vector<8x32xf32>
    %116 = vector.broadcast %113 : vector<8x1xf32> to vector<8x32xf32>
    %117 = arith.mulf %115, %116 : vector<8x32xf32>
    %118 = vector.broadcast %98 : vector<1x32xf32> to vector<8x32xf32>
    %119 = arith.mulf %117, %118 : vector<8x32xf32>
    %120 = vector.broadcast %99 : vector<1x32xf32> to vector<8x32xf32>
    %121 = arith.addf %119, %120 : vector<8x32xf32>
    %122 = arith.truncf %121 : vector<8x32xf32> to vector<8x32xbf16>
    %c0_50 = arith.constant 0 : index
    %c0_51 = arith.constant 0 : index
    %123 = vector.load %arg13[%c0_50, %c0_51] : memref<32x64xbf16, #tpu.memory_space<vmem>>, vector<32x64xbf16>
    %cst_52 = arith.constant dense<0.000000e+00> : vector<8x64xf32>
    %124 = tpu.matmul %122, %123, %cst_52 {dimension_numbers = #tpu.dot_dimension_numbers<[1], [0], [0], [1], [0, 0, 1, 1], [], []>} : vector<8x32xbf16>, vector<32x64xbf16>, vector<8x64xf32> -> vector<8x64xf32>
    %c0_53 = arith.constant 0 : index
    %c0_54 = arith.constant 0 : index
    %125 = vector.load %arg14[%c0_53, %c0_54] : memref<1x64xf32, #tpu.memory_space<vmem>>, vector<1x64xf32>
    %126 = vector.broadcast %125 : vector<1x64xf32> to vector<8x64xf32>
    %127 = arith.addf %124, %126 : vector<8x64xf32>
    %cst_55 = arith.constant 0.000000e+00 : f32
    %128 = vector.broadcast %cst_55 : f32 to vector<8x64xf32>
    %129 = arith.maximumf %127, %128 : vector<8x64xf32>
    %130 = arith.truncf %129 : vector<8x64xf32> to vector<8x64xbf16>
    %c0_56 = arith.constant 0 : index
    %c0_57 = arith.constant 0 : index
    %131 = vector.load %arg15[%c0_56, %c0_57] : memref<64x32xbf16, #tpu.memory_space<vmem>>, vector<64x32xbf16>
    %cst_58 = arith.constant dense<0.000000e+00> : vector<8x32xf32>
    %132 = tpu.matmul %130, %131, %cst_58 {dimension_numbers = #tpu.dot_dimension_numbers<[1], [0], [0], [1], [0, 0, 1, 1], [], []>} : vector<8x64xbf16>, vector<64x32xbf16>, vector<8x32xf32> -> vector<8x32xf32>
    %c0_59 = arith.constant 0 : index
    %c0_60 = arith.constant 0 : index
    %133 = vector.load %arg16[%c0_59, %c0_60] : memref<1x32xf32, #tpu.memory_space<vmem>>, vector<1x32xf32>
    %134 = vector.broadcast %133 : vector<1x32xf32> to vector<8x32xf32>
    %135 = arith.addf %132, %134 : vector<8x32xf32>
    %136 = arith.addf %121, %135 : vector<8x32xf32>
    %c0_61 = arith.constant 0 : index
    %c0_62 = arith.constant 0 : index
    %137 = vector.load %arg11[%c0_61, %c0_62] : memref<1x32xf32, #tpu.memory_space<vmem>>, vector<1x32xf32>
    %c0_63 = arith.constant 0 : index
    %c0_64 = arith.constant 0 : index
    %138 = vector.load %arg12[%c0_63, %c0_64] : memref<1x32xf32, #tpu.memory_space<vmem>>, vector<1x32xf32>
    %cst_65 = arith.constant dense<0.000000e+00> : vector<8xf32>
    %139 = vector.multi_reduction <add>, %136, %cst_65 [1] : vector<8x32xf32> to vector<8xf32>
    %140 = vector.shape_cast %139 : vector<8xf32> to vector<8x1xf32>
    %cst_66 = arith.constant 3.200000e+01 : f32
    %141 = vector.broadcast %cst_66 : f32 to vector<8x1xf32>
    %142 = arith.divf %140, %141 : vector<8x1xf32>
    %143 = vector.broadcast %142 : vector<8x1xf32> to vector<8x32xf32>
    %144 = arith.subf %136, %143 : vector<8x32xf32>
    %145 = arith.mulf %144, %144 : vector<8x32xf32>
    %cst_67 = arith.constant dense<0.000000e+00> : vector<8xf32>
    %146 = vector.multi_reduction <add>, %145, %cst_67 [1] : vector<8x32xf32> to vector<8xf32>
    %147 = vector.shape_cast %146 : vector<8xf32> to vector<8x1xf32>
    %cst_68 = arith.constant 3.200000e+01 : f32
    %148 = vector.broadcast %cst_68 : f32 to vector<8x1xf32>
    %149 = arith.divf %147, %148 : vector<8x1xf32>
    %cst_69 = arith.constant 9.99999974E-6 : f32
    %150 = vector.broadcast %cst_69 : f32 to vector<8x1xf32>
    %151 = arith.addf %149, %150 : vector<8x1xf32>
    %152 = math.rsqrt %151 : vector<8x1xf32>
    %153 = vector.broadcast %142 : vector<8x1xf32> to vector<8x32xf32>
    %154 = arith.subf %136, %153 : vector<8x32xf32>
    %155 = vector.broadcast %152 : vector<8x1xf32> to vector<8x32xf32>
    %156 = arith.mulf %154, %155 : vector<8x32xf32>
    %157 = vector.broadcast %137 : vector<1x32xf32> to vector<8x32xf32>
    %158 = arith.mulf %156, %157 : vector<8x32xf32>
    %159 = vector.broadcast %138 : vector<1x32xf32> to vector<8x32xf32>
    %160 = arith.addf %158, %159 : vector<8x32xf32>
    %c0_70 = arith.constant 0 : index
    %c0_71 = arith.constant 0 : index
    %c0_72 = arith.constant 0 : index
    %161 = vector.load %arg17[%c0_70, %c0_71, %c0_72] : memref<1x8x32xf32, #tpu.memory_space<vmem>>, vector<1x8x32xf32>
    %162 = vector.shape_cast %161 : vector<1x8x32xf32> to vector<8x32xf32>
    %163 = vector.shape_cast %160 : vector<8x32xf32> to vector<1x8x32xf32>
    tpu.vector_store %arg17[%c0_70, %c0_71, %c0_72], %163 {strides = array<i32>} : memref<1x8x32xf32, #tpu.memory_space<vmem>>, vector<1x8x32xf32>,
    return
  }
  func.func @transform_0(%arg0: i32, %arg1: i32) -> (i32, i32, i32) {
    %c0_i32 = arith.constant 0 : i32
    %c0_i32_0 = arith.constant 0 : i32
    return %arg0, %arg1, %c0_i32 : i32, i32, i32
  }
  func.func @transform_1(%arg0: i32, %arg1: i32) -> (i32, i32, i32) {
    %c0_i32 = arith.constant 0 : i32
    %c0_i32_0 = arith.constant 0 : i32
    %c0_i32_1 = arith.constant 0 : i32
    return %arg0, %c0_i32, %c0_i32_0 : i32, i32, i32
  }
  func.func @transform_2(%arg0: i32, %arg1: i32) -> (i32, i32, i32) {
    %c0_i32 = arith.constant 0 : i32
    %c0_i32_0 = arith.constant 0 : i32
    %c0_i32_1 = arith.constant 0 : i32
    return %arg0, %c0_i32, %c0_i32_0 : i32, i32, i32
  }
  func.func @transform_3(%arg0: i32, %arg1: i32) -> (i32, i32) {
    %c0_i32 = arith.constant 0 : i32
    %c0_i32_0 = arith.constant 0 : i32
    %c0_i32_1 = arith.constant 0 : i32
    return %c0_i32, %c0_i32_0 : i32, i32
  }
  func.func @transform_4(%arg0: i32, %arg1: i32) -> (i32, i32) {
    %c0_i32 = arith.constant 0 : i32
    %c0_i32_0 = arith.constant 0 : i32
    %c0_i32_1 = arith.constant 0 : i32
    return %c0_i32, %c0_i32_0 : i32, i32
  }
  func.func @transform_5(%arg0: i32, %arg1: i32) -> (i32, i32) {
    %c0_i32 = arith.constant 0 : i32
    %c0_i32_0 = arith.constant 0 : i32
    %c0_i32_1 = arith.constant 0 : i32
    return %c0_i32, %c0_i32_0 : i32, i32
  }
  func.func @transform_6(%arg0: i32, %arg1: i32) -> (i32, i32) {
    %c0_i32 = arith.constant 0 : i32
    %c0_i32_0 = arith.constant 0 : i32
    %c0_i32_1 = arith.constant 0 : i32
    return %c0_i32, %c0_i32_0 : i32, i32
  }
  func.func @transform_7(%arg0: i32, %arg1: i32) -> (i32, i32) {
    %c0_i32 = arith.constant 0 : i32
    %c0_i32_0 = arith.constant 0 : i32
    %c0_i32_1 = arith.constant 0 : i32
    return %c0_i32, %c0_i32_0 : i32, i32
  }
  func.func @transform_8(%arg0: i32, %arg1: i32) -> (i32, i32) {
    %c0_i32 = arith.constant 0 : i32
    %c0_i32_0 = arith.constant 0 : i32
    %c0_i32_1 = arith.constant 0 : i32
    return %c0_i32, %c0_i32_0 : i32, i32
  }
  func.func @transform_9(%arg0: i32, %arg1: i32) -> (i32, i32) {
    %c0_i32 = arith.constant 0 : i32
    %c0_i32_0 = arith.constant 0 : i32
    %c0_i32_1 = arith.constant 0 : i32
    return %c0_i32, %c0_i32_0 : i32, i32
  }
  func.func @transform_10(%arg0: i32, %arg1: i32) -> (i32, i32) {
    %c0_i32 = arith.constant 0 : i32
    %c0_i32_0 = arith.constant 0 : i32
    %c0_i32_1 = arith.constant 0 : i32
    return %c0_i32, %c0_i32_0 : i32, i32
  }
  func.func @transform_11(%arg0: i32, %arg1: i32) -> (i32, i32) {
    %c0_i32 = arith.constant 0 : i32
    %c0_i32_0 = arith.constant 0 : i32
    %c0_i32_1 = arith.constant 0 : i32
    return %c0_i32, %c0_i32_0 : i32, i32
  }
  func.func @transform_12(%arg0: i32, %arg1: i32) -> (i32, i32) {
    %c0_i32 = arith.constant 0 : i32
    %c0_i32_0 = arith.constant 0 : i32
    %c0_i32_1 = arith.constant 0 : i32
    return %c0_i32, %c0_i32_0 : i32, i32
  }
  func.func @transform_13(%arg0: i32, %arg1: i32) -> (i32, i32) {
    %c0_i32 = arith.constant 0 : i32
    %c0_i32_0 = arith.constant 0 : i32
    %c0_i32_1 = arith.constant 0 : i32
    return %c0_i32, %c0_i32_0 : i32, i32
  }
  func.func @transform_14(%arg0: i32, %arg1: i32) -> (i32, i32) {
    %c0_i32 = arith.constant 0 : i32
    %c0_i32_0 = arith.constant 0 : i32
    %c0_i32_1 = arith.constant 0 : i32
    return %c0_i32, %c0_i32_0 : i32, i32
  }
  func.func @transform_15(%arg0: i32, %arg1: i32) -> (i32, i32, i32) {
    %c0_i32 = arith.constant 0 : i32
    %c0_i32_0 = arith.constant 0 : i32
    return %arg0, %arg1, %c0_i32 : i32, i32, i32
  }
}

module attributes {stable_mosaic.version = 11 : i64} {
  func.func @encoder_block_kernel(%arg0: i32, %arg1: i32, %arg2: memref<1x8x32xf32, #tpu.memory_space<vmem>>, %arg3: memref<1x8x32xbf16, #tpu.memory_space<vmem>>, %arg4: memref<1x8x32xbf16, #tpu.memory_space<vmem>>, %arg5: memref<32x32xbf16, #tpu.memory_space<vmem>>, %arg6: memref<1x32xf32, #tpu.memory_space<vmem>>, %arg7: memref<32x32xbf16, #tpu.memory_space<vmem>>, %arg8: memref<1x32xf32, #tpu.memory_space<vmem>>, %arg9: memref<1x32xf32, #tpu.memory_space<vmem>>, %arg10: memref<1x32xf32, #tpu.memory_space<vmem>>, %arg11: memref<1x32xf32, #tpu.memory_space<vmem>>, %arg12: memref<1x32xf32, #tpu.memory_space<vmem>>, %arg13: memref<32x64xbf16, #tpu.memory_space<vmem>>, %arg14: memref<1x64xf32, #tpu.memory_space<vmem>>, %arg15: memref<64x32xbf16, #tpu.memory_space<vmem>>, %arg16: memref<1x32xf32, #tpu.memory_space<vmem>>, %arg17: memref<1x8x32xf32, #tpu.memory_space<vmem>>, %arg18: memref<8x32xbf16, #tpu.memory_space<vmem>>) attributes {dimension_semantics = [#tpu.dimension_semantics<parallel>, #tpu.dimension_semantics<parallel>], iteration_bounds = array<i64: 2, 1>, scalar_prefetch = 0 : i64, scratch_operands = 1 : i64, tpu.core_type = #tpu.core_type<tc>, window_params = [{transform_indices = @transform_0, window_bounds = array<i64: 1, 8, 32>}, {transform_indices = @transform_1, window_bounds = array<i64: 1, 8, 32>}, {transform_indices = @transform_2, window_bounds = array<i64: 1, 8, 32>}, {pipeline_mode = #tpu.pipeline_mode<synchronous>, transform_indices = @transform_3, window_bounds = array<i64: 32, 32>}, {pipeline_mode = #tpu.pipeline_mode<synchronous>, transform_indices = @transform_4, window_bounds = array<i64: 1, 32>}, {pipeline_mode = #tpu.pipeline_mode<synchronous>, transform_indices = @transform_5, window_bounds = array<i64: 32, 32>}, {pipeline_mode = #tpu.pipeline_mode<synchronous>, transform_indices = @transform_6, window_bounds = array<i64: 1, 32>}, {pipeline_mode = #tpu.pipeline_mode<synchronous>, transform_indices = @transform_7, window_bounds = array<i64: 1, 32>}, {pipeline_mode = #tpu.pipeline_mode<synchronous>, transform_indices = @transform_8, window_bounds = array<i64: 1, 32>}, {pipeline_mode = #tpu.pipeline_mode<synchronous>, transform_indices = @transform_9, window_bounds = array<i64: 1, 32>}, {pipeline_mode = #tpu.pipeline_mode<synchronous>, transform_indices = @transform_10, window_bounds = array<i64: 1, 32>}, {pipeline_mode = #tpu.pipeline_mode<synchronous>, transform_indices = @transform_11, window_bounds = array<i64: 32, 64>}, {pipeline_mode = #tpu.pipeline_mode<synchronous>, transform_indices = @transform_12, window_bounds = array<i64: 1, 64>}, {pipeline_mode = #tpu.pipeline_mode<synchronous>, transform_indices = @transform_13, window_bounds = array<i64: 64, 32>}, {pipeline_mode = #tpu.pipeline_mode<synchronous>, transform_indices = @transform_14, window_bounds = array<i64: 1, 32>}, {transform_indices = @transform_15, window_bounds = array<i64: 1, 8, 32>}]} {
    %c0 = arith.constant 0 : index
    %c0_0 = arith.constant 0 : index
    %c0_1 = arith.constant 0 : index
    %0 = vector.load %arg2[%c0, %c0_0, %c0_1] : memref<1x8x32xf32, #tpu.memory_space<vmem>>, vector<1x8x32xf32>
    %1 = vector.shape_cast %0 : vector<1x8x32xf32> to vector<8x32xf32>
    %2 = arith.truncf %1 : vector<8x32xf32> to vector<8x32xbf16>
    %c0_2 = arith.constant 0 : index
    %c0_3 = arith.constant 0 : index
    %3 = vector.load %arg5[%c0_2, %c0_3] : memref<32x32xbf16, #tpu.memory_space<vmem>>, vector<32x32xbf16>
    %cst = arith.constant dense<0.000000e+00> : vector<8x32xf32>
    %4 = tpu.matmul %2, %3, %cst {dimension_numbers = #tpu.dot_dimension_numbers<[1], [0], [0], [1], [0, 0, 1, 1], [], []>} : vector<8x32xbf16>, vector<32x32xbf16>, vector<8x32xf32> -> vector<8x32xf32>
    %c0_4 = arith.constant 0 : index
    %c0_5 = arith.constant 0 : index
    %5 = vector.load %arg6[%c0_4, %c0_5] : memref<1x32xf32, #tpu.memory_space<vmem>>, vector<1x32xf32>
    %6 = vector.broadcast %5 : vector<1x32xf32> to vector<8x32xf32>
    %7 = arith.addf %4, %6 : vector<8x32xf32>
    %cst_6 = arith.constant 0.353553385 : f32
    %8 = vector.broadcast %cst_6 : f32 to vector<8x32xf32>
    %9 = arith.mulf %7, %8 : vector<8x32xf32>
    %10 = arith.truncf %9 : vector<8x32xf32> to vector<8x32xbf16>
    %c0_7 = arith.constant 0 : index
    %c0_8 = arith.constant 0 : index
    %c0_9 = arith.constant 0 : index
    %11 = vector.load %arg3[%c0_7, %c0_8, %c0_9] : memref<1x8x32xbf16, #tpu.memory_space<vmem>>, vector<1x8x32xbf16>
    %12 = vector.shape_cast %11 : vector<1x8x32xbf16> to vector<8x32xbf16>
    %c0_10 = arith.constant 0 : index
    %c0_11 = arith.constant 0 : index
    %c0_12 = arith.constant 0 : index
    %13 = vector.load %arg4[%c0_10, %c0_11, %c0_12] : memref<1x8x32xbf16, #tpu.memory_space<vmem>>, vector<1x8x32xbf16>
    %14 = vector.shape_cast %13 : vector<1x8x32xbf16> to vector<8x32xbf16>
    %15 = vector.extract_strided_slice %10 {offsets = [0, 0], sizes = [8, 8], strides = [1, 1]} : vector<8x32xbf16> to vector<8x8xbf16>
    %16 = vector.extract_strided_slice %12 {offsets = [0, 0], sizes = [8, 8], strides = [1, 1]} : vector<8x32xbf16> to vector<8x8xbf16>
    %17 = vector.extract_strided_slice %14 {offsets = [0, 0], sizes = [8, 8], strides = [1, 1]} : vector<8x32xbf16> to vector<8x8xbf16>
    %cst_13 = arith.constant dense<0.000000e+00> : vector<8x8xf32>
    %18 = tpu.matmul %15, %16, %cst_13 {dimension_numbers = #tpu.dot_dimension_numbers<[1], [1], [0], [0], [0, 0, 1, 0], [], []>} : vector<8x8xbf16>, vector<8x8xbf16>, vector<8x8xf32> -> vector<8x8xf32>
    %cst_14 = arith.constant dense<0xFF800000> : vector<8xf32>
    %19 = vector.multi_reduction <maximumf>, %18, %cst_14 [1] : vector<8x8xf32> to vector<8xf32>
    %20 = vector.shape_cast %19 : vector<8xf32> to vector<8x1xf32>
    %21 = vector.broadcast %20 : vector<8x1xf32> to vector<8x8xf32>
    %22 = arith.subf %18, %21 : vector<8x8xf32>
    %23 = arith.truncf %22 : vector<8x8xf32> to vector<8x8xbf16>
    %24 = math.exp %23 : vector<8x8xbf16>
    %25 = arith.extf %24 : vector<8x8xbf16> to vector<8x8xf32>
    %cst_15 = arith.constant dense<0.000000e+00> : vector<8xf32>
    %26 = vector.multi_reduction <add>, %25, %cst_15 [1] : vector<8x8xf32> to vector<8xf32>
    %27 = vector.shape_cast %26 : vector<8xf32> to vector<8x1xf32>
    %28 = tpu.reciprocal %27 {approx = true} : vector<8x1xf32> -> vector<8x1xf32>
    %cst_16 = arith.constant dense<0.000000e+00> : vector<8x8xf32>
    %29 = tpu.matmul %24, %17, %cst_16 {dimension_numbers = #tpu.dot_dimension_numbers<[1], [0], [0], [1], [0, 0, 1, 1], [], []>} : vector<8x8xbf16>, vector<8x8xbf16>, vector<8x8xf32> -> vector<8x8xf32>
    %30 = vector.broadcast %28 : vector<8x1xf32> to vector<8x8xf32>
    %31 = arith.mulf %29, %30 : vector<8x8xf32>
    %32 = arith.truncf %31 : vector<8x8xf32> to vector<8x8xbf16>
    %c0_17 = arith.constant 0 : index
    %c0_18 = arith.constant 0 : index
    %33 = vector.load %arg18[%c0_17, %c0_18] : memref<8x32xbf16, #tpu.memory_space<vmem>>, vector<8x8xbf16>
    tpu.vector_store %arg18[%c0_17, %c0_18], %32 {strides = array<i32>} : memref<8x32xbf16, #tpu.memory_space<vmem>>, vector<8x8xbf16>,
    %34 = vector.extract_strided_slice %10 {offsets = [0, 8], sizes = [8, 8], strides = [1, 1]} : vector<8x32xbf16> to vector<8x8xbf16>
    %35 = vector.extract_strided_slice %12 {offsets = [0, 8], sizes = [8, 8], strides = [1, 1]} : vector<8x32xbf16> to vector<8x8xbf16>
    %36 = vector.extract_strided_slice %14 {offsets = [0, 8], sizes = [8, 8], strides = [1, 1]} : vector<8x32xbf16> to vector<8x8xbf16>
    %cst_19 = arith.constant dense<0.000000e+00> : vector<8x8xf32>
    %37 = tpu.matmul %34, %35, %cst_19 {dimension_numbers = #tpu.dot_dimension_numbers<[1], [1], [0], [0], [0, 0, 1, 0], [], []>} : vector<8x8xbf16>, vector<8x8xbf16>, vector<8x8xf32> -> vector<8x8xf32>
    %cst_20 = arith.constant dense<0xFF800000> : vector<8xf32>
    %38 = vector.multi_reduction <maximumf>, %37, %cst_20 [1] : vector<8x8xf32> to vector<8xf32>
    %39 = vector.shape_cast %38 : vector<8xf32> to vector<8x1xf32>
    %40 = vector.broadcast %39 : vector<8x1xf32> to vector<8x8xf32>
    %41 = arith.subf %37, %40 : vector<8x8xf32>
    %42 = arith.truncf %41 : vector<8x8xf32> to vector<8x8xbf16>
    %43 = math.exp %42 : vector<8x8xbf16>
    %44 = arith.extf %43 : vector<8x8xbf16> to vector<8x8xf32>
    %cst_21 = arith.constant dense<0.000000e+00> : vector<8xf32>
    %45 = vector.multi_reduction <add>, %44, %cst_21 [1] : vector<8x8xf32> to vector<8xf32>
    %46 = vector.shape_cast %45 : vector<8xf32> to vector<8x1xf32>
    %47 = tpu.reciprocal %46 {approx = true} : vector<8x1xf32> -> vector<8x1xf32>
    %cst_22 = arith.constant dense<0.000000e+00> : vector<8x8xf32>
    %48 = tpu.matmul %43, %36, %cst_22 {dimension_numbers = #tpu.dot_dimension_numbers<[1], [0], [0], [1], [0, 0, 1, 1], [], []>} : vector<8x8xbf16>, vector<8x8xbf16>, vector<8x8xf32> -> vector<8x8xf32>
    %49 = vector.broadcast %47 : vector<8x1xf32> to vector<8x8xf32>
    %50 = arith.mulf %48, %49 : vector<8x8xf32>
    %51 = arith.truncf %50 : vector<8x8xf32> to vector<8x8xbf16>
    %c0_23 = arith.constant 0 : index
    %c8 = arith.constant 8 : index
    %52 = vector.load %arg18[%c0_23, %c8] : memref<8x32xbf16, #tpu.memory_space<vmem>>, vector<8x8xbf16>
    tpu.vector_store %arg18[%c0_23, %c8], %51 {strides = array<i32>} : memref<8x32xbf16, #tpu.memory_space<vmem>>, vector<8x8xbf16>,
    %53 = vector.extract_strided_slice %10 {offsets = [0, 16], sizes = [8, 8], strides = [1, 1]} : vector<8x32xbf16> to vector<8x8xbf16>
    %54 = vector.extract_strided_slice %12 {offsets = [0, 16], sizes = [8, 8], strides = [1, 1]} : vector<8x32xbf16> to vector<8x8xbf16>
    %55 = vector.extract_strided_slice %14 {offsets = [0, 16], sizes = [8, 8], strides = [1, 1]} : vector<8x32xbf16> to vector<8x8xbf16>
    %cst_24 = arith.constant dense<0.000000e+00> : vector<8x8xf32>
    %56 = tpu.matmul %53, %54, %cst_24 {dimension_numbers = #tpu.dot_dimension_numbers<[1], [1], [0], [0], [0, 0, 1, 0], [], []>} : vector<8x8xbf16>, vector<8x8xbf16>, vector<8x8xf32> -> vector<8x8xf32>
    %cst_25 = arith.constant dense<0xFF800000> : vector<8xf32>
    %57 = vector.multi_reduction <maximumf>, %56, %cst_25 [1] : vector<8x8xf32> to vector<8xf32>
    %58 = vector.shape_cast %57 : vector<8xf32> to vector<8x1xf32>
    %59 = vector.broadcast %58 : vector<8x1xf32> to vector<8x8xf32>
    %60 = arith.subf %56, %59 : vector<8x8xf32>
    %61 = arith.truncf %60 : vector<8x8xf32> to vector<8x8xbf16>
    %62 = math.exp %61 : vector<8x8xbf16>
    %63 = arith.extf %62 : vector<8x8xbf16> to vector<8x8xf32>
    %cst_26 = arith.constant dense<0.000000e+00> : vector<8xf32>
    %64 = vector.multi_reduction <add>, %63, %cst_26 [1] : vector<8x8xf32> to vector<8xf32>
    %65 = vector.shape_cast %64 : vector<8xf32> to vector<8x1xf32>
    %66 = tpu.reciprocal %65 {approx = true} : vector<8x1xf32> -> vector<8x1xf32>
    %cst_27 = arith.constant dense<0.000000e+00> : vector<8x8xf32>
    %67 = tpu.matmul %62, %55, %cst_27 {dimension_numbers = #tpu.dot_dimension_numbers<[1], [0], [0], [1], [0, 0, 1, 1], [], []>} : vector<8x8xbf16>, vector<8x8xbf16>, vector<8x8xf32> -> vector<8x8xf32>
    %68 = vector.broadcast %66 : vector<8x1xf32> to vector<8x8xf32>
    %69 = arith.mulf %67, %68 : vector<8x8xf32>
    %70 = arith.truncf %69 : vector<8x8xf32> to vector<8x8xbf16>
    %c0_28 = arith.constant 0 : index
    %c16 = arith.constant 16 : index
    %71 = vector.load %arg18[%c0_28, %c16] : memref<8x32xbf16, #tpu.memory_space<vmem>>, vector<8x8xbf16>
    tpu.vector_store %arg18[%c0_28, %c16], %70 {strides = array<i32>} : memref<8x32xbf16, #tpu.memory_space<vmem>>, vector<8x8xbf16>,
    %72 = vector.extract_strided_slice %10 {offsets = [0, 24], sizes = [8, 8], strides = [1, 1]} : vector<8x32xbf16> to vector<8x8xbf16>
    %73 = vector.extract_strided_slice %12 {offsets = [0, 24], sizes = [8, 8], strides = [1, 1]} : vector<8x32xbf16> to vector<8x8xbf16>
    %74 = vector.extract_strided_slice %14 {offsets = [0, 24], sizes = [8, 8], strides = [1, 1]} : vector<8x32xbf16> to vector<8x8xbf16>
    %cst_29 = arith.constant dense<0.000000e+00> : vector<8x8xf32>
    %75 = tpu.matmul %72, %73, %cst_29 {dimension_numbers = #tpu.dot_dimension_numbers<[1], [1], [0], [0], [0, 0, 1, 0], [], []>} : vector<8x8xbf16>, vector<8x8xbf16>, vector<8x8xf32> -> vector<8x8xf32>
    %cst_30 = arith.constant dense<0xFF800000> : vector<8xf32>
    %76 = vector.multi_reduction <maximumf>, %75, %cst_30 [1] : vector<8x8xf32> to vector<8xf32>
    %77 = vector.shape_cast %76 : vector<8xf32> to vector<8x1xf32>
    %78 = vector.broadcast %77 : vector<8x1xf32> to vector<8x8xf32>
    %79 = arith.subf %75, %78 : vector<8x8xf32>
    %80 = arith.truncf %79 : vector<8x8xf32> to vector<8x8xbf16>
    %81 = math.exp %80 : vector<8x8xbf16>
    %82 = arith.extf %81 : vector<8x8xbf16> to vector<8x8xf32>
    %cst_31 = arith.constant dense<0.000000e+00> : vector<8xf32>
    %83 = vector.multi_reduction <add>, %82, %cst_31 [1] : vector<8x8xf32> to vector<8xf32>
    %84 = vector.shape_cast %83 : vector<8xf32> to vector<8x1xf32>
    %85 = tpu.reciprocal %84 {approx = true} : vector<8x1xf32> -> vector<8x1xf32>
    %cst_32 = arith.constant dense<0.000000e+00> : vector<8x8xf32>
    %86 = tpu.matmul %81, %74, %cst_32 {dimension_numbers = #tpu.dot_dimension_numbers<[1], [0], [0], [1], [0, 0, 1, 1], [], []>} : vector<8x8xbf16>, vector<8x8xbf16>, vector<8x8xf32> -> vector<8x8xf32>
    %87 = vector.broadcast %85 : vector<8x1xf32> to vector<8x8xf32>
    %88 = arith.mulf %86, %87 : vector<8x8xf32>
    %89 = arith.truncf %88 : vector<8x8xf32> to vector<8x8xbf16>
    %c0_33 = arith.constant 0 : index
    %c24 = arith.constant 24 : index
    %90 = vector.load %arg18[%c0_33, %c24] : memref<8x32xbf16, #tpu.memory_space<vmem>>, vector<8x8xbf16>
    tpu.vector_store %arg18[%c0_33, %c24], %89 {strides = array<i32>} : memref<8x32xbf16, #tpu.memory_space<vmem>>, vector<8x8xbf16>,
    %c0_34 = arith.constant 0 : index
    %c0_35 = arith.constant 0 : index
    %91 = vector.load %arg18[%c0_34, %c0_35] : memref<8x32xbf16, #tpu.memory_space<vmem>>, vector<8x32xbf16>
    %c0_36 = arith.constant 0 : index
    %c0_37 = arith.constant 0 : index
    %92 = vector.load %arg7[%c0_36, %c0_37] : memref<32x32xbf16, #tpu.memory_space<vmem>>, vector<32x32xbf16>
    %cst_38 = arith.constant dense<0.000000e+00> : vector<8x32xf32>
    %93 = tpu.matmul %91, %92, %cst_38 {dimension_numbers = #tpu.dot_dimension_numbers<[1], [0], [0], [1], [0, 0, 1, 1], [], []>} : vector<8x32xbf16>, vector<32x32xbf16>, vector<8x32xf32> -> vector<8x32xf32>
    %c0_39 = arith.constant 0 : index
    %c0_40 = arith.constant 0 : index
    %94 = vector.load %arg8[%c0_39, %c0_40] : memref<1x32xf32, #tpu.memory_space<vmem>>, vector<1x32xf32>
    %95 = vector.broadcast %94 : vector<1x32xf32> to vector<8x32xf32>
    %96 = arith.addf %93, %95 : vector<8x32xf32>
    %97 = arith.addf %1, %96 : vector<8x32xf32>
    %c0_41 = arith.constant 0 : index
    %c0_42 = arith.constant 0 : index
    %98 = vector.load %arg9[%c0_41, %c0_42] : memref<1x32xf32, #tpu.memory_space<vmem>>, vector<1x32xf32>
    %c0_43 = arith.constant 0 : index
    %c0_44 = arith.constant 0 : index
    %99 = vector.load %arg10[%c0_43, %c0_44] : memref<1x32xf32, #tpu.memory_space<vmem>>, vector<1x32xf32>
    %cst_45 = arith.constant dense<0.000000e+00> : vector<8xf32>
    %100 = vector.multi_reduction <add>, %97, %cst_45 [1] : vector<8x32xf32> to vector<8xf32>
    %101 = vector.shape_cast %100 : vector<8xf32> to vector<8x1xf32>
    %cst_46 = arith.constant 3.200000e+01 : f32
    %102 = vector.broadcast %cst_46 : f32 to vector<8x1xf32>
    %103 = arith.divf %101, %102 : vector<8x1xf32>
    %104 = vector.broadcast %103 : vector<8x1xf32> to vector<8x32xf32>
    %105 = arith.subf %97, %104 : vector<8x32xf32>
    %106 = arith.mulf %105, %105 : vector<8x32xf32>
    %cst_47 = arith.constant dense<0.000000e+00> : vector<8xf32>
    %107 = vector.multi_reduction <add>, %106, %cst_47 [1] : vector<8x32xf32> to vector<8xf32>
    %108 = vector.shape_cast %107 : vector<8xf32> to vector<8x1xf32>
    %cst_48 = arith.constant 3.200000e+01 : f32
    %109 = vector.broadcast %cst_48 : f32 to vector<8x1xf32>
    %110 = arith.divf %108, %109 : vector<8x1xf32>
    %cst_49 = arith.constant 9.99999974E-6 : f32
    %111 = vector.broadcast %cst_49 : f32 to vector<8x1xf32>
    %112 = arith.addf %110, %111 : vector<8x1xf32>
    %113 = math.rsqrt %112 : vector<8x1xf32>
    %114 = vector.broadcast %103 : vector<8x1xf32> to vector<8x32xf32>
    %115 = arith.subf %97, %114 : vector<8x32xf32>
    %116 = vector.broadcast %113 : vector<8x1xf32> to vector<8x32xf32>
    %117 = arith.mulf %115, %116 : vector<8x32xf32>
    %118 = vector.broadcast %98 : vector<1x32xf32> to vector<8x32xf32>
    %119 = arith.mulf %117, %118 : vector<8x32xf32>
    %120 = vector.broadcast %99 : vector<1x32xf32> to vector<8x32xf32>
    %121 = arith.addf %119, %120 : vector<8x32xf32>
    %122 = arith.truncf %121 : vector<8x32xf32> to vector<8x32xbf16>
    %c0_50 = arith.constant 0 : index
    %c0_51 = arith.constant 0 : index
    %123 = vector.load %arg13[%c0_50, %c0_51] : memref<32x64xbf16, #tpu.memory_space<vmem>>, vector<32x64xbf16>
    %cst_52 = arith.constant dense<0.000000e+00> : vector<8x64xf32>
    %124 = tpu.matmul %122, %123, %cst_52 {dimension_numbers = #tpu.dot_dimension_numbers<[1], [0], [0], [1], [0, 0, 1, 1], [], []>} : vector<8x32xbf16>, vector<32x64xbf16>, vector<8x64xf32> -> vector<8x64xf32>
    %c0_53 = arith.constant 0 : index
    %c0_54 = arith.constant 0 : index
    %125 = vector.load %arg14[%c0_53, %c0_54] : memref<1x64xf32, #tpu.memory_space<vmem>>, vector<1x64xf32>
    %126 = vector.broadcast %125 : vector<1x64xf32> to vector<8x64xf32>
    %127 = arith.addf %124, %126 : vector<8x64xf32>
    %cst_55 = arith.constant 0.000000e+00 : f32
    %128 = vector.broadcast %cst_55 : f32 to vector<8x64xf32>
    %129 = arith.maximumf %127, %128 : vector<8x64xf32>
    %130 = arith.truncf %129 : vector<8x64xf32> to vector<8x64xbf16>
    %c0_56 = arith.constant 0 : index
    %c0_57 = arith.constant 0 : index
    %131 = vector.load %arg15[%c0_56, %c0_57] : memref<64x32xbf16, #tpu.memory_space<vmem>>, vector<64x32xbf16>
    %cst_58 = arith.constant dense<0.000000e+00> : vector<8x32xf32>
    %132 = tpu.matmul %130, %131, %cst_58 {dimension_numbers = #tpu.dot_dimension_numbers<[1], [0], [0], [1], [0, 0, 1, 1], [], []>} : vector<8x64xbf16>, vector<64x32xbf16>, vector<8x32xf32> -> vector<8x32xf32>
    %c0_59 = arith.constant 0 : index
    %c0_60 = arith.constant 0 : index
    %133 = vector.load %arg16[%c0_59, %c0_60] : memref<1x32xf32, #tpu.memory_space<vmem>>, vector<1x32xf32>
    %134 = vector.broadcast %133 : vector<1x32xf32> to vector<8x32xf32>
    %135 = arith.addf %132, %134 : vector<8x32xf32>
    %136 = arith.addf %121, %135 : vector<8x32xf32>
    %c0_61 = arith.constant 0 : index
    %c0_62 = arith.constant 0 : index
    %137 = vector.load %arg11[%c0_61, %c0_62] : memref<1x32xf32, #tpu.memory_space<vmem>>, vector<1x32xf32>
    %c0_63 = arith.constant 0 : index
    %c0_64 = arith.constant 0 : index
    %138 = vector.load %arg12[%c0_63, %c0_64] : memref<1x32xf32, #tpu.memory_space<vmem>>, vector<1x32xf32>
    %cst_65 = arith.constant dense<0.000000e+00> : vector<8xf32>
    %139 = vector.multi_reduction <add>, %136, %cst_65 [1] : vector<8x32xf32> to vector<8xf32>
    %140 = vector.shape_cast %139 : vector<8xf32> to vector<8x1xf32>
    %cst_66 = arith.constant 3.200000e+01 : f32
    %141 = vector.broadcast %cst_66 : f32 to vector<8x1xf32>
    %142 = arith.divf %140, %141 : vector<8x1xf32>
    %143 = vector.broadcast %142 : vector<8x1xf32> to vector<8x32xf32>
    %144 = arith.subf %136, %143 : vector<8x32xf32>
    %145 = arith.mulf %144, %144 : vector<8x32xf32>
    %cst_67 = arith.constant dense<0.000000e+00> : vector<8xf32>
    %146 = vector.multi_reduction <add>, %145, %cst_67 [1] : vector<8x32xf32> to vector<8xf32>
    %147 = vector.shape_cast %146 : vector<8xf32> to vector<8x1xf32>
    %cst_68 = arith.constant 3.200000e+01 : f32
    %148 = vector.broadcast %cst_68 : f32 to vector<8x1xf32>
    %149 = arith.divf %147, %148 : vector<8x1xf32>
    %cst_69 = arith.constant 9.99999974E-6 : f32
    %150 = vector.broadcast %cst_69 : f32 to vector<8x1xf32>
    %151 = arith.addf %149, %150 : vector<8x1xf32>
    %152 = math.rsqrt %151 : vector<8x1xf32>
    %153 = vector.broadcast %142 : vector<8x1xf32> to vector<8x32xf32>
    %154 = arith.subf %136, %153 : vector<8x32xf32>
    %155 = vector.broadcast %152 : vector<8x1xf32> to vector<8x32xf32>
    %156 = arith.mulf %154, %155 : vector<8x32xf32>
    %157 = vector.broadcast %137 : vector<1x32xf32> to vector<8x32xf32>
    %158 = arith.mulf %156, %157 : vector<8x32xf32>
    %159 = vector.broadcast %138 : vector<1x32xf32> to vector<8x32xf32>
    %160 = arith.addf %158, %159 : vector<8x32xf32>
    %c0_70 = arith.constant 0 : index
    %c0_71 = arith.constant 0 : index
    %c0_72 = arith.constant 0 : index
    %161 = vector.load %arg17[%c0_70, %c0_71, %c0_72] : memref<1x8x32xf32, #tpu.memory_space<vmem>>, vector<1x8x32xf32>
    %162 = vector.shape_cast %161 : vector<1x8x32xf32> to vector<8x32xf32>
    %163 = vector.shape_cast %160 : vector<8x32xf32> to vector<1x8x32xf32>
    tpu.vector_store %arg17[%c0_70, %c0_71, %c0_72], %163 {strides = array<i32>} : memref<1x8x32xf32, #tpu.memory_space<vmem>>, vector<1x8x32xf32>,
    return
  }
  func.func @transform_0(%arg0: i32, %arg1: i32) -> (i32, i32, i32) {
    %c0_i32 = arith.constant 0 : i32
    %c0_i32_0 = arith.constant 0 : i32
    return %arg0, %arg1, %c0_i32 : i32, i32, i32
  }
  func.func @transform_1(%arg0: i32, %arg1: i32) -> (i32, i32, i32) {
    %c0_i32 = arith.constant 0 : i32
    %c0_i32_0 = arith.constant 0 : i32
    %c0_i32_1 = arith.constant 0 : i32
    return %arg0, %c0_i32, %c0_i32_0 : i32, i32, i32
  }
  func.func @transform_2(%arg0: i32, %arg1: i32) -> (i32, i32, i32) {
    %c0_i32 = arith.constant 0 : i32
    %c0_i32_0 = arith.constant 0 : i32
    %c0_i32_1 = arith.constant 0 : i32
    return %arg0, %c0_i32, %c0_i32_0 : i32, i32, i32
  }
  func.func @transform_3(%arg0: i32, %arg1: i32) -> (i32, i32) {
    %c0_i32 = arith.constant 0 : i32
    %c0_i32_0 = arith.constant 0 : i32
    %c0_i32_1 = arith.constant 0 : i32
    return %c0_i32, %c0_i32_0 : i32, i32
  }
  func.func @transform_4(%arg0: i32, %arg1: i32) -> (i32, i32) {
    %c0_i32 = arith.constant 0 : i32
    %c0_i32_0 = arith.constant 0 : i32
    %c0_i32_1 = arith.constant 0 : i32
    return %c0_i32, %c0_i32_0 : i32, i32
  }
  func.func @transform_5(%arg0: i32, %arg1: i32) -> (i32, i32) {
    %c0_i32 = arith.constant 0 : i32
    %c0_i32_0 = arith.constant 0 : i32
    %c0_i32_1 = arith.constant 0 : i32
    return %c0_i32, %c0_i32_0 : i32, i32
  }
  func.func @transform_6(%arg0: i32, %arg1: i32) -> (i32, i32) {
    %c0_i32 = arith.constant 0 : i32
    %c0_i32_0 = arith.constant 0 : i32
    %c0_i32_1 = arith.constant 0 : i32
    return %c0_i32, %c0_i32_0 : i32, i32
  }
  func.func @transform_7(%arg0: i32, %arg1: i32) -> (i32, i32) {
    %c0_i32 = arith.constant 0 : i32
    %c0_i32_0 = arith.constant 0 : i32
    %c0_i32_1 = arith.constant 0 : i32
    return %c0_i32, %c0_i32_0 : i32, i32
  }
  func.func @transform_8(%arg0: i32, %arg1: i32) -> (i32, i32) {
    %c0_i32 = arith.constant 0 : i32
    %c0_i32_0 = arith.constant 0 : i32
    %c0_i32_1 = arith.constant 0 : i32
    return %c0_i32, %c0_i32_0 : i32, i32
  }
  func.func @transform_9(%arg0: i32, %arg1: i32) -> (i32, i32) {
    %c0_i32 = arith.constant 0 : i32
    %c0_i32_0 = arith.constant 0 : i32
    %c0_i32_1 = arith.constant 0 : i32
    return %c0_i32, %c0_i32_0 : i32, i32
  }
  func.func @transform_10(%arg0: i32, %arg1: i32) -> (i32, i32) {
    %c0_i32 = arith.constant 0 : i32
    %c0_i32_0 = arith.constant 0 : i32
    %c0_i32_1 = arith.constant 0 : i32
    return %c0_i32, %c0_i32_0 : i32, i32
  }
  func.func @transform_11(%arg0: i32, %arg1: i32) -> (i32, i32) {
    %c0_i32 = arith.constant 0 : i32
    %c0_i32_0 = arith.constant 0 : i32
    %c0_i32_1 = arith.constant 0 : i32
    return %c0_i32, %c0_i32_0 : i32, i32
  }
  func.func @transform_12(%arg0: i32, %arg1: i32) -> (i32, i32) {
    %c0_i32 = arith.constant 0 : i32
    %c0_i32_0 = arith.constant 0 : i32
    %c0_i32_1 = arith.constant 0 : i32
    return %c0_i32, %c0_i32_0 : i32, i32
  }
  func.func @transform_13(%arg0: i32, %arg1: i32) -> (i32, i32) {
    %c0_i32 = arith.constant 0 : i32
    %c0_i32_0 = arith.constant 0 : i32
    %c0_i32_1 = arith.constant 0 : i32
    return %c0_i32, %c0_i32_0 : i32, i32
  }
  func.func @transform_14(%arg0: i32, %arg1: i32) -> (i32, i32) {
    %c0_i32 = arith.constant 0 : i32
    %c0_i32_0 = arith.constant 0 : i32
    %c0_i32_1 = arith.constant 0 : i32
    return %c0_i32, %c0_i32_0 : i32, i32
  }
  func.func @transform_15(%arg0: i32, %arg1: i32) -> (i32, i32, i32) {
    %c0_i32 = arith.constant 0 : i32
    %c0_i32_0 = arith.constant 0 : i32
    return %arg0, %arg1, %c0_i32 : i32, i32, i32
  }
}

</mosaic_0001>

<llo_original>
// kernel: tpu_custom_call.1
$region0: #{tpu_custom_call.1}
  #allocation0 [shape = 'u32[]', space=smem, size = 0x4, offset = 0x4, fixed_abs, tag = 'smem constant byte address 0x4 - core index']
  #allocation1 [shape = 'u32[144,128]{1,0:T(1,128)}', space=vmem, size = 0x12000, scoped, tag = 'internal scratch']
  #allocation2 [shape = 'bf16[8,32]{1,0:T(8,128)(2,1)}', space=vmem, size = 0x800, scoped, tag = 'scratch operand']
  %s0 = inlined_call_operand.hbm [shape: f32[2,8,32], index: 0, kind: input, shape index: {}]
  %s1 = inlined_call_operand.hbm [shape: bf16[2,8,32], index: 1, kind: input, shape index: {}]
  %s2 = inlined_call_operand.hbm [shape: bf16[2,8,32], index: 2, kind: input, shape index: {}]
  %s3 = inlined_call_operand.hbm [shape: bf16[32,32], index: 3, kind: input, shape index: {}]
  %s4 = inlined_call_operand.hbm [shape: f32[1,32], index: 4, kind: input, shape index: {}]
  %s5 = inlined_call_operand.hbm [shape: bf16[32,32], index: 5, kind: input, shape index: {}]
  %s6 = inlined_call_operand.hbm [shape: f32[1,32], index: 6, kind: input, shape index: {}]
  %s7 = inlined_call_operand.hbm [shape: f32[1,32], index: 7, kind: input, shape index: {}]
  %s8 = inlined_call_operand.hbm [shape: f32[1,32], index: 8, kind: input, shape index: {}]
  %s9 = inlined_call_operand.hbm [shape: f32[1,32], index: 9, kind: input, shape index: {}]
  %s10 = inlined_call_operand.hbm [shape: f32[1,32], index: 10, kind: input, shape index: {}]
  %s11 = inlined_call_operand.hbm [shape: bf16[32,64], index: 11, kind: input, shape index: {}]
  %s12 = inlined_call_operand.hbm [shape: f32[1,64], index: 12, kind: input, shape index: {}]
  %s13 = inlined_call_operand.hbm [shape: bf16[64,32], index: 13, kind: input, shape index: {}]
  %s14 = inlined_call_operand.hbm [shape: f32[1,32], index: 14, kind: input, shape index: {}]
  %s15 = inlined_call_operand.hbm [shape: f32[2,8,32], index: 15, kind: output, shape index: {}]
  %s16 = sld [smem:[#allocation0]]
  $region153: #{tpu_custom_call.1} parent=0
    _
  %s18 = ssub.s32 1, %s16
  %s19 = scalar_select 0, %s18, %s16
  $region1: #{tpu_custom_call.1} parent=0
    #allocation3 [shape = 'u8[8192]{0}', space=vmem, size = 0x2000, scoped, tag = 'input window, operand 0']
    #allocation4 [shape = 's32[2]{0}', space=sflag, size = 0x8, scoped, tag = 'scoped memory for tpu_custom_call.1']
    #allocation5 [shape = 's32[2]{0}', space=sflag, size = 0x8, scoped, tag = 'scoped memory for tpu_custom_call.1']
    #allocation6 [shape = 'u8[4096]{0}', space=vmem, size = 0x1000, scoped, tag = 'input window, operand 1']
    #allocation7 [shape = 's32[2]{0}', space=sflag, size = 0x8, scoped, tag = 'scoped memory for tpu_custom_call.1']
    #allocation8 [shape = 'u8[4096]{0}', space=vmem, size = 0x1000, scoped, tag = 'input window, operand 2']
    #allocation9 [shape = 'u8[8192]{0}', space=vmem, size = 0x2000, scoped, tag = 'input window, operand 3, single buffered']
    #allocation10 [shape = 's32[1]{0}', space=sflag, size = 0x4, scoped, tag = 'scoped memory for tpu_custom_call.1']
    #allocation11 [shape = 'u8[512]{0}', space=vmem, size = 0x400, scoped, tag = 'input window, operand 4, single buffered']
    #allocation12 [shape = 'u8[8192]{0}', space=vmem, size = 0x2000, scoped, tag = 'input window, operand 5, single buffered']
    #allocation13 [shape = 's32[1]{0}', space=sflag, size = 0x4, scoped, tag = 'scoped memory for tpu_custom_call.1']
    #allocation14 [shape = 'u8[512]{0}', space=vmem, size = 0x400, scoped, tag = 'input window, operand 6, single buffered']
    #allocation15 [shape = 'u8[512]{0}', space=vmem, size = 0x400, scoped, tag = 'input window, operand 7, single buffered']
    #allocation16 [shape = 's32[1]{0}', space=sflag, size = 0x4, scoped, tag = 'scoped memory for tpu_custom_call.1']
    #allocation17 [shape = 'u8[512]{0}', space=vmem, size = 0x400, scoped, tag = 'input window, operand 8, single buffered']
    #allocation18 [shape = 'u8[512]{0}', space=vmem, size = 0x400, scoped, tag = 'input window, operand 9, single buffered']
    #allocation19 [shape = 's32[1]{0}', space=sflag, size = 0x4, scoped, tag = 'scoped memory for tpu_custom_call.1']
    #allocation20 [shape = 'u8[512]{0}', space=vmem, size = 0x400, scoped, tag = 'input window, operand 10, single buffered']
    #allocation21 [shape = 'u8[8192]{0}', space=vmem, size = 0x2000, scoped, tag = 'input window, operand 11, single buffered']
    #allocation22 [shape = 's32[1]{0}', space=sflag, size = 0x4, scoped, tag = 'scoped memory for tpu_custom_call.1']
    #allocation23 [shape = 'u8[512]{0}', space=vmem, size = 0x400, scoped, tag = 'input window, operand 12, single buffered']
    #allocation24 [shape = 'u8[16384]{0}', space=vmem, size = 0x4000, scoped, tag = 'input window, operand 13, single buffered']
    #allocation25 [shape = 's32[1]{0}', space=sflag, size = 0x4, scoped, tag = 'scoped memory for tpu_custom_call.1']
    #allocation26 [shape = 'u8[512]{0}', space=vmem, size = 0x400, scoped, tag = 'input window, operand 14, single buffered']
    #allocation27 [shape = 'u8[8192]{0}', space=vmem, size = 0x2000, scoped, tag = 'output window, operand 0']
    %20 = vsyncpa [#allocation4], 0
    %s21 = scalar_lea.sflag [#allocation4], 1
    %22 = vsyncpa %s21, 0
    %23 = vsyncpa [#allocation7], 0
    %s24 = scalar_lea.sflag [#allocation7], 1
    %25 = vsyncpa %s24, 0
    %26 = vsyncpa [#allocation10], 0
    %27 = vsyncpa [#allocation13], 0
    %28 = vsyncpa [#allocation16], 0
    %29 = vsyncpa [#allocation19], 0
    %30 = vsyncpa [#allocation22], 0
    %31 = vsyncpa [#allocation25], 0
    %32 = vsyncpa [#allocation5], 0
    %s33 = scalar_lea.sflag [#allocation5], 1
    %34 = vsyncpa %s33, 0
    loop: start=0, step=1, limit=4
    $region2: #{tpu_custom_call.1} parent=1 // loop_pre_header
      _
    $region3: #{tpu_custom_call.1} parent=1 // loop_header
      %s36 = sphi 0, %s40
      %p37 = scmp.ge.s32.totalorder %s36, 4
      %s43 = sphi 0, %s55
      %s44 = sphi 0, %s51
      %s45 = sphi 0, %s43
      %s46 = sphi 0, %s44
      %s47 = sphi 0, %s45
      %s48 = sphi 0, %s46
      %s60 = sphi 0, %s62
      %s63 = sphi 0, %s60
      %s64 = sphi 0, %s63
      %s80 = sphi 0, %s64
      %s86 = sphi 0, %s88
      %s89 = sphi 0, %s86
      %s90 = sphi 0, %s89
      %s106 = sphi 0, %s90
      %s112 = sphi 0, %s114
      %s115 = sphi 0, %s112
      %s116 = sphi 0, %s115
      %s132 = sphi 0, %s116
      %s136 = sphi 0, %s136
      %s138 = sphi 0, %s136
      %s139 = sphi 0, %s138
      %s153 = sphi 0, %s139
      %s157 = sphi 0, %s157
      %s159 = sphi 0, %s157
      %s160 = sphi 0, %s159
      %s174 = sphi 0, %s160
      %s178 = sphi 0, %s178
      %s180 = sphi 0, %s178
      %s181 = sphi 0, %s180
      %s195 = sphi 0, %s181
      %s199 = sphi 0, %s199
      %s201 = sphi 0, %s199
      %s202 = sphi 0, %s201
      %s216 = sphi 0, %s202
      %s220 = sphi 0, %s220
      %s222 = sphi 0, %s220
      %s223 = sphi 0, %s222
      %s237 = sphi 0, %s223
      %s241 = sphi 0, %s241
      %s243 = sphi 0, %s241
      %s244 = sphi 0, %s243
      %s258 = sphi 0, %s244
      %s262 = sphi 0, %s262
      %s264 = sphi 0, %s262
      %s265 = sphi 0, %s264
      %s279 = sphi 0, %s265
      %s283 = sphi 0, %s283
      %s285 = sphi 0, %s283
      %s286 = sphi 0, %s285
      %s300 = sphi 0, %s286
      %s304 = sphi 0, %s304
      %s306 = sphi 0, %s304
      %s307 = sphi 0, %s306
      %s321 = sphi 0, %s307
      %s325 = sphi 0, %s325
      %s327 = sphi 0, %s325
      %s328 = sphi 0, %s327
      %s342 = sphi 0, %s328
      %s346 = sphi 0, %s346
      %s348 = sphi 0, %s346
      %s349 = sphi 0, %s348
      %s363 = sphi 0, %s349
      %s367 = sphi 0, %s367
      %s369 = sphi 0, %s367
      %s370 = sphi 0, %s369
      %s384 = sphi 0, %s370
      %s392 = sphi 0, %s394
      %s395 = sphi 0, %s392
      %s396 = sphi 0, %s395
      %s412 = sphi 0, %s396
    $region4: #{tpu_custom_call.1} parent=1 // loop_header_branch
      %39 = sbr.rel (%p37) target = $region8
    $region5: #{tpu_custom_call.1} parent=1 // loop_body
      %s41 = ssub.s32 %s36, 1
      %s42 = ssub.s32 %s36, 2
      %s49 = sadd.s32 1, %s44
      %p50 = scmp.ge.s32.totalorder %s49, 1
      %s51 = scalar_select %p50, 0, %s49
      %s52 = sadd.s32 1, %s43
      %s53 = scalar_select %p50, %s52, %s43
      %p54 = scmp.ge.s32.totalorder %s53, 2
      %s55 = scalar_select %p54, 0, %s53
      %s56 = ssub.s32 %s43, %s55
      %s57 = ssub.s32 %s44, %s51
      %s58 = sor.u32 %s56, %s57
      %p59 = scmp.eq.s32.totalorder %s58, 0
      %s61 = sadd.s32 %s60, 1
      %s62 = scalar_select %p59, %s60, %s61
      %p65 = pneg %p59
      %p66 = scmp.eq.s32.totalorder %s36, 1
      %p67 = por %p65, %p66
      %p68 = scmp.ne.s32.totalorder %s60, %s63
      %p69 = scmp.eq.s32.totalorder %s36, 0
      %p70 = por %p68, %p69
      %p71 = scmp.ne.s32.totalorder %s60, %s63
      %p72 = scmp.eq.s32.totalorder %s41, 1
      %p73 = por %p71, %p72
      %p74 = scmp.ne.s32.totalorder %s63, %s64
      %p75 = scmp.eq.s32.totalorder %s41, 0
      %p76 = por %p74, %p75
      %p77 = scmp.ne.s32.totalorder %s63, %s64
      %p78 = scmp.eq.s32.totalorder %s42, 1
      %p79 = por %p77, %p78
      %p81 = scmp.ne.s32.totalorder %s64, %s80
      %p82 = scmp.eq.s32.totalorder %s42, 0
      %p83 = por %p81, %p82
      %s84 = ssub.s32 %s43, %s55
      %p85 = scmp.eq.s32.totalorder %s84, 0
      %s87 = sadd.s32 %s86, 1
      %s88 = scalar_select %p85, %s86, %s87
      %p91 = pneg %p85
      %p92 = scmp.eq.s32.totalorder %s36, 1
      %p93 = por %p91, %p92
      %p94 = scmp.ne.s32.totalorder %s86, %s89
      %p95 = scmp.eq.s32.totalorder %s36, 0
      %p96 = por %p94, %p95
      %p97 = scmp.ne.s32.totalorder %s86, %s89
      %p98 = scmp.eq.s32.totalorder %s41, 1
      %p99 = por %p97, %p98
      %p100 = scmp.ne.s32.totalorder %s89, %s90
      %p101 = scmp.eq.s32.totalorder %s41, 0
      %p102 = por %p100, %p101
      %p103 = scmp.ne.s32.totalorder %s89, %s90
      %p104 = scmp.eq.s32.totalorder %s42, 1
      %p105 = por %p103, %p104
      %p107 = scmp.ne.s32.totalorder %s90, %s106
      %p108 = scmp.eq.s32.totalorder %s42, 0
      %p109 = por %p107, %p108
      %s110 = ssub.s32 %s43, %s55
      %p111 = scmp.eq.s32.totalorder %s110, 0
      %s113 = sadd.s32 %s112, 1
      %s114 = scalar_select %p111, %s112, %s113
      %p117 = pneg %p111
      %p118 = scmp.eq.s32.totalorder %s36, 1
      %p119 = por %p117, %p118
      %p120 = scmp.ne.s32.totalorder %s112, %s115
      %p121 = scmp.eq.s32.totalorder %s36, 0
      %p122 = por %p120, %p121
      %p123 = scmp.ne.s32.totalorder %s112, %s115
      %p124 = scmp.eq.s32.totalorder %s41, 1
      %p125 = por %p123, %p124
      %p126 = scmp.ne.s32.totalorder %s115, %s116
      %p127 = scmp.eq.s32.totalorder %s41, 0
      %p128 = por %p126, %p127
      %p129 = scmp.ne.s32.totalorder %s115, %s116
      %p130 = scmp.eq.s32.totalorder %s42, 1
      %p131 = por %p129, %p130
      %p133 = scmp.ne.s32.totalorder %s116, %s132
      %p134 = scmp.eq.s32.totalorder %s42, 0
      %p135 = por %p133, %p134
      %s137 = sadd.s32 %s136, 1
      %p140 = scmp.eq.s32.totalorder %s36, 1
      %p141 = scmp.ne.s32.totalorder %s136, %s138
      %p142 = scmp.eq.s32.totalorder %s36, 0
      %p143 = por %p141, %p142
      %p144 = scmp.ne.s32.totalorder %s136, %s138
      %p145 = scmp.eq.s32.totalorder %s41, 1
      %p146 = por %p144, %p145
      %p147 = scmp.ne.s32.totalorder %s138, %s139
      %p148 = scmp.eq.s32.totalorder %s41, 0
      %p149 = por %p147, %p148
      %p150 = scmp.ne.s32.totalorder %s138, %s139
      %p151 = scmp.eq.s32.totalorder %s42, 1
      %p152 = por %p150, %p151
      %p154 = scmp.ne.s32.totalorder %s139, %s153
      %p155 = scmp.eq.s32.totalorder %s42, 0
      %p156 = por %p154, %p155
      %s158 = sadd.s32 %s157, 1
      %p161 = scmp.eq.s32.totalorder %s36, 1
      %p162 = scmp.ne.s32.totalorder %s157, %s159
      %p163 = scmp.eq.s32.totalorder %s36, 0
      %p164 = por %p162, %p163
      %p165 = scmp.ne.s32.totalorder %s157, %s159
      %p166 = scmp.eq.s32.totalorder %s41, 1
      %p167 = por %p165, %p166
      %p168 = scmp.ne.s32.totalorder %s159, %s160
      %p169 = scmp.eq.s32.totalorder %s41, 0
      %p170 = por %p168, %p169
      %p171 = scmp.ne.s32.totalorder %s159, %s160
      %p172 = scmp.eq.s32.totalorder %s42, 1
      %p173 = por %p171, %p172
      %p175 = scmp.ne.s32.totalorder %s160, %s174
      %p176 = scmp.eq.s32.totalorder %s42, 0
      %p177 = por %p175, %p176
      %s179 = sadd.s32 %s178, 1
      %p182 = scmp.eq.s32.totalorder %s36, 1
      %p183 = scmp.ne.s32.totalorder %s178, %s180
      %p184 = scmp.eq.s32.totalorder %s36, 0
      %p185 = por %p183, %p184
      %p186 = scmp.ne.s32.totalorder %s178, %s180
      %p187 = scmp.eq.s32.totalorder %s41, 1
      %p188 = por %p186, %p187
      %p189 = scmp.ne.s32.totalorder %s180, %s181
      %p190 = scmp.eq.s32.totalorder %s41, 0
      %p191 = por %p189, %p190
      %p192 = scmp.ne.s32.totalorder %s180, %s181
      %p193 = scmp.eq.s32.totalorder %s42, 1
      %p194 = por %p192, %p193
      %p196 = scmp.ne.s32.totalorder %s181, %s195
      %p197 = scmp.eq.s32.totalorder %s42, 0
      %p198 = por %p196, %p197
      %s200 = sadd.s32 %s199, 1
      %p203 = scmp.eq.s32.totalorder %s36, 1
      %p204 = scmp.ne.s32.totalorder %s199, %s201
      %p205 = scmp.eq.s32.totalorder %s36, 0
      %p206 = por %p204, %p205
      %p207 = scmp.ne.s32.totalorder %s199, %s201
      %p208 = scmp.eq.s32.totalorder %s41, 1
      %p209 = por %p207, %p208
      %p210 = scmp.ne.s32.totalorder %s201, %s202
      %p211 = scmp.eq.s32.totalorder %s41, 0
      %p212 = por %p210, %p211
      %p213 = scmp.ne.s32.totalorder %s201, %s202
      %p214 = scmp.eq.s32.totalorder %s42, 1
      %p215 = por %p213, %p214
      %p217 = scmp.ne.s32.totalorder %s202, %s216
      %p218 = scmp.eq.s32.totalorder %s42, 0
      %p219 = por %p217, %p218
      %s221 = sadd.s32 %s220, 1
      %p224 = scmp.eq.s32.totalorder %s36, 1
      %p225 = scmp.ne.s32.totalorder %s220, %s222
      %p226 = scmp.eq.s32.totalorder %s36, 0
      %p227 = por %p225, %p226
      %p228 = scmp.ne.s32.totalorder %s220, %s222
      %p229 = scmp.eq.s32.totalorder %s41, 1
      %p230 = por %p228, %p229
      %p231 = scmp.ne.s32.totalorder %s222, %s223
      %p232 = scmp.eq.s32.totalorder %s41, 0
      %p233 = por %p231, %p232
      %p234 = scmp.ne.s32.totalorder %s222, %s223
      %p235 = scmp.eq.s32.totalorder %s42, 1
      %p236 = por %p234, %p235
      %p238 = scmp.ne.s32.totalorder %s223, %s237
      %p239 = scmp.eq.s32.totalorder %s42, 0
      %p240 = por %p238, %p239
      %s242 = sadd.s32 %s241, 1
      %p245 = scmp.eq.s32.totalorder %s36, 1
      %p246 = scmp.ne.s32.totalorder %s241, %s243
      %p247 = scmp.eq.s32.totalorder %s36, 0
      %p248 = por %p246, %p247
      %p249 = scmp.ne.s32.totalorder %s241, %s243
      %p250 = scmp.eq.s32.totalorder %s41, 1
      %p251 = por %p249, %p250
      %p252 = scmp.ne.s32.totalorder %s243, %s244
      %p253 = scmp.eq.s32.totalorder %s41, 0
      %p254 = por %p252, %p253
      %p255 = scmp.ne.s32.totalorder %s243, %s244
      %p256 = scmp.eq.s32.totalorder %s42, 1
      %p257 = por %p255, %p256
      %p259 = scmp.ne.s32.totalorder %s244, %s258
      %p260 = scmp.eq.s32.totalorder %s42, 0
      %p261 = por %p259, %p260
      %s263 = sadd.s32 %s262, 1
      %p266 = scmp.eq.s32.totalorder %s36, 1
      %p267 = scmp.ne.s32.totalorder %s262, %s264
      %p268 = scmp.eq.s32.totalorder %s36, 0
      %p269 = por %p267, %p268
      %p270 = scmp.ne.s32.totalorder %s262, %s264
      %p271 = scmp.eq.s32.totalorder %s41, 1
      %p272 = por %p270, %p271
      %p273 = scmp.ne.s32.totalorder %s264, %s265
      %p274 = scmp.eq.s32.totalorder %s41, 0
      %p275 = por %p273, %p274
      %p276 = scmp.ne.s32.totalorder %s264, %s265
      %p277 = scmp.eq.s32.totalorder %s42, 1
      %p278 = por %p276, %p277
      %p280 = scmp.ne.s32.totalorder %s265, %s279
      %p281 = scmp.eq.s32.totalorder %s42, 0
      %p282 = por %p280, %p281
      %s284 = sadd.s32 %s283, 1
      %p287 = scmp.eq.s32.totalorder %s36, 1
      %p288 = scmp.ne.s32.totalorder %s283, %s285
      %p289 = scmp.eq.s32.totalorder %s36, 0
      %p290 = por %p288, %p289
      %p291 = scmp.ne.s32.totalorder %s283, %s285
      %p292 = scmp.eq.s32.totalorder %s41, 1
      %p293 = por %p291, %p292
      %p294 = scmp.ne.s32.totalorder %s285, %s286
      %p295 = scmp.eq.s32.totalorder %s41, 0
      %p296 = por %p294, %p295
      %p297 = scmp.ne.s32.totalorder %s285, %s286
      %p298 = scmp.eq.s32.totalorder %s42, 1
      %p299 = por %p297, %p298
      %p301 = scmp.ne.s32.totalorder %s286, %s300
      %p302 = scmp.eq.s32.totalorder %s42, 0
      %p303 = por %p301, %p302
      %s305 = sadd.s32 %s304, 1
      %p308 = scmp.eq.s32.totalorder %s36, 1
      %p309 = scmp.ne.s32.totalorder %s304, %s306
      %p310 = scmp.eq.s32.totalorder %s36, 0
      %p311 = por %p309, %p310
      %p312 = scmp.ne.s32.totalorder %s304, %s306
      %p313 = scmp.eq.s32.totalorder %s41, 1
      %p314 = por %p312, %p313
      %p315 = scmp.ne.s32.totalorder %s306, %s307
      %p316 = scmp.eq.s32.totalorder %s41, 0
      %p317 = por %p315, %p316
      %p318 = scmp.ne.s32.totalorder %s306, %s307
      %p319 = scmp.eq.s32.totalorder %s42, 1
      %p320 = por %p318, %p319
      %p322 = scmp.ne.s32.totalorder %s307, %s321
      %p323 = scmp.eq.s32.totalorder %s42, 0
      %p324 = por %p322, %p323
      %s326 = sadd.s32 %s325, 1
      %p329 = scmp.eq.s32.totalorder %s36, 1
      %p330 = scmp.ne.s32.totalorder %s325, %s327
      %p331 = scmp.eq.s32.totalorder %s36, 0
      %p332 = por %p330, %p331
      %p333 = scmp.ne.s32.totalorder %s325, %s327
      %p334 = scmp.eq.s32.totalorder %s41, 1
      %p335 = por %p333, %p334
      %p336 = scmp.ne.s32.totalorder %s327, %s328
      %p337 = scmp.eq.s32.totalorder %s41, 0
      %p338 = por %p336, %p337
      %p339 = scmp.ne.s32.totalorder %s327, %s328
      %p340 = scmp.eq.s32.totalorder %s42, 1
      %p341 = por %p339, %p340
      %p343 = scmp.ne.s32.totalorder %s328, %s342
      %p344 = scmp.eq.s32.totalorder %s42, 0
      %p345 = por %p343, %p344
      %s347 = sadd.s32 %s346, 1
      %p350 = scmp.eq.s32.totalorder %s36, 1
      %p351 = scmp.ne.s32.totalorder %s346, %s348
      %p352 = scmp.eq.s32.totalorder %s36, 0
      %p353 = por %p351, %p352
      %p354 = scmp.ne.s32.totalorder %s346, %s348
      %p355 = scmp.eq.s32.totalorder %s41, 1
      %p356 = por %p354, %p355
      %p357 = scmp.ne.s32.totalorder %s348, %s349
      %p358 = scmp.eq.s32.totalorder %s41, 0
      %p359 = por %p357, %p358
      %p360 = scmp.ne.s32.totalorder %s348, %s349
      %p361 = scmp.eq.s32.totalorder %s42, 1
      %p362 = por %p360, %p361
      %p364 = scmp.ne.s32.totalorder %s349, %s363
      %p365 = scmp.eq.s32.totalorder %s42, 0
      %p366 = por %p364, %p365
      %s368 = sadd.s32 %s367, 1
      %p371 = scmp.eq.s32.totalorder %s36, 1
      %p372 = scmp.ne.s32.totalorder %s367, %s369
      %p373 = scmp.eq.s32.totalorder %s36, 0
      %p374 = por %p372, %p373
      %p375 = scmp.ne.s32.totalorder %s367, %s369
      %p376 = scmp.eq.s32.totalorder %s41, 1
      %p377 = por %p375, %p376
      %p378 = scmp.ne.s32.totalorder %s369, %s370
      %p379 = scmp.eq.s32.totalorder %s41, 0
      %p380 = por %p378, %p379
      %p381 = scmp.ne.s32.totalorder %s369, %s370
      %p382 = scmp.eq.s32.totalorder %s42, 1
      %p383 = por %p381, %p382
      %p385 = scmp.ne.s32.totalorder %s370, %s384
      %p386 = scmp.eq.s32.totalorder %s42, 0
      %p387 = por %p385, %p386
      %s388 = ssub.s32 %s43, %s55
      %s389 = ssub.s32 %s44, %s51
      %s390 = sor.u32 %s388, %s389
      %p391 = scmp.eq.s32.totalorder %s390, 0
      %s393 = sadd.s32 %s392, 1
      %s394 = scalar_select %p391, %s392, %s393
      %p397 = pneg %p391
      %p398 = scmp.eq.s32.totalorder %s36, 1
      %p399 = por %p397, %p398
      %p400 = scmp.ne.s32.totalorder %s392, %s395
      %p401 = scmp.eq.s32.totalorder %s36, 0
      %p402 = por %p400, %p401
      %p403 = scmp.ne.s32.totalorder %s392, %s395
      %p404 = scmp.eq.s32.totalorder %s41, 1
      %p405 = por %p403, %p404
      %p406 = scmp.ne.s32.totalorder %s395, %s396
      %p407 = scmp.eq.s32.totalorder %s41, 0
      %p408 = por %p406, %p407
      %p409 = scmp.ne.s32.totalorder %s395, %s396
      %p410 = scmp.eq.s32.totalorder %s42, 1
      %p411 = por %p409, %p410
      %p413 = scmp.ne.s32.totalorder %s396, %s412
      %p414 = scmp.eq.s32.totalorder %s42, 0
      %p415 = por %p413, %p414
      %p416 = scmp.le.s32.totalorder 1, %s36
      %p417 = scmp.lt.s32.totalorder %s36, 3
      %p418 = pnand %p416, %p417
      %p419 = pneg %p418
      // Predicated region
      $region9: #{tpu_custom_call.1} parent=5 // pred_check
        _
      $region10: #{tpu_custom_call.1} parent=5 // pred_check_branch
        %421 = sbr.rel (%p418) target = $region12
      $region11: #{tpu_custom_call.1} parent=5 // pred_region
        %s422 = ssub.s32 %s36, 1
        // Predicated region
        $region13: #{tpu_custom_call.1} parent=11 // pred_check
          %p423 = pneg %p149
        $region14: #{tpu_custom_call.1} parent=11 // pred_check_branch
          %425 = sbr.rel (%p423) target = $region16
        $region15: #{tpu_custom_call.1} parent=11 // pred_region
          %s427 = ssub.s32 256, 256
          %428 = vsyncadd [#allocation10], %s427
          %s429 = sshll.u32 [#allocation9], 4
          %s430 = int_to_ptr.vmem [resolvable:$true] %s429
          %435 = dma.hbm_to_vmem [thread:$0]  %s3, 256, %s430, [#allocation10], 64, 64, 4
        $region16: #{tpu_custom_call.1} parent=11 // pred_fallthru
          _
        // Predicated region
        $region17: #{tpu_custom_call.1} parent=11 // pred_check
          %p436 = pneg %p170
        $region18: #{tpu_custom_call.1} parent=11 // pred_check_branch
          %438 = sbr.rel (%p436) target = $region20
        $region19: #{tpu_custom_call.1} parent=11 // pred_region
          %s440 = ssub.s32 16, 16
          %441 = vsyncadd [#allocation10], %s440
          %s443 = sshll.u32 [#allocation11], 4
          %s444 = int_to_ptr.vmem [resolvable:$true] %s443
          %446 = dma.hbm_to_vmem [thread:$0]  %s4, 16, %s444, [#allocation10]
        $region20: #{tpu_custom_call.1} parent=11 // pred_fallthru
          _
        // Predicated region
        $region21: #{tpu_custom_call.1} parent=11 // pred_check
          %p447 = pneg %p191
        $region22: #{tpu_custom_call.1} parent=11 // pred_check_branch
          %449 = sbr.rel (%p447) target = $region24
        $region23: #{tpu_custom_call.1} parent=11 // pred_region
          %s451 = ssub.s32 256, 256
          %452 = vsyncadd [#allocation13], %s451
          %s453 = sshll.u32 [#allocation12], 4
          %s454 = int_to_ptr.vmem [resolvable:$true] %s453
          %459 = dma.hbm_to_vmem [thread:$0]  %s5, 256, %s454, [#allocation13], 64, 64, 4
        $region24: #{tpu_custom_call.1} parent=11 // pred_fallthru
          _
        // Predicated region
        $region25: #{tpu_custom_call.1} parent=11 // pred_check
          %p460 = pneg %p212
        $region26: #{tpu_custom_call.1} parent=11 // pred_check_branch
          %462 = sbr.rel (%p460) target = $region28
        $region27: #{tpu_custom_call.1} parent=11 // pred_region
          %s464 = ssub.s32 16, 16
          %465 = vsyncadd [#allocation13], %s464
          %s467 = sshll.u32 [#allocation14], 4
          %s468 = int_to_ptr.vmem [resolvable:$true] %s467
          %470 = dma.hbm_to_vmem [thread:$0]  %s6, 16, %s468, [#allocation13]
        $region28: #{tpu_custom_call.1} parent=11 // pred_fallthru
          _
        // Predicated region
        $region29: #{tpu_custom_call.1} parent=11 // pred_check
          %p471 = pneg %p233
        $region30: #{tpu_custom_call.1} parent=11 // pred_check_branch
          %473 = sbr.rel (%p471) target = $region32
        $region31: #{tpu_custom_call.1} parent=11 // pred_region
          %s475 = ssub.s32 16, 16
          %476 = vsyncadd [#allocation16], %s475
          %s478 = sshll.u32 [#allocation15], 4
          %s479 = int_to_ptr.vmem [resolvable:$true] %s478
          %481 = dma.hbm_to_vmem [thread:$0]  %s7, 16, %s479, [#allocation16]
        $region32: #{tpu_custom_call.1} parent=11 // pred_fallthru
          _
        // Predicated region
        $region33: #{tpu_custom_call.1} parent=11 // pred_check
          %p482 = pneg %p254
        $region34: #{tpu_custom_call.1} parent=11 // pred_check_branch
          %484 = sbr.rel (%p482) target = $region36
        $region35: #{tpu_custom_call.1} parent=11 // pred_region
          %s486 = ssub.s32 16, 16
          %487 = vsyncadd [#allocation16], %s486
          %s489 = sshll.u32 [#allocation17], 4
          %s490 = int_to_ptr.vmem [resolvable:$true] %s489
          %492 = dma.hbm_to_vmem [thread:$0]  %s8, 16, %s490, [#allocation16]
        $region36: #{tpu_custom_call.1} parent=11 // pred_fallthru
          _
        // Predicated region
        $region37: #{tpu_custom_call.1} parent=11 // pred_check
          %p493 = pneg %p275
        $region38: #{tpu_custom_call.1} parent=11 // pred_check_branch
          %495 = sbr.rel (%p493) target = $region40
        $region39: #{tpu_custom_call.1} parent=11 // pred_region
          %s497 = ssub.s32 16, 16
          %498 = vsyncadd [#allocation19], %s497
          %s500 = sshll.u32 [#allocation18], 4
          %s501 = int_to_ptr.vmem [resolvable:$true] %s500
          %503 = dma.hbm_to_vmem [thread:$0]  %s9, 16, %s501, [#allocation19]
        $region40: #{tpu_custom_call.1} parent=11 // pred_fallthru
          _
        // Predicated region
        $region41: #{tpu_custom_call.1} parent=11 // pred_check
          %p504 = pneg %p296
        $region42: #{tpu_custom_call.1} parent=11 // pred_check_branch
          %506 = sbr.rel (%p504) target = $region44
        $region43: #{tpu_custom_call.1} parent=11 // pred_region
          %s508 = ssub.s32 16, 16
          %509 = vsyncadd [#allocation19], %s508
          %s511 = sshll.u32 [#allocation20], 4
          %s512 = int_to_ptr.vmem [resolvable:$true] %s511
          %514 = dma.hbm_to_vmem [thread:$0]  %s10, 16, %s512, [#allocation19]
        $region44: #{tpu_custom_call.1} parent=11 // pred_fallthru
          _
        // Predicated region
        $region45: #{tpu_custom_call.1} parent=11 // pred_check
          %p515 = pneg %p317
        $region46: #{tpu_custom_call.1} parent=11 // pred_check_branch
          %517 = sbr.rel (%p515) target = $region48
        $region47: #{tpu_custom_call.1} parent=11 // pred_region
          %s519 = ssub.s32 256, 256
          %520 = vsyncadd [#allocation22], %s519
          %s521 = sshll.u32 [#allocation21], 4
          %s522 = int_to_ptr.vmem [resolvable:$true] %s521
          %527 = dma.hbm_to_vmem [thread:$0]  %s11, 256, %s522, [#allocation22], 64, 64, 4
        $region48: #{tpu_custom_call.1} parent=11 // pred_fallthru
          _
        // Predicated region
        $region49: #{tpu_custom_call.1} parent=11 // pred_check
          %p528 = pneg %p338
        $region50: #{tpu_custom_call.1} parent=11 // pred_check_branch
          %530 = sbr.rel (%p528) target = $region52
        $region51: #{tpu_custom_call.1} parent=11 // pred_region
          %s532 = ssub.s32 16, 16
          %533 = vsyncadd [#allocation22], %s532
          %s535 = sshll.u32 [#allocation23], 4
          %s536 = int_to_ptr.vmem [resolvable:$true] %s535
          %538 = dma.hbm_to_vmem [thread:$0]  %s12, 16, %s536, [#allocation22]
        $region52: #{tpu_custom_call.1} parent=11 // pred_fallthru
          _
        // Predicated region
        $region53: #{tpu_custom_call.1} parent=11 // pred_check
          %p539 = pneg %p359
        $region54: #{tpu_custom_call.1} parent=11 // pred_check_branch
          %541 = sbr.rel (%p539) target = $region56
        $region55: #{tpu_custom_call.1} parent=11 // pred_region
          %s543 = ssub.s32 512, 512
          %544 = vsyncadd [#allocation25], %s543
          %s545 = sshll.u32 [#allocation24], 4
          %s546 = int_to_ptr.vmem [resolvable:$true] %s545
          %551 = dma.hbm_to_vmem [thread:$0]  %s13, 512, %s546, [#allocation25], 64, 64, 4
        $region56: #{tpu_custom_call.1} parent=11 // pred_fallthru
          _
        // Predicated region
        $region57: #{tpu_custom_call.1} parent=11 // pred_check
          %p552 = pneg %p380
        $region58: #{tpu_custom_call.1} parent=11 // pred_check_branch
          %554 = sbr.rel (%p552) target = $region60
        $region59: #{tpu_custom_call.1} parent=11 // pred_region
          %s556 = ssub.s32 16, 16
          %557 = vsyncadd [#allocation25], %s556
          %s559 = sshll.u32 [#allocation26], 4
          %s560 = int_to_ptr.vmem [resolvable:$true] %s559
          %562 = dma.hbm_to_vmem [thread:$0]  %s14, 16, %s560, [#allocation25]
        $region60: #{tpu_custom_call.1} parent=11 // pred_fallthru
          _
      $region12: #{tpu_custom_call.1} parent=5 // pred_fallthru
        _
      %p563 = scmp.lt.s32.totalorder %s36, 2
      // Predicated region
      $region61: #{tpu_custom_call.1} parent=5 // pred_check
        %p564 = pneg %p563
      $region62: #{tpu_custom_call.1} parent=5 // pred_check_branch
        %566 = sbr.rel (%p564) target = $region64
      $region63: #{tpu_custom_call.1} parent=5 // pred_region
        // Predicated region
        $region65: #{tpu_custom_call.1} parent=63 // pred_check
          %p567 = pneg %p70
        $region66: #{tpu_custom_call.1} parent=63 // pred_check_branch
          %569 = sbr.rel (%p567) target = $region68
        $region67: #{tpu_custom_call.1} parent=63 // pred_region
          %s570 = sand.u32 %s60, 1
          %s571 = scalar_lea.sflag [#allocation4], %s570
          %s572 = sand.u32 %s60, 1
          %s573 = smul.addr %s572, 8
          %s574 = scalar_lea.vmem [#allocation3], %s573
          %s576 = ssub.s32 128, 128
          %577 = vsyncadd %s571, %s576
          %s578 = sadd.s32 %s44, %s43
          %s579 = smul.addr %s578, 128
          %s580 = scalar_lea.hbm %s0, %s579
          %s582 = sshll.u32 %s574, 4
          %s583 = int_to_ptr.vmem [resolvable:$true] %s582
          %585 = dma.hbm_to_vmem [thread:$0]  %s580, 128, %s583, %s571
        $region68: #{tpu_custom_call.1} parent=63 // pred_fallthru
          _
        // Predicated region
        $region69: #{tpu_custom_call.1} parent=63 // pred_check
          %p586 = pneg %p96
        $region70: #{tpu_custom_call.1} parent=63 // pred_check_branch
          %588 = sbr.rel (%p586) target = $region72
        $region71: #{tpu_custom_call.1} parent=63 // pred_region
          %s589 = sand.u32 %s36, 1
          %s590 = scalar_lea.sflag [#allocation7], %s589
          %s591 = sand.u32 %s86, 1
          %s592 = smul.addr %s591, 4
          %s593 = scalar_lea.vmem [#allocation6], %s592
          %s595 = ssub.s32 64, 64
          %596 = vsyncadd %s590, %s595
          %s597 = smul.addr %s43, 64
          %s598 = scalar_lea.hbm %s1, %s597
          %s600 = sshll.u32 %s593, 4
          %s601 = int_to_ptr.vmem [resolvable:$true] %s600
          %603 = dma.hbm_to_vmem [thread:$0]  %s598, 64, %s601, %s590
        $region72: #{tpu_custom_call.1} parent=63 // pred_fallthru
          _
        // Predicated region
        $region73: #{tpu_custom_call.1} parent=63 // pred_check
          %p604 = pneg %p122
        $region74: #{tpu_custom_call.1} parent=63 // pred_check_branch
          %606 = sbr.rel (%p604) target = $region76
        $region75: #{tpu_custom_call.1} parent=63 // pred_region
          %s607 = sand.u32 %s36, 1
          %s608 = scalar_lea.sflag [#allocation7], %s607
          %s609 = sand.u32 %s112, 1
          %s610 = smul.addr %s609, 4
          %s611 = scalar_lea.vmem [#allocation8], %s610
          %s613 = ssub.s32 64, 64
          %614 = vsyncadd %s608, %s613
          %s615 = smul.addr %s43, 64
          %s616 = scalar_lea.hbm %s2, %s615
          %s618 = sshll.u32 %s611, 4
          %s619 = int_to_ptr.vmem [resolvable:$true] %s618
          %621 = dma.hbm_to_vmem [thread:$0]  %s616, 64, %s619, %s608
        $region76: #{tpu_custom_call.1} parent=63 // pred_fallthru
          _
      $region64: #{tpu_custom_call.1} parent=5 // pred_fallthru
        _
      %p622 = scmp.le.s32.totalorder 1, %s36
      %p623 = scmp.lt.s32.totalorder %s36, 3
      %p624 = pnand %p622, %p623
      %p625 = pneg %p624
      // Predicated region
      $region77: #{tpu_custom_call.1} parent=5 // pred_check
        _
      $region78: #{tpu_custom_call.1} parent=5 // pred_check_branch
        %627 = sbr.rel (%p624) target = $region80
      $region79: #{tpu_custom_call.1} parent=5 // pred_region
        %s628 = ssub.s32 %s36, 1
        %s629 = sand.u32 %s63, 1
        %s630 = scalar_lea.sflag [#allocation4], %s629
        %s631 = sand.u32 %s63, 1
        %s632 = smul.addr %s631, 8
        %s633 = scalar_lea.vmem [#allocation3], %s632
        // Predicated region
        $region81: #{tpu_custom_call.1} parent=79 // pred_check
          %p634 = pneg %p76
        $region82: #{tpu_custom_call.1} parent=79 // pred_check_branch
          %636 = sbr.rel (%p634) target = $region84
        $region83: #{tpu_custom_call.1} parent=79 // pred_region
          %637 = dma.done %s630, 128
        $region84: #{tpu_custom_call.1} parent=79 // pred_fallthru
          _
        %s638 = sand.u32 %s41, 1
        %s639 = scalar_lea.sflag [#allocation7], %s638
        %s640 = sand.u32 %s89, 1
        %s641 = smul.addr %s640, 4
        %s642 = scalar_lea.vmem [#allocation6], %s641
        // Predicated region
        $region85: #{tpu_custom_call.1} parent=79 // pred_check
          %p643 = pneg %p102
        $region86: #{tpu_custom_call.1} parent=79 // pred_check_branch
          %645 = sbr.rel (%p643) target = $region88
        $region87: #{tpu_custom_call.1} parent=79 // pred_region
          %646 = dma.done %s639, 64
        $region88: #{tpu_custom_call.1} parent=79 // pred_fallthru
          _
        %s647 = sand.u32 %s41, 1
        %s648 = scalar_lea.sflag [#allocation7], %s647
        %s649 = sand.u32 %s115, 1
        %s650 = smul.addr %s649, 4
        %s651 = scalar_lea.vmem [#allocation8], %s650
        // Predicated region
        $region89: #{tpu_custom_call.1} parent=79 // pred_check
          %p652 = pneg %p128
        $region90: #{tpu_custom_call.1} parent=79 // pred_check_branch
          %654 = sbr.rel (%p652) target = $region92
        $region91: #{tpu_custom_call.1} parent=79 // pred_region
          %655 = dma.done %s648, 64
        $region92: #{tpu_custom_call.1} parent=79 // pred_fallthru
          _
        // Predicated region
        $region93: #{tpu_custom_call.1} parent=79 // pred_check
          %p656 = pneg %p149
        $region94: #{tpu_custom_call.1} parent=79 // pred_check_branch
          %658 = sbr.rel (%p656) target = $region96
        $region95: #{tpu_custom_call.1} parent=79 // pred_region
          %659 = dma.done [#allocation10], 256
        $region96: #{tpu_custom_call.1} parent=79 // pred_fallthru
          _
        // Predicated region
        $region97: #{tpu_custom_call.1} parent=79 // pred_check
          %p660 = pneg %p170
        $region98: #{tpu_custom_call.1} parent=79 // pred_check_branch
          %662 = sbr.rel (%p660) target = $region100
        $region99: #{tpu_custom_call.1} parent=79 // pred_region
          %663 = dma.done [#allocation10], 16
        $region100: #{tpu_custom_call.1} parent=79 // pred_fallthru
          _
        // Predicated region
        $region101: #{tpu_custom_call.1} parent=79 // pred_check
          %p664 = pneg %p191
        $region102: #{tpu_custom_call.1} parent=79 // pred_check_branch
          %666 = sbr.rel (%p664) target = $region104
        $region103: #{tpu_custom_call.1} parent=79 // pred_region
          %667 = dma.done [#allocation13], 256
        $region104: #{tpu_custom_call.1} parent=79 // pred_fallthru
          _
        // Predicated region
        $region105: #{tpu_custom_call.1} parent=79 // pred_check
          %p668 = pneg %p212
        $region106: #{tpu_custom_call.1} parent=79 // pred_check_branch
          %670 = sbr.rel (%p668) target = $region108
        $region107: #{tpu_custom_call.1} parent=79 // pred_region
          %671 = dma.done [#allocation13], 16
        $region108: #{tpu_custom_call.1} parent=79 // pred_fallthru
          _
        // Predicated region
        $region109: #{tpu_custom_call.1} parent=79 // pred_check
          %p672 = pneg %p233
        $region110: #{tpu_custom_call.1} parent=79 // pred_check_branch
          %674 = sbr.rel (%p672) target = $region112
        $region111: #{tpu_custom_call.1} parent=79 // pred_region
          %675 = dma.done [#allocation16], 16
        $region112: #{tpu_custom_call.1} parent=79 // pred_fallthru
          _
        // Predicated region
        $region113: #{tpu_custom_call.1} parent=79 // pred_check
          %p676 = pneg %p254
        $region114: #{tpu_custom_call.1} parent=79 // pred_check_branch
          %678 = sbr.rel (%p676) target = $region116
        $region115: #{tpu_custom_call.1} parent=79 // pred_region
          %679 = dma.done [#allocation16], 16
        $region116: #{tpu_custom_call.1} parent=79 // pred_fallthru
          _
        // Predicated region
        $region117: #{tpu_custom_call.1} parent=79 // pred_check
          %p680 = pneg %p275
        $region118: #{tpu_custom_call.1} parent=79 // pred_check_branch
          %682 = sbr.rel (%p680) target = $region120
        $region119: #{tpu_custom_call.1} parent=79 // pred_region
          %683 = dma.done [#allocation19], 16
        $region120: #{tpu_custom_call.1} parent=79 // pred_fallthru
          _
        // Predicated region
        $region121: #{tpu_custom_call.1} parent=79 // pred_check
          %p684 = pneg %p296
        $region122: #{tpu_custom_call.1} parent=79 // pred_check_branch
          %686 = sbr.rel (%p684) target = $region124
        $region123: #{tpu_custom_call.1} parent=79 // pred_region
          %687 = dma.done [#allocation19], 16
        $region124: #{tpu_custom_call.1} parent=79 // pred_fallthru
          _
        // Predicated region
        $region125: #{tpu_custom_call.1} parent=79 // pred_check
          %p688 = pneg %p317
        $region126: #{tpu_custom_call.1} parent=79 // pred_check_branch
          %690 = sbr.rel (%p688) target = $region128
        $region127: #{tpu_custom_call.1} parent=79 // pred_region
          %691 = dma.done [#allocation22], 256
        $region128: #{tpu_custom_call.1} parent=79 // pred_fallthru
          _
        // Predicated region
        $region129: #{tpu_custom_call.1} parent=79 // pred_check
          %p692 = pneg %p338
        $region130: #{tpu_custom_call.1} parent=79 // pred_check_branch
          %694 = sbr.rel (%p692) target = $region132
        $region131: #{tpu_custom_call.1} parent=79 // pred_region
          %695 = dma.done [#allocation22], 16
        $region132: #{tpu_custom_call.1} parent=79 // pred_fallthru
          _
        // Predicated region
        $region133: #{tpu_custom_call.1} parent=79 // pred_check
          %p696 = pneg %p359
        $region134: #{tpu_custom_call.1} parent=79 // pred_check_branch
          %698 = sbr.rel (%p696) target = $region136
        $region135: #{tpu_custom_call.1} parent=79 // pred_region
          %699 = dma.done [#allocation25], 512
        $region136: #{tpu_custom_call.1} parent=79 // pred_fallthru
          _
        // Predicated region
        $region137: #{tpu_custom_call.1} parent=79 // pred_check
          %p700 = pneg %p380
        $region138: #{tpu_custom_call.1} parent=79 // pred_check_branch
          %702 = sbr.rel (%p700) target = $region140
        $region139: #{tpu_custom_call.1} parent=79 // pred_region
          %703 = dma.done [#allocation25], 16
        $region140: #{tpu_custom_call.1} parent=79 // pred_fallthru
          _
        %s704 = sand.u32 %s63, 1
        %s705 = scalar_lea.sflag [#allocation4], %s704
        %s706 = sand.u32 %s63, 1
        %s707 = smul.addr %s706, 8
        %s708 = scalar_lea.vmem [#allocation3], %s707
        %p709 = pneg %p76
        %p710 = pneg %p73
        %s711 = sand.u32 %s41, 1
        %s712 = scalar_lea.sflag [#allocation7], %s711
        %s713 = sand.u32 %s89, 1
        %s714 = smul.addr %s713, 4
        %s715 = scalar_lea.vmem [#allocation6], %s714
        %p716 = pneg %p102
        %p717 = pneg %p99
        %s718 = sand.u32 %s41, 1
        %s719 = scalar_lea.sflag [#allocation7], %s718
        %s720 = sand.u32 %s115, 1
        %s721 = smul.addr %s720, 4
        %s722 = scalar_lea.vmem [#allocation8], %s721
        %p723 = pneg %p128
        %p724 = pneg %p125
        %p725 = pneg %p149
        %p726 = pneg %p146
        %p727 = pneg %p170
        %p728 = pneg %p167
        %p729 = pneg %p191
        %p730 = pneg %p188
        %p731 = pneg %p212
        %p732 = pneg %p209
        %p733 = pneg %p233
        %p734 = pneg %p230
        %p735 = pneg %p254
        %p736 = pneg %p251
        %p737 = pneg %p275
        %p738 = pneg %p272
        %p739 = pneg %p296
        %p740 = pneg %p293
        %p741 = pneg %p317
        %p742 = pneg %p314
        %p743 = pneg %p338
        %p744 = pneg %p335
        %p745 = pneg %p359
        %p746 = pneg %p356
        %p747 = pneg %p380
        %p748 = pneg %p377
        %p749 = pneg %p408
        %p750 = pneg %p405
        %s751 = sand.u32 %s395, 1
        %s752 = scalar_lea.sflag [#allocation5], %s751
        %s753 = sand.u32 %s395, 1
        %s754 = smul.addr %s753, 8
        %s755 = scalar_lea.vmem [#allocation27], %s754
        %v757 = vld [vmem:[%s633] sm:$0xff]
        %v758 = vpack.c.bf16 %v757, %v757
        %v759 = vld [vmem:[#allocation9] sm:$0xf]
        %v760 = vld [vmem:[#allocation9 + $0x4] sm:$0xf]
        %v761 = vld [vmem:[#allocation9 + $0x8] sm:$0xf]
        %v762 = vld [vmem:[#allocation9 + $0xc] sm:$0xf]
        %v763 = vld [vmem:[#allocation11] sm:$0x1]
        %v765 = vlaneseq
        %v766 = vshrl.u32 %v765, 7
        %v767 = vsub.s32 0, %v766
        %v768 = vrot.slane %v763, %v767
        %v774 = vunpack.c.l.b16 %v759
        %v775 = vunpack.c.l.b16 %v760
        %v776 = vunpack.c.l.b16 %v761
        %v777 = vunpack.c.l.b16 %v762
        %v778 = vpack.c.b16 %v775, %v774
        %v779 = vpack.c.b16 %v777, %v776
        %vm782 = vcmask 261120
        %v784 = vsel %vm782, %v758, 0
        %786 = vmatprep.subr.bf16.mxu0 0
        %787 = vmatpush1.bf16.msra.mxu0 %v778
        %788 = vmatprep.subr.bf16.mxu0 0
        %789 = vmatpush1.bf16.msra.mxu0 %v779
        %790 = vmatprep.subr.bf16.mxu0 0
        %791 = vmatpush1.bf16.msra.mxu0 0
        %792 = vmatprep.subr.bf16.mxu0 0
        %793 = vmatpush1.bf16.msra.mxu0 0
        %794 = vmatprep.subr.bf16.mxu0 0
        %795 = vmatpush1.bf16.msra.mxu0 0
        %796 = vmatprep.subr.bf16.mxu0 0
        %797 = vmatpush1.bf16.msra.mxu0 0
        %798 = vmatprep.subr.bf16.mxu0 0
        %799 = vmatpush1.bf16.msra.mxu0 0
        %800 = vmatprep.subr.bf16.mxu0 0
        %801 = vmatpush1.bf16.msra.mxu0 0
        %802 = vmatprep.subr.bf16.mxu0 0
        %803 = vmatpush1.bf16.msra.mxu0 0
        %804 = vmatprep.subr.bf16.mxu0 0
        %805 = vmatpush1.bf16.msra.mxu0 0
        %806 = vmatprep.subr.bf16.mxu0 0
        %807 = vmatpush1.bf16.msra.mxu0 0
        %808 = vmatprep.subr.bf16.mxu0 0
        %809 = vmatpush1.bf16.msra.mxu0 0
        %810 = vmatprep.subr.bf16.mxu0 0
        %811 = vmatpush1.bf16.msra.mxu0 0
        %812 = vmatprep.subr.bf16.mxu0 0
        %813 = vmatpush1.bf16.msra.mxu0 0
        %814 = vmatprep.subr.bf16.mxu0 0
        %815 = vmatpush1.bf16.msra.mxu0 0
        %816 = vmatprep.subr.bf16.mxu0 0
        %817 = vmatpush1.bf16.msra.mxu0 0
        %818 = vmatprep.mubr.bf16.mxu0 0
        %819 = vmatmul.mubr.bf16.gmra.mrb[0].mxu0 %v784
        %v820 = vpop.f32.mrb[0].mxu0
        %v821 = vadd.f32 %v768, %v820
        %v822 = vpop.f32.mrb[0].mxu0
        %v823 = vpop.f32.mrb[0].mxu0
        %v824 = vpop.f32.mrb[0].mxu0
        %825 = vdwg.mxu0
        %v826 = vmul.f32 %v821, 0.35355338
        %v827 = vpack.c.bf16 %v826, %v826
        %v828 = vld [vmem:[%s642] sm:$0xf]
        %v829 = vld [vmem:[%s651] sm:$0xf]
        %vm830 = vcmask 64512
        %v832 = vsel %vm830, %v827, 0
        %v835 = vsel %vm830, %v828, 0
        %837 = vmatprep.subr.bf16.mxu0 0
        %838 = vmatpush1.bf16.xpose.msra.mxu0 %v835
        %839 = vmatprep.subr.bf16.mxu0 0
        %840 = vmatpush1.bf16.xpose.msra.mxu0 0
        %841 = vmatprep.subr.bf16.mxu0 0
        %842 = vmatpush1.bf16.xpose.msra.mxu0 0
        %843 = vmatprep.subr.bf16.mxu0 0
        %844 = vmatpush1.bf16.xpose.msra.mxu0 0
        %845 = vmatprep.subr.bf16.mxu0 0
        %846 = vmatpush1.bf16.xpose.msra.mxu0 0
        %847 = vmatprep.subr.bf16.mxu0 0
        %848 = vmatpush1.bf16.xpose.msra.mxu0 0
        %849 = vmatprep.subr.bf16.mxu0 0
        %850 = vmatpush1.bf16.xpose.msra.mxu0 0
        %851 = vmatprep.subr.bf16.mxu0 0
        %852 = vmatpush1.bf16.xpose.msra.mxu0 0
        %853 = vmatprep.subr.bf16.mxu0 0
        %854 = vmatpush1.bf16.xpose.msra.mxu0 0
        %855 = vmatprep.subr.bf16.mxu0 0
        %856 = vmatpush1.bf16.xpose.msra.mxu0 0
        %857 = vmatprep.subr.bf16.mxu0 0
        %858 = vmatpush1.bf16.xpose.msra.mxu0 0
        %859 = vmatprep.subr.bf16.mxu0 0
        %860 = vmatpush1.bf16.xpose.msra.mxu0 0
        %861 = vmatprep.subr.bf16.mxu0 0
        %862 = vmatpush1.bf16.xpose.msra.mxu0 0
        %863 = vmatprep.subr.bf16.mxu0 0
        %864 = vmatpush1.bf16.xpose.msra.mxu0 0
        %865 = vmatprep.subr.bf16.mxu0 0
        %866 = vmatpush1.bf16.xpose.msra.mxu0 0
        %867 = vmatprep.subr.bf16.mxu0 0
        %868 = vmatpush1.bf16.xpose.msra.mxu0 0
        %869 = vmatprep.mubr.bf16.mxu0 0
        %870 = vmatmul.mubr.bf16.gmra.mrb[0].mxu0 %v832
        %v871 = vpop.f32.mrb[0].mxu0
        %v872 = vadd.f32 0.0, %v871
        %v873 = vpop.f32.mrb[0].mxu0
        %v874 = vpop.f32.mrb[0].mxu0
        %v875 = vpop.f32.mrb[0].mxu0
        %876 = vdwg.mxu0
        %v877 = vsel %vm830, %v872, -inf
        %878 = vmax.xlane.f32.xlu0 %v877
        %v879 = vpop.xlane.xlu0 %878
        %v880 = vsub.f32 %v872, %v879
        %v881 = vpack.c.bf16 %v880, %v880
        %v883 = vmul.bf16 %v881, 1069105081
        %v884 = vpow.bf16.pop %v883
        %v885 = vunpack.c.l.bf16 %v884
        %v886 = vsel %vm830, %v885, 0.0
        %887 = vadd.xlane.f32.xlu0 %v886
        %v888 = vpop.xlane.xlu0 %887
        %v889 = vrcp.pop %v888
        %v891 = vsel %vm830, %v884, 0
        %vm893 = vcmask 1043456
        %v895 = vsel %vm893, %v829, 0
        %897 = vmatprep.subr.bf16.mxu0 0
        %898 = vmatpush1.bf16.msra.mxu0 %v895
        %899 = vmatprep.subr.bf16.mxu0 0
        %900 = vmatpush1.bf16.msra.mxu0 0
        %901 = vmatprep.subr.bf16.mxu0 0
        %902 = vmatpush1.bf16.msra.mxu0 0
        %903 = vmatprep.subr.bf16.mxu0 0
        %904 = vmatpush1.bf16.msra.mxu0 0
        %905 = vmatprep.subr.bf16.mxu0 0
        %906 = vmatpush1.bf16.msra.mxu0 0
        %907 = vmatprep.subr.bf16.mxu0 0
        %908 = vmatpush1.bf16.msra.mxu0 0
        %909 = vmatprep.subr.bf16.mxu0 0
        %910 = vmatpush1.bf16.msra.mxu0 0
        %911 = vmatprep.subr.bf16.mxu0 0
        %912 = vmatpush1.bf16.msra.mxu0 0
        %913 = vmatprep.subr.bf16.mxu0 0
        %914 = vmatpush1.bf16.msra.mxu0 0
        %915 = vmatprep.subr.bf16.mxu0 0
        %916 = vmatpush1.bf16.msra.mxu0 0
        %917 = vmatprep.subr.bf16.mxu0 0
        %918 = vmatpush1.bf16.msra.mxu0 0
        %919 = vmatprep.subr.bf16.mxu0 0
        %920 = vmatpush1.bf16.msra.mxu0 0
        %921 = vmatprep.subr.bf16.mxu0 0
        %922 = vmatpush1.bf16.msra.mxu0 0
        %923 = vmatprep.subr.bf16.mxu0 0
        %924 = vmatpush1.bf16.msra.mxu0 0
        %925 = vmatprep.subr.bf16.mxu0 0
        %926 = vmatpush1.bf16.msra.mxu0 0
        %927 = vmatprep.subr.bf16.mxu0 0
        %928 = vmatpush1.bf16.msra.mxu0 0
        %929 = vmatprep.mubr.bf16.mxu0 0
        %930 = vmatmul.mubr.bf16.gmra.mrb[0].mxu0 %v891
        %v931 = vpop.f32.mrb[0].mxu0
        %v932 = vadd.f32 0.0, %v931
        %v933 = vpop.f32.mrb[0].mxu0
        %v934 = vpop.f32.mrb[0].mxu0
        %v935 = vpop.f32.mrb[0].mxu0
        %936 = vdwg.mxu0
        %v937 = vmul.f32 %v932, %v889
        %v938 = vpack.c.bf16 %v937, %v937
        %vm939 = vcmask 60416
        %940 = vst.msk [vmem:[#allocation2] sm:$0xf] %vm939, %v938
        %942 = vrot.lane.b32.xlu0 %v827, 120
        %v943 = vpop.permute.xlu0 %942
        %v945 = vunpack.c.l.b16 %v828
        %v946 = vpack.c.b16 %v945, %v945
        %947 = vrot.lane.b32.xlu0 %v946, 120
        %v948 = vpop.permute.xlu0 %947
        %v950 = vsel %vm830, %v943, 0
        %v953 = vsel %vm830, %v948, 0
        %955 = vmatprep.subr.bf16.mxu0 0
        %956 = vmatpush1.bf16.xpose.msra.mxu0 %v953
        %957 = vmatprep.subr.bf16.mxu0 0
        %958 = vmatpush1.bf16.xpose.msra.mxu0 0
        %959 = vmatprep.subr.bf16.mxu0 0
        %960 = vmatpush1.bf16.xpose.msra.mxu0 0
        %961 = vmatprep.subr.bf16.mxu0 0
        %962 = vmatpush1.bf16.xpose.msra.mxu0 0
        %963 = vmatprep.subr.bf16.mxu0 0
        %964 = vmatpush1.bf16.xpose.msra.mxu0 0
        %965 = vmatprep.subr.bf16.mxu0 0
        %966 = vmatpush1.bf16.xpose.msra.mxu0 0
        %967 = vmatprep.subr.bf16.mxu0 0
        %968 = vmatpush1.bf16.xpose.msra.mxu0 0
        %969 = vmatprep.subr.bf16.mxu0 0
        %970 = vmatpush1.bf16.xpose.msra.mxu0 0
        %971 = vmatprep.subr.bf16.mxu0 0
        %972 = vmatpush1.bf16.xpose.msra.mxu0 0
        %973 = vmatprep.subr.bf16.mxu0 0
        %974 = vmatpush1.bf16.xpose.msra.mxu0 0
        %975 = vmatprep.subr.bf16.mxu0 0
        %976 = vmatpush1.bf16.xpose.msra.mxu0 0
        %977 = vmatprep.subr.bf16.mxu0 0
        %978 = vmatpush1.bf16.xpose.msra.mxu0 0
        %979 = vmatprep.subr.bf16.mxu0 0
        %980 = vmatpush1.bf16.xpose.msra.mxu0 0
        %981 = vmatprep.subr.bf16.mxu0 0
        %982 = vmatpush1.bf16.xpose.msra.mxu0 0
        %983 = vmatprep.subr.bf16.mxu0 0
        %984 = vmatpush1.bf16.xpose.msra.mxu0 0
        %985 = vmatprep.subr.bf16.mxu0 0
        %986 = vmatpush1.bf16.xpose.msra.mxu0 0
        %987 = vmatprep.mubr.bf16.mxu0 0
        %988 = vmatmul.mubr.bf16.gmra.mrb[0].mxu0 %v950
        %v989 = vpop.f32.mrb[0].mxu0
        %v990 = vadd.f32 0.0, %v989
        %v991 = vpop.f32.mrb[0].mxu0
        %v992 = vpop.f32.mrb[0].mxu0
        %v993 = vpop.f32.mrb[0].mxu0
        %994 = vdwg.mxu0
        %v995 = vsel %vm830, %v990, -inf
        %996 = vmax.xlane.f32.xlu0 %v995
        %v997 = vpop.xlane.xlu0 %996
        %v998 = vsub.f32 %v990, %v997
        %v999 = vpack.c.bf16 %v998, %v998
        %v1001 = vmul.bf16 %v999, 1069105081
        %v1002 = vpow.bf16.pop %v1001
        %v1003 = vunpack.c.l.bf16 %v1002
        %v1004 = vsel %vm830, %v1003, 0.0
        %1005 = vadd.xlane.f32.xlu0 %v1004
        %v1006 = vpop.xlane.xlu0 %1005
        %v1007 = vrcp.pop %v1006
        %v1009 = vunpack.c.l.b16 %v829
        %v1010 = vpack.c.b16 %v1009, %v1009
        %1011 = vrot.lane.b32.xlu0 %v1010, 120
        %v1012 = vpop.permute.xlu0 %1011
        %v1014 = vsel %vm830, %v1002, 0
        %v1017 = vsel %vm893, %v1012, 0
        %1019 = vmatprep.subr.bf16.mxu0 0
        %1020 = vmatpush1.bf16.msra.mxu0 %v1017
        %1021 = vmatprep.subr.bf16.mxu0 0
        %1022 = vmatpush1.bf16.msra.mxu0 0
        %1023 = vmatprep.subr.bf16.mxu0 0
        %1024 = vmatpush1.bf16.msra.mxu0 0
        %1025 = vmatprep.subr.bf16.mxu0 0
        %1026 = vmatpush1.bf16.msra.mxu0 0
        %1027 = vmatprep.subr.bf16.mxu0 0
        %1028 = vmatpush1.bf16.msra.mxu0 0
        %1029 = vmatprep.subr.bf16.mxu0 0
        %1030 = vmatpush1.bf16.msra.mxu0 0
        %1031 = vmatprep.subr.bf16.mxu0 0
        %1032 = vmatpush1.bf16.msra.mxu0 0
        %1033 = vmatprep.subr.bf16.mxu0 0
        %1034 = vmatpush1.bf16.msra.mxu0 0
        %1035 = vmatprep.subr.bf16.mxu0 0
        %1036 = vmatpush1.bf16.msra.mxu0 0
        %1037 = vmatprep.subr.bf16.mxu0 0
        %1038 = vmatpush1.bf16.msra.mxu0 0
        %1039 = vmatprep.subr.bf16.mxu0 0
        %1040 = vmatpush1.bf16.msra.mxu0 0
        %1041 = vmatprep.subr.bf16.mxu0 0
        %1042 = vmatpush1.bf16.msra.mxu0 0
        %1043 = vmatprep.subr.bf16.mxu0 0
        %1044 = vmatpush1.bf16.msra.mxu0 0
        %1045 = vmatprep.subr.bf16.mxu0 0
        %1046 = vmatpush1.bf16.msra.mxu0 0
        %1047 = vmatprep.subr.bf16.mxu0 0
        %1048 = vmatpush1.bf16.msra.mxu0 0
        %1049 = vmatprep.subr.bf16.mxu0 0
        %1050 = vmatpush1.bf16.msra.mxu0 0
        %1051 = vmatprep.mubr.bf16.mxu0 0
        %1052 = vmatmul.mubr.bf16.gmra.mrb[0].mxu0 %v1014
        %v1053 = vpop.f32.mrb[0].mxu0
        %v1054 = vadd.f32 0.0, %v1053
        %v1055 = vpop.f32.mrb[0].mxu0
        %v1056 = vpop.f32.mrb[0].mxu0
        %v1057 = vpop.f32.mrb[0].mxu0
        %1058 = vdwg.mxu0
        %v1059 = vmul.f32 %v1054, %v1007
        %v1060 = vpack.c.bf16 %v1059, %v1059
        %v1062 = vunpack.c.l.b16 %v1060
        %v1063 = vpack.c.b16 %v1062, %v1062
        %1064 = vrot.lane.b32.xlu0 %v1063, 8
        %v1065 = vpop.permute.xlu0 %1064
        %vm1067 = vcmask 126016
        %1068 = vst.msk [vmem:[#allocation2] sm:$0xf] %vm1067, %v1065
        %1069 = vrot.lane.b32.xlu0 %v827, 112
        %v1070 = vpop.permute.xlu0 %1069
        %1071 = vrot.lane.b32.xlu0 %v946, 112
        %v1072 = vpop.permute.xlu0 %1071
        %v1074 = vsel %vm830, %v1070, 0
        %v1077 = vsel %vm830, %v1072, 0
        %1079 = vmatprep.subr.bf16.mxu0 0
        %1080 = vmatpush1.bf16.xpose.msra.mxu0 %v1077
        %1081 = vmatprep.subr.bf16.mxu0 0
        %1082 = vmatpush1.bf16.xpose.msra.mxu0 0
        %1083 = vmatprep.subr.bf16.mxu0 0
        %1084 = vmatpush1.bf16.xpose.msra.mxu0 0
        %1085 = vmatprep.subr.bf16.mxu0 0
        %1086 = vmatpush1.bf16.xpose.msra.mxu0 0
        %1087 = vmatprep.subr.bf16.mxu0 0
        %1088 = vmatpush1.bf16.xpose.msra.mxu0 0
        %1089 = vmatprep.subr.bf16.mxu0 0
        %1090 = vmatpush1.bf16.xpose.msra.mxu0 0
        %1091 = vmatprep.subr.bf16.mxu0 0
        %1092 = vmatpush1.bf16.xpose.msra.mxu0 0
        %1093 = vmatprep.subr.bf16.mxu0 0
        %1094 = vmatpush1.bf16.xpose.msra.mxu0 0
        %1095 = vmatprep.subr.bf16.mxu0 0
        %1096 = vmatpush1.bf16.xpose.msra.mxu0 0
        %1097 = vmatprep.subr.bf16.mxu0 0
        %1098 = vmatpush1.bf16.xpose.msra.mxu0 0
        %1099 = vmatprep.subr.bf16.mxu0 0
        %1100 = vmatpush1.bf16.xpose.msra.mxu0 0
        %1101 = vmatprep.subr.bf16.mxu0 0
        %1102 = vmatpush1.bf16.xpose.msra.mxu0 0
        %1103 = vmatprep.subr.bf16.mxu0 0
        %1104 = vmatpush1.bf16.xpose.msra.mxu0 0
        %1105 = vmatprep.subr.bf16.mxu0 0
        %1106 = vmatpush1.bf16.xpose.msra.mxu0 0
        %1107 = vmatprep.subr.bf16.mxu0 0
        %1108 = vmatpush1.bf16.xpose.msra.mxu0 0
        %1109 = vmatprep.subr.bf16.mxu0 0
        %1110 = vmatpush1.bf16.xpose.msra.mxu0 0
        %1111 = vmatprep.mubr.bf16.mxu0 0
        %1112 = vmatmul.mubr.bf16.gmra.mrb[0].mxu0 %v1074
        %v1113 = vpop.f32.mrb[0].mxu0
        %v1114 = vadd.f32 0.0, %v1113
        %v1115 = vpop.f32.mrb[0].mxu0
        %v1116 = vpop.f32.mrb[0].mxu0
        %v1117 = vpop.f32.mrb[0].mxu0
        %1118 = vdwg.mxu0
        %v1119 = vsel %vm830, %v1114, -inf
        %1120 = vmax.xlane.f32.xlu0 %v1119
        %v1121 = vpop.xlane.xlu0 %1120
        %v1122 = vsub.f32 %v1114, %v1121
        %v1123 = vpack.c.bf16 %v1122, %v1122
        %v1125 = vmul.bf16 %v1123, 1069105081
        %v1126 = vpow.bf16.pop %v1125
        %v1127 = vunpack.c.l.bf16 %v1126
        %v1128 = vsel %vm830, %v1127, 0.0
        %1129 = vadd.xlane.f32.xlu0 %v1128
        %v1130 = vpop.xlane.xlu0 %1129
        %v1131 = vrcp.pop %v1130
        %1132 = vrot.lane.b32.xlu0 %v1010, 112
        %v1133 = vpop.permute.xlu0 %1132
        %v1135 = vsel %vm830, %v1126, 0
        %v1138 = vsel %vm893, %v1133, 0
        %1140 = vmatprep.subr.bf16.mxu0 0
        %1141 = vmatpush1.bf16.msra.mxu0 %v1138
        %1142 = vmatprep.subr.bf16.mxu0 0
        %1143 = vmatpush1.bf16.msra.mxu0 0
        %1144 = vmatprep.subr.bf16.mxu0 0
        %1145 = vmatpush1.bf16.msra.mxu0 0
        %1146 = vmatprep.subr.bf16.mxu0 0
        %1147 = vmatpush1.bf16.msra.mxu0 0
        %1148 = vmatprep.subr.bf16.mxu0 0
        %1149 = vmatpush1.bf16.msra.mxu0 0
        %1150 = vmatprep.subr.bf16.mxu0 0
        %1151 = vmatpush1.bf16.msra.mxu0 0
        %1152 = vmatprep.subr.bf16.mxu0 0
        %1153 = vmatpush1.bf16.msra.mxu0 0
        %1154 = vmatprep.subr.bf16.mxu0 0
        %1155 = vmatpush1.bf16.msra.mxu0 0
        %1156 = vmatprep.subr.bf16.mxu0 0
        %1157 = vmatpush1.bf16.msra.mxu0 0
        %1158 = vmatprep.subr.bf16.mxu0 0
        %1159 = vmatpush1.bf16.msra.mxu0 0
        %1160 = vmatprep.subr.bf16.mxu0 0
        %1161 = vmatpush1.bf16.msra.mxu0 0
        %1162 = vmatprep.subr.bf16.mxu0 0
        %1163 = vmatpush1.bf16.msra.mxu0 0
        %1164 = vmatprep.subr.bf16.mxu0 0
        %1165 = vmatpush1.bf16.msra.mxu0 0
        %1166 = vmatprep.subr.bf16.mxu0 0
        %1167 = vmatpush1.bf16.msra.mxu0 0
        %1168 = vmatprep.subr.bf16.mxu0 0
        %1169 = vmatpush1.bf16.msra.mxu0 0
        %1170 = vmatprep.subr.bf16.mxu0 0
        %1171 = vmatpush1.bf16.msra.mxu0 0
        %1172 = vmatprep.mubr.bf16.mxu0 0
        %1173 = vmatmul.mubr.bf16.gmra.mrb[0].mxu0 %v1135
        %v1174 = vpop.f32.mrb[0].mxu0
        %v1175 = vadd.f32 0.0, %v1174
        %v1176 = vpop.f32.mrb[0].mxu0
        %v1177 = vpop.f32.mrb[0].mxu0
        %v1178 = vpop.f32.mrb[0].mxu0
        %1179 = vdwg.mxu0
        %v1180 = vmul.f32 %v1175, %v1131
        %v1181 = vpack.c.bf16 %v1180, %v1180
        %v1183 = vunpack.c.l.b16 %v1181
        %v1184 = vpack.c.b16 %v1183, %v1183
        %1185 = vrot.lane.b32.xlu0 %v1184, 16
        %v1186 = vpop.permute.xlu0 %1185
        %vm1188 = vcmask 191616
        %1189 = vst.msk [vmem:[#allocation2] sm:$0xf] %vm1188, %v1186
        %1190 = vrot.lane.b32.xlu0 %v827, 104
        %v1191 = vpop.permute.xlu0 %1190
        %1192 = vrot.lane.b32.xlu0 %v946, 104
        %v1193 = vpop.permute.xlu0 %1192
        %v1195 = vsel %vm830, %v1191, 0
        %v1198 = vsel %vm830, %v1193, 0
        %1200 = vmatprep.subr.bf16.mxu0 0
        %1201 = vmatpush1.bf16.xpose.msra.mxu0 %v1198
        %1202 = vmatprep.subr.bf16.mxu0 0
        %1203 = vmatpush1.bf16.xpose.msra.mxu0 0
        %1204 = vmatprep.subr.bf16.mxu0 0
        %1205 = vmatpush1.bf16.xpose.msra.mxu0 0
        %1206 = vmatprep.subr.bf16.mxu0 0
        %1207 = vmatpush1.bf16.xpose.msra.mxu0 0
        %1208 = vmatprep.subr.bf16.mxu0 0
        %1209 = vmatpush1.bf16.xpose.msra.mxu0 0
        %1210 = vmatprep.subr.bf16.mxu0 0
        %1211 = vmatpush1.bf16.xpose.msra.mxu0 0
        %1212 = vmatprep.subr.bf16.mxu0 0
        %1213 = vmatpush1.bf16.xpose.msra.mxu0 0
        %1214 = vmatprep.subr.bf16.mxu0 0
        %1215 = vmatpush1.bf16.xpose.msra.mxu0 0
        %1216 = vmatprep.subr.bf16.mxu0 0
        %1217 = vmatpush1.bf16.xpose.msra.mxu0 0
        %1218 = vmatprep.subr.bf16.mxu0 0
        %1219 = vmatpush1.bf16.xpose.msra.mxu0 0
        %1220 = vmatprep.subr.bf16.mxu0 0
        %1221 = vmatpush1.bf16.xpose.msra.mxu0 0
        %1222 = vmatprep.subr.bf16.mxu0 0
        %1223 = vmatpush1.bf16.xpose.msra.mxu0 0
        %1224 = vmatprep.subr.bf16.mxu0 0
        %1225 = vmatpush1.bf16.xpose.msra.mxu0 0
        %1226 = vmatprep.subr.bf16.mxu0 0
        %1227 = vmatpush1.bf16.xpose.msra.mxu0 0
        %1228 = vmatprep.subr.bf16.mxu0 0
        %1229 = vmatpush1.bf16.xpose.msra.mxu0 0
        %1230 = vmatprep.subr.bf16.mxu0 0
        %1231 = vmatpush1.bf16.xpose.msra.mxu0 0
        %1232 = vmatprep.mubr.bf16.mxu0 0
        %1233 = vmatmul.mubr.bf16.gmra.mrb[0].mxu0 %v1195
        %v1234 = vpop.f32.mrb[0].mxu0
        %v1235 = vadd.f32 0.0, %v1234
        %v1236 = vpop.f32.mrb[0].mxu0
        %v1237 = vpop.f32.mrb[0].mxu0
        %v1238 = vpop.f32.mrb[0].mxu0
        %1239 = vdwg.mxu0
        %v1240 = vsel %vm830, %v1235, -inf
        %1241 = vmax.xlane.f32.xlu0 %v1240
        %v1242 = vpop.xlane.xlu0 %1241
        %v1243 = vsub.f32 %v1235, %v1242
        %v1244 = vpack.c.bf16 %v1243, %v1243
        %v1246 = vmul.bf16 %v1244, 1069105081
        %v1247 = vpow.bf16.pop %v1246
        %v1248 = vunpack.c.l.bf16 %v1247
        %v1249 = vsel %vm830, %v1248, 0.0
        %1250 = vadd.xlane.f32.xlu0 %v1249
        %v1251 = vpop.xlane.xlu0 %1250
        %v1252 = vrcp.pop %v1251
        %1253 = vrot.lane.b32.xlu0 %v1010, 104
        %v1254 = vpop.permute.xlu0 %1253
        %v1256 = vsel %vm830, %v1247, 0
        %v1259 = vsel %vm893, %v1254, 0
        %1261 = vmatprep.subr.bf16.mxu0 0
        %1262 = vmatpush1.bf16.msra.mxu0 %v1259
        %1263 = vmatprep.subr.bf16.mxu0 0
        %1264 = vmatpush1.bf16.msra.mxu0 0
        %1265 = vmatprep.subr.bf16.mxu0 0
        %1266 = vmatpush1.bf16.msra.mxu0 0
        %1267 = vmatprep.subr.bf16.mxu0 0
        %1268 = vmatpush1.bf16.msra.mxu0 0
        %1269 = vmatprep.subr.bf16.mxu0 0
        %1270 = vmatpush1.bf16.msra.mxu0 0
        %1271 = vmatprep.subr.bf16.mxu0 0
        %1272 = vmatpush1.bf16.msra.mxu0 0
        %1273 = vmatprep.subr.bf16.mxu0 0
        %1274 = vmatpush1.bf16.msra.mxu0 0
        %1275 = vmatprep.subr.bf16.mxu0 0
        %1276 = vmatpush1.bf16.msra.mxu0 0
        %1277 = vmatprep.subr.bf16.mxu0 0
        %1278 = vmatpush1.bf16.msra.mxu0 0
        %1279 = vmatprep.subr.bf16.mxu0 0
        %1280 = vmatpush1.bf16.msra.mxu0 0
        %1281 = vmatprep.subr.bf16.mxu0 0
        %1282 = vmatpush1.bf16.msra.mxu0 0
        %1283 = vmatprep.subr.bf16.mxu0 0
        %1284 = vmatpush1.bf16.msra.mxu0 0
        %1285 = vmatprep.subr.bf16.mxu0 0
        %1286 = vmatpush1.bf16.msra.mxu0 0
        %1287 = vmatprep.subr.bf16.mxu0 0
        %1288 = vmatpush1.bf16.msra.mxu0 0
        %1289 = vmatprep.subr.bf16.mxu0 0
        %1290 = vmatpush1.bf16.msra.mxu0 0
        %1291 = vmatprep.subr.bf16.mxu0 0
        %1292 = vmatpush1.bf16.msra.mxu0 0
        %1293 = vmatprep.mubr.bf16.mxu0 0
        %1294 = vmatmul.mubr.bf16.gmra.mrb[0].mxu0 %v1256
        %v1295 = vpop.f32.mrb[0].mxu0
        %v1296 = vadd.f32 0.0, %v1295
        %v1297 = vpop.f32.mrb[0].mxu0
        %v1298 = vpop.f32.mrb[0].mxu0
        %v1299 = vpop.f32.mrb[0].mxu0
        %1300 = vdwg.mxu0
        %v1301 = vmul.f32 %v1296, %v1252
        %v1302 = vpack.c.bf16 %v1301, %v1301
        %v1304 = vunpack.c.l.b16 %v1302
        %v1305 = vpack.c.b16 %v1304, %v1304
        %1306 = vrot.lane.b32.xlu0 %v1305, 24
        %v1307 = vpop.permute.xlu0 %1306
        %vm1309 = vcmask 257216
        %1310 = vst.msk [vmem:[#allocation2] sm:$0xf] %vm1309, %v1307
        %v1311 = vld [vmem:[#allocation2] sm:$0xf]
        %v1312 = vld [vmem:[#allocation12] sm:$0xf]
        %v1313 = vld [vmem:[#allocation12 + $0x4] sm:$0xf]
        %v1314 = vld [vmem:[#allocation12 + $0x8] sm:$0xf]
        %v1315 = vld [vmem:[#allocation12 + $0xc] sm:$0xf]
        %v1316 = vld [vmem:[#allocation14] sm:$0x1]
        %v1318 = vlaneseq
        %v1319 = vshrl.u32 %v1318, 7
        %v1320 = vsub.s32 0, %v1319
        %v1321 = vrot.slane %v1316, %v1320
        %v1327 = vunpack.c.l.b16 %v1312
        %v1328 = vunpack.c.l.b16 %v1313
        %v1329 = vunpack.c.l.b16 %v1314
        %v1330 = vunpack.c.l.b16 %v1315
        %v1331 = vpack.c.b16 %v1328, %v1327
        %v1332 = vpack.c.b16 %v1330, %v1329
        %v1336 = vsel %vm782, %v1311, 0
        %1338 = vmatprep.subr.bf16.mxu0 0
        %1339 = vmatpush1.bf16.msra.mxu0 %v1331
        %1340 = vmatprep.subr.bf16.mxu0 0
        %1341 = vmatpush1.bf16.msra.mxu0 %v1332
        %1342 = vmatprep.subr.bf16.mxu0 0
        %1343 = vmatpush1.bf16.msra.mxu0 0
        %1344 = vmatprep.subr.bf16.mxu0 0
        %1345 = vmatpush1.bf16.msra.mxu0 0
        %1346 = vmatprep.subr.bf16.mxu0 0
        %1347 = vmatpush1.bf16.msra.mxu0 0
        %1348 = vmatprep.subr.bf16.mxu0 0
        %1349 = vmatpush1.bf16.msra.mxu0 0
        %1350 = vmatprep.subr.bf16.mxu0 0
        %1351 = vmatpush1.bf16.msra.mxu0 0
        %1352 = vmatprep.subr.bf16.mxu0 0
        %1353 = vmatpush1.bf16.msra.mxu0 0
        %1354 = vmatprep.subr.bf16.mxu0 0
        %1355 = vmatpush1.bf16.msra.mxu0 0
        %1356 = vmatprep.subr.bf16.mxu0 0
        %1357 = vmatpush1.bf16.msra.mxu0 0
        %1358 = vmatprep.subr.bf16.mxu0 0
        %1359 = vmatpush1.bf16.msra.mxu0 0
        %1360 = vmatprep.subr.bf16.mxu0 0
        %1361 = vmatpush1.bf16.msra.mxu0 0
        %1362 = vmatprep.subr.bf16.mxu0 0
        %1363 = vmatpush1.bf16.msra.mxu0 0
        %1364 = vmatprep.subr.bf16.mxu0 0
        %1365 = vmatpush1.bf16.msra.mxu0 0
        %1366 = vmatprep.subr.bf16.mxu0 0
        %1367 = vmatpush1.bf16.msra.mxu0 0
        %1368 = vmatprep.subr.bf16.mxu0 0
        %1369 = vmatpush1.bf16.msra.mxu0 0
        %1370 = vmatprep.mubr.bf16.mxu0 0
        %1371 = vmatmul.mubr.bf16.gmra.mrb[0].mxu0 %v1336
        %v1372 = vpop.f32.mrb[0].mxu0
        %v1373 = vadd.f32 %v1321, %v1372
        %v1374 = vpop.f32.mrb[0].mxu0
        %v1375 = vpop.f32.mrb[0].mxu0
        %v1376 = vpop.f32.mrb[0].mxu0
        %1377 = vdwg.mxu0
        %v1378 = vadd.f32 %v757, %v1373
        %v1379 = vld [vmem:[#allocation15] sm:$0x1]
        %v1380 = vld [vmem:[#allocation17] sm:$0x1]
        %v1381 = vsel %vm782, %v1378, 0.0
        %1382 = vadd.xlane.f32.xlu0 %v1381
        %v1383 = vpop.xlane.xlu0 %1382
        %v1384 = vrcp.pop 32.0
        %v1385 = vmul.f32 %v1383, %v1384
        %v1386 = vsub.f32 %v1378, %v1385
        %v1387 = vmul.f32 %v1386, %v1386
        %v1388 = vsel %vm782, %v1387, 0.0
        %1389 = vadd.xlane.f32.xlu0 %v1388
        %v1390 = vpop.xlane.xlu0 %1389
        %v1391 = vmul.f32 %v1390, %v1384
        %v1392 = vadd.f32 %v1391, 1e-05
        %v1393 = vrsqrt.pop %v1392
        %v1394 = vmul.f32 %v1386, %v1393
        %v1396 = vlaneseq
        %v1397 = vshrl.u32 %v1396, 7
        %v1398 = vsub.s32 0, %v1397
        %v1399 = vrot.slane %v1379, %v1398
        %v1401 = vmul.f32 %v1394, %v1399
        %v1403 = vlaneseq
        %v1404 = vshrl.u32 %v1403, 7
        %v1405 = vsub.s32 0, %v1404
        %v1406 = vrot.slane %v1380, %v1405
        %v1408 = vadd.f32 %v1401, %v1406
        %v1409 = vpack.c.bf16 %v1408, %v1408
        %v1410 = vld [vmem:[#allocation21] sm:$0xf]
        %v1411 = vld [vmem:[#allocation21 + $0x4] sm:$0xf]
        %v1412 = vld [vmem:[#allocation21 + $0x8] sm:$0xf]
        %v1413 = vld [vmem:[#allocation21 + $0xc] sm:$0xf]
        %v1414 = vld [vmem:[#allocation23] sm:$0x1]
        %v1416 = vlaneseq
        %v1417 = vshrl.u32 %v1416, 7
        %v1418 = vsub.s32 0, %v1417
        %v1419 = vrot.slane %v1414, %v1418
        %v1425 = vunpack.c.l.b16 %v1410
        %v1426 = vunpack.c.l.b16 %v1411
        %v1427 = vunpack.c.l.b16 %v1412
        %v1428 = vunpack.c.l.b16 %v1413
        %v1429 = vpack.c.b16 %v1426, %v1425
        %v1430 = vpack.c.b16 %v1428, %v1427
        %v1434 = vsel %vm782, %v1409, 0
        %1436 = vmatprep.subr.bf16.mxu0 0
        %1437 = vmatpush1.bf16.msra.mxu0 %v1429
        %1438 = vmatprep.subr.bf16.mxu0 0
        %1439 = vmatpush1.bf16.msra.mxu0 %v1430
        %1440 = vmatprep.subr.bf16.mxu0 0
        %1441 = vmatpush1.bf16.msra.mxu0 0
        %1442 = vmatprep.subr.bf16.mxu0 0
        %1443 = vmatpush1.bf16.msra.mxu0 0
        %1444 = vmatprep.subr.bf16.mxu0 0
        %1445 = vmatpush1.bf16.msra.mxu0 0
        %1446 = vmatprep.subr.bf16.mxu0 0
        %1447 = vmatpush1.bf16.msra.mxu0 0
        %1448 = vmatprep.subr.bf16.mxu0 0
        %1449 = vmatpush1.bf16.msra.mxu0 0
        %1450 = vmatprep.subr.bf16.mxu0 0
        %1451 = vmatpush1.bf16.msra.mxu0 0
        %1452 = vmatprep.subr.bf16.mxu0 0
        %1453 = vmatpush1.bf16.msra.mxu0 0
        %1454 = vmatprep.subr.bf16.mxu0 0
        %1455 = vmatpush1.bf16.msra.mxu0 0
        %1456 = vmatprep.subr.bf16.mxu0 0
        %1457 = vmatpush1.bf16.msra.mxu0 0
        %1458 = vmatprep.subr.bf16.mxu0 0
        %1459 = vmatpush1.bf16.msra.mxu0 0
        %1460 = vmatprep.subr.bf16.mxu0 0
        %1461 = vmatpush1.bf16.msra.mxu0 0
        %1462 = vmatprep.subr.bf16.mxu0 0
        %1463 = vmatpush1.bf16.msra.mxu0 0
        %1464 = vmatprep.subr.bf16.mxu0 0
        %1465 = vmatpush1.bf16.msra.mxu0 0
        %1466 = vmatprep.subr.bf16.mxu0 0
        %1467 = vmatpush1.bf16.msra.mxu0 0
        %1468 = vmatprep.mubr.bf16.mxu0 0
        %1469 = vmatmul.mubr.bf16.gmra.mrb[0].mxu0 %v1434
        %v1470 = vpop.f32.mrb[0].mxu0
        %v1471 = vadd.f32 %v1419, %v1470
        %v1472 = vpop.f32.mrb[0].mxu0
        %v1473 = vpop.f32.mrb[0].mxu0
        %v1474 = vpop.f32.mrb[0].mxu0
        %1475 = vdwg.mxu0
        %v1476 = vmax.f32 %v1471, 0.0
        %v1477 = vpack.c.bf16 %v1476, %v1476
        %v1478 = vld [vmem:[#allocation24] sm:$0xf]
        %v1479 = vld [vmem:[#allocation24 + $0x4] sm:$0xf]
        %v1480 = vld [vmem:[#allocation24 + $0x8] sm:$0xf]
        %v1481 = vld [vmem:[#allocation24 + $0xc] sm:$0xf]
        %v1482 = vld [vmem:[#allocation24 + $0x10] sm:$0xf]
        %v1483 = vld [vmem:[#allocation24 + $0x14] sm:$0xf]
        %v1484 = vld [vmem:[#allocation24 + $0x18] sm:$0xf]
        %v1485 = vld [vmem:[#allocation24 + $0x1c] sm:$0xf]
        %v1486 = vld [vmem:[#allocation26] sm:$0x1]
        %v1488 = vlaneseq
        %v1489 = vshrl.u32 %v1488, 7
        %v1490 = vsub.s32 0, %v1489
        %v1491 = vrot.slane %v1486, %v1490
        %v1501 = vunpack.c.l.b16 %v1478
        %v1502 = vunpack.c.l.b16 %v1479
        %v1503 = vunpack.c.l.b16 %v1480
        %v1504 = vunpack.c.l.b16 %v1481
        %v1505 = vunpack.c.l.b16 %v1482
        %v1506 = vunpack.c.l.b16 %v1483
        %v1507 = vunpack.c.l.b16 %v1484
        %v1508 = vunpack.c.l.b16 %v1485
        %v1509 = vpack.c.b16 %v1502, %v1501
        %v1510 = vpack.c.b16 %v1504, %v1503
        %v1511 = vpack.c.b16 %v1506, %v1505
        %v1512 = vpack.c.b16 %v1508, %v1507
        %vm1517 = vcmask 523264
        %v1519 = vsel %vm1517, %v1477, 0
        %1521 = vmatprep.subr.bf16.mxu0 0
        %1522 = vmatpush1.bf16.msra.mxu0 %v1509
        %1523 = vmatprep.subr.bf16.mxu0 0
        %1524 = vmatpush1.bf16.msra.mxu0 %v1510
        %1525 = vmatprep.subr.bf16.mxu0 0
        %1526 = vmatpush1.bf16.msra.mxu0 %v1511
        %1527 = vmatprep.subr.bf16.mxu0 0
        %1528 = vmatpush1.bf16.msra.mxu0 %v1512
        %1529 = vmatprep.subr.bf16.mxu0 0
        %1530 = vmatpush1.bf16.msra.mxu0 0
        %1531 = vmatprep.subr.bf16.mxu0 0
        %1532 = vmatpush1.bf16.msra.mxu0 0
        %1533 = vmatprep.subr.bf16.mxu0 0
        %1534 = vmatpush1.bf16.msra.mxu0 0
        %1535 = vmatprep.subr.bf16.mxu0 0
        %1536 = vmatpush1.bf16.msra.mxu0 0
        %1537 = vmatprep.subr.bf16.mxu0 0
        %1538 = vmatpush1.bf16.msra.mxu0 0
        %1539 = vmatprep.subr.bf16.mxu0 0
        %1540 = vmatpush1.bf16.msra.mxu0 0
        %1541 = vmatprep.subr.bf16.mxu0 0
        %1542 = vmatpush1.bf16.msra.mxu0 0
        %1543 = vmatprep.subr.bf16.mxu0 0
        %1544 = vmatpush1.bf16.msra.mxu0 0
        %1545 = vmatprep.subr.bf16.mxu0 0
        %1546 = vmatpush1.bf16.msra.mxu0 0
        %1547 = vmatprep.subr.bf16.mxu0 0
        %1548 = vmatpush1.bf16.msra.mxu0 0
        %1549 = vmatprep.subr.bf16.mxu0 0
        %1550 = vmatpush1.bf16.msra.mxu0 0
        %1551 = vmatprep.subr.bf16.mxu0 0
        %1552 = vmatpush1.bf16.msra.mxu0 0
        %1553 = vmatprep.mubr.bf16.mxu0 0
        %1554 = vmatmul.mubr.bf16.gmra.mrb[0].mxu0 %v1519
        %v1555 = vpop.f32.mrb[0].mxu0
        %v1556 = vadd.f32 %v1491, %v1555
        %v1557 = vpop.f32.mrb[0].mxu0
        %v1558 = vpop.f32.mrb[0].mxu0
        %v1559 = vpop.f32.mrb[0].mxu0
        %1560 = vdwg.mxu0
        %v1561 = vadd.f32 %v1408, %v1556
        %v1562 = vld [vmem:[#allocation18] sm:$0x1]
        %v1563 = vld [vmem:[#allocation20] sm:$0x1]
        %v1564 = vsel %vm782, %v1561, 0.0
        %1565 = vadd.xlane.f32.xlu0 %v1564
        %v1566 = vpop.xlane.xlu0 %1565
        %v1567 = vmul.f32 %v1566, %v1384
        %v1568 = vsub.f32 %v1561, %v1567
        %v1569 = vmul.f32 %v1568, %v1568
        %v1570 = vsel %vm782, %v1569, 0.0
        %1571 = vadd.xlane.f32.xlu0 %v1570
        %v1572 = vpop.xlane.xlu0 %1571
        %v1573 = vmul.f32 %v1572, %v1384
        %v1574 = vadd.f32 %v1573, 1e-05
        %v1575 = vrsqrt.pop %v1574
        %v1576 = vmul.f32 %v1568, %v1575
        %v1578 = vlaneseq
        %v1579 = vshrl.u32 %v1578, 7
        %v1580 = vsub.s32 0, %v1579
        %v1581 = vrot.slane %v1562, %v1580
        %v1583 = vmul.f32 %v1576, %v1581
        %v1585 = vlaneseq
        %v1586 = vshrl.u32 %v1585, 7
        %v1587 = vsub.s32 0, %v1586
        %v1588 = vrot.slane %v1563, %v1587
        %v1590 = vadd.f32 %v1583, %v1588
        %1591 = vst.msk [vmem:[%s755] sm:$0xff] %vm782, %v1590
        %s1592 = sand.u32 %s395, 1
        %s1593 = scalar_lea.sflag [#allocation5], %s1592
        %s1594 = sand.u32 %s395, 1
        %s1595 = smul.addr %s1594, 8
        %s1596 = scalar_lea.vmem [#allocation27], %s1595
        // Predicated region
        $region141: #{tpu_custom_call.1} parent=79 // pred_check
          %p1597 = pneg %p405
        $region142: #{tpu_custom_call.1} parent=79 // pred_check_branch
          %1599 = sbr.rel (%p1597) target = $region144
        $region143: #{tpu_custom_call.1} parent=79 // pred_region
          %s1601 = ssub.s32 128, 128
          %1602 = vsyncadd %s1593, %s1601
          %s1603 = sadd.s32 %s46, %s45
          %s1604 = smul.addr %s1603, 128
          %s1605 = scalar_lea.hbm %s15, %s1604
          %s1607 = sshll.u32 %s1596, 4
          %s1608 = int_to_ptr.vmem [resolvable:$true] %s1607
          %1610 = dma.vmem_to_hbm [thread:$0]  %s1608, 128, %s1605, %s1593
        $region144: #{tpu_custom_call.1} parent=79 // pred_fallthru
          _
      $region80: #{tpu_custom_call.1} parent=5 // pred_fallthru
        _
      %p1611 = scmp.le.s32.totalorder 2, %s36
      // Predicated region
      $region145: #{tpu_custom_call.1} parent=5 // pred_check
        %p1612 = pneg %p1611
      $region146: #{tpu_custom_call.1} parent=5 // pred_check_branch
        %1614 = sbr.rel (%p1612) target = $region148
      $region147: #{tpu_custom_call.1} parent=5 // pred_region
        %s1615 = ssub.s32 %s36, 2
        // Predicated region
        $region149: #{tpu_custom_call.1} parent=147 // pred_check
          %p1616 = pneg %p411
        $region150: #{tpu_custom_call.1} parent=147 // pred_check_branch
          %1618 = sbr.rel (%p1616) target = $region152
        $region151: #{tpu_custom_call.1} parent=147 // pred_region
          %s1619 = sand.u32 %s396, 1
          %s1620 = scalar_lea.sflag [#allocation5], %s1619
          %s1621 = sand.u32 %s396, 1
          %s1622 = smul.addr %s1621, 8
          %s1623 = scalar_lea.vmem [#allocation27], %s1622
          %1624 = dma.done %s1620, 128
        $region152: #{tpu_custom_call.1} parent=147 // pred_fallthru
          _
      $region148: #{tpu_custom_call.1} parent=5 // pred_fallthru
        _
    $region6: #{tpu_custom_call.1} parent=1 // loop_footer
      %s40 = sadd.s32 1, %s36
    $region7: #{tpu_custom_call.1} parent=1 // loop_footer_branch
      %35 = sbr.rel target = $region3
    $region8: #{tpu_custom_call.1} parent=1 // loop_exit
      _
    %1625 = vsyncpa [#allocation4], 1
    %s1626 = scalar_lea.sflag [#allocation4], 1
    %1627 = vsyncpa %s1626, 1
    %1628 = vsyncpa [#allocation7], 1
    %s1629 = scalar_lea.sflag [#allocation7], 1
    %1630 = vsyncpa %s1629, 1
    %1631 = vsyncpa [#allocation10], 1
    %1632 = vsyncpa [#allocation13], 1
    %1633 = vsyncpa [#allocation16], 1
    %1634 = vsyncpa [#allocation19], 1
    %1635 = vsyncpa [#allocation22], 1
    %1636 = vsyncpa [#allocation25], 1
    %1637 = vsyncpa [#allocation5], 1
    %s1638 = scalar_lea.sflag [#allocation5], 1
    %1639 = vsyncpa %s1638, 1

// kernel: tpu_custom_call.1
$region0: #{tpu_custom_call.1}
  #allocation0 [shape = 'u32[]', space=smem, size = 0x4, offset = 0x4, fixed_abs, tag = 'smem constant byte address 0x4 - core index']
  #allocation1 [shape = 'u32[144,128]{1,0:T(1,128)}', space=vmem, size = 0x12000, scoped, tag = 'internal scratch']
  #allocation2 [shape = 'bf16[8,32]{1,0:T(8,128)(2,1)}', space=vmem, size = 0x800, scoped, tag = 'scratch operand']
  %s0 = inlined_call_operand.hbm [shape: f32[2,8,32], index: 0, kind: input, shape index: {}]
  %s1 = inlined_call_operand.hbm [shape: bf16[2,8,32], index: 1, kind: input, shape index: {}]
  %s2 = inlined_call_operand.hbm [shape: bf16[2,8,32], index: 2, kind: input, shape index: {}]
  %s3 = inlined_call_operand.hbm [shape: bf16[32,32], index: 3, kind: input, shape index: {}]
  %s4 = inlined_call_operand.hbm [shape: f32[1,32], index: 4, kind: input, shape index: {}]
  %s5 = inlined_call_operand.hbm [shape: bf16[32,32], index: 5, kind: input, shape index: {}]
  %s6 = inlined_call_operand.hbm [shape: f32[1,32], index: 6, kind: input, shape index: {}]
  %s7 = inlined_call_operand.hbm [shape: f32[1,32], index: 7, kind: input, shape index: {}]
  %s8 = inlined_call_operand.hbm [shape: f32[1,32], index: 8, kind: input, shape index: {}]
  %s9 = inlined_call_operand.hbm [shape: f32[1,32], index: 9, kind: input, shape index: {}]
  %s10 = inlined_call_operand.hbm [shape: f32[1,32], index: 10, kind: input, shape index: {}]
  %s11 = inlined_call_operand.hbm [shape: bf16[32,64], index: 11, kind: input, shape index: {}]
  %s12 = inlined_call_operand.hbm [shape: f32[1,64], index: 12, kind: input, shape index: {}]
  %s13 = inlined_call_operand.hbm [shape: bf16[64,32], index: 13, kind: input, shape index: {}]
  %s14 = inlined_call_operand.hbm [shape: f32[1,32], index: 14, kind: input, shape index: {}]
  %s15 = inlined_call_operand.hbm [shape: f32[2,8,32], index: 15, kind: output, shape index: {}]
  %s16 = sld [smem:[#allocation0]]
  $region153: #{tpu_custom_call.1} parent=0
    _
  %s18 = ssub.s32 1, %s16
  %s19 = scalar_select 0, %s18, %s16
  $region1: #{tpu_custom_call.1} parent=0
    #allocation3 [shape = 'u8[8192]{0}', space=vmem, size = 0x2000, scoped, tag = 'input window, operand 0']
    #allocation4 [shape = 's32[2]{0}', space=sflag, size = 0x8, scoped, tag = 'scoped memory for tpu_custom_call.1']
    #allocation5 [shape = 's32[2]{0}', space=sflag, size = 0x8, scoped, tag = 'scoped memory for tpu_custom_call.1']
    #allocation6 [shape = 'u8[4096]{0}', space=vmem, size = 0x1000, scoped, tag = 'input window, operand 1']
    #allocation7 [shape = 's32[2]{0}', space=sflag, size = 0x8, scoped, tag = 'scoped memory for tpu_custom_call.1']
    #allocation8 [shape = 'u8[4096]{0}', space=vmem, size = 0x1000, scoped, tag = 'input window, operand 2']
    #allocation9 [shape = 'u8[8192]{0}', space=vmem, size = 0x2000, scoped, tag = 'input window, operand 3, single buffered']
    #allocation10 [shape = 's32[1]{0}', space=sflag, size = 0x4, scoped, tag = 'scoped memory for tpu_custom_call.1']
    #allocation11 [shape = 'u8[512]{0}', space=vmem, size = 0x400, scoped, tag = 'input window, operand 4, single buffered']
    #allocation12 [shape = 'u8[8192]{0}', space=vmem, size = 0x2000, scoped, tag = 'input window, operand 5, single buffered']
    #allocation13 [shape = 's32[1]{0}', space=sflag, size = 0x4, scoped, tag = 'scoped memory for tpu_custom_call.1']
    #allocation14 [shape = 'u8[512]{0}', space=vmem, size = 0x400, scoped, tag = 'input window, operand 6, single buffered']
    #allocation15 [shape = 'u8[512]{0}', space=vmem, size = 0x400, scoped, tag = 'input window, operand 7, single buffered']
    #allocation16 [shape = 's32[1]{0}', space=sflag, size = 0x4, scoped, tag = 'scoped memory for tpu_custom_call.1']
    #allocation17 [shape = 'u8[512]{0}', space=vmem, size = 0x400, scoped, tag = 'input window, operand 8, single buffered']
    #allocation18 [shape = 'u8[512]{0}', space=vmem, size = 0x400, scoped, tag = 'input window, operand 9, single buffered']
    #allocation19 [shape = 's32[1]{0}', space=sflag, size = 0x4, scoped, tag = 'scoped memory for tpu_custom_call.1']
    #allocation20 [shape = 'u8[512]{0}', space=vmem, size = 0x400, scoped, tag = 'input window, operand 10, single buffered']
    #allocation21 [shape = 'u8[8192]{0}', space=vmem, size = 0x2000, scoped, tag = 'input window, operand 11, single buffered']
    #allocation22 [shape = 's32[1]{0}', space=sflag, size = 0x4, scoped, tag = 'scoped memory for tpu_custom_call.1']
    #allocation23 [shape = 'u8[512]{0}', space=vmem, size = 0x400, scoped, tag = 'input window, operand 12, single buffered']
    #allocation24 [shape = 'u8[16384]{0}', space=vmem, size = 0x4000, scoped, tag = 'input window, operand 13, single buffered']
    #allocation25 [shape = 's32[1]{0}', space=sflag, size = 0x4, scoped, tag = 'scoped memory for tpu_custom_call.1']
    #allocation26 [shape = 'u8[512]{0}', space=vmem, size = 0x400, scoped, tag = 'input window, operand 14, single buffered']
    #allocation27 [shape = 'u8[8192]{0}', space=vmem, size = 0x2000, scoped, tag = 'output window, operand 0']
    %20 = vsyncpa [#allocation4], 0
    %s21 = scalar_lea.sflag [#allocation4], 1
    %22 = vsyncpa %s21, 0
    %23 = vsyncpa [#allocation7], 0
    %s24 = scalar_lea.sflag [#allocation7], 1
    %25 = vsyncpa %s24, 0
    %26 = vsyncpa [#allocation10], 0
    %27 = vsyncpa [#allocation13], 0
    %28 = vsyncpa [#allocation16], 0
    %29 = vsyncpa [#allocation19], 0
    %30 = vsyncpa [#allocation22], 0
    %31 = vsyncpa [#allocation25], 0
    %32 = vsyncpa [#allocation5], 0
    %s33 = scalar_lea.sflag [#allocation5], 1
    %34 = vsyncpa %s33, 0
    loop: start=0, step=1, limit=4
    $region2: #{tpu_custom_call.1} parent=1 // loop_pre_header
      _
    $region3: #{tpu_custom_call.1} parent=1 // loop_header
      %s36 = sphi 0, %s40
      %p37 = scmp.ge.s32.totalorder %s36, 4
      %s43 = sphi 0, %s55
      %s44 = sphi 0, %s51
      %s45 = sphi 0, %s43
      %s46 = sphi 0, %s44
      %s47 = sphi 0, %s45
      %s48 = sphi 0, %s46
      %s60 = sphi 0, %s62
      %s63 = sphi 0, %s60
      %s64 = sphi 0, %s63
      %s80 = sphi 0, %s64
      %s86 = sphi 0, %s88
      %s89 = sphi 0, %s86
      %s90 = sphi 0, %s89
      %s106 = sphi 0, %s90
      %s112 = sphi 0, %s114
      %s115 = sphi 0, %s112
      %s116 = sphi 0, %s115
      %s132 = sphi 0, %s116
      %s136 = sphi 0, %s136
      %s138 = sphi 0, %s136
      %s139 = sphi 0, %s138
      %s153 = sphi 0, %s139
      %s157 = sphi 0, %s157
      %s159 = sphi 0, %s157
      %s160 = sphi 0, %s159
      %s174 = sphi 0, %s160
      %s178 = sphi 0, %s178
      %s180 = sphi 0, %s178
      %s181 = sphi 0, %s180
      %s195 = sphi 0, %s181
      %s199 = sphi 0, %s199
      %s201 = sphi 0, %s199
      %s202 = sphi 0, %s201
      %s216 = sphi 0, %s202
      %s220 = sphi 0, %s220
      %s222 = sphi 0, %s220
      %s223 = sphi 0, %s222
      %s237 = sphi 0, %s223
      %s241 = sphi 0, %s241
      %s243 = sphi 0, %s241
      %s244 = sphi 0, %s243
      %s258 = sphi 0, %s244
      %s262 = sphi 0, %s262
      %s264 = sphi 0, %s262
      %s265 = sphi 0, %s264
      %s279 = sphi 0, %s265
      %s283 = sphi 0, %s283
      %s285 = sphi 0, %s283
      %s286 = sphi 0, %s285
      %s300 = sphi 0, %s286
      %s304 = sphi 0, %s304
      %s306 = sphi 0, %s304
      %s307 = sphi 0, %s306
      %s321 = sphi 0, %s307
      %s325 = sphi 0, %s325
      %s327 = sphi 0, %s325
      %s328 = sphi 0, %s327
      %s342 = sphi 0, %s328
      %s346 = sphi 0, %s346
      %s348 = sphi 0, %s346
      %s349 = sphi 0, %s348
      %s363 = sphi 0, %s349
      %s367 = sphi 0, %s367
      %s369 = sphi 0, %s367
      %s370 = sphi 0, %s369
      %s384 = sphi 0, %s370
      %s392 = sphi 0, %s394
      %s395 = sphi 0, %s392
      %s396 = sphi 0, %s395
      %s412 = sphi 0, %s396
    $region4: #{tpu_custom_call.1} parent=1 // loop_header_branch
      %39 = sbr.rel (%p37) target = $region8
    $region5: #{tpu_custom_call.1} parent=1 // loop_body
      %s41 = ssub.s32 %s36, 1
      %s42 = ssub.s32 %s36, 2
      %s49 = sadd.s32 1, %s44
      %p50 = scmp.ge.s32.totalorder %s49, 1
      %s51 = scalar_select %p50, 0, %s49
      %s52 = sadd.s32 1, %s43
      %s53 = scalar_select %p50, %s52, %s43
      %p54 = scmp.ge.s32.totalorder %s53, 2
      %s55 = scalar_select %p54, 0, %s53
      %s56 = ssub.s32 %s43, %s55
      %s57 = ssub.s32 %s44, %s51
      %s58 = sor.u32 %s56, %s57
      %p59 = scmp.eq.s32.totalorder %s58, 0
      %s61 = sadd.s32 %s60, 1
      %s62 = scalar_select %p59, %s60, %s61
      %p65 = pneg %p59
      %p66 = scmp.eq.s32.totalorder %s36, 1
      %p67 = por %p65, %p66
      %p68 = scmp.ne.s32.totalorder %s60, %s63
      %p69 = scmp.eq.s32.totalorder %s36, 0
      %p70 = por %p68, %p69
      %p71 = scmp.ne.s32.totalorder %s60, %s63
      %p72 = scmp.eq.s32.totalorder %s41, 1
      %p73 = por %p71, %p72
      %p74 = scmp.ne.s32.totalorder %s63, %s64
      %p75 = scmp.eq.s32.totalorder %s41, 0
      %p76 = por %p74, %p75
      %p77 = scmp.ne.s32.totalorder %s63, %s64
      %p78 = scmp.eq.s32.totalorder %s42, 1
      %p79 = por %p77, %p78
      %p81 = scmp.ne.s32.totalorder %s64, %s80
      %p82 = scmp.eq.s32.totalorder %s42, 0
      %p83 = por %p81, %p82
      %s84 = ssub.s32 %s43, %s55
      %p85 = scmp.eq.s32.totalorder %s84, 0
      %s87 = sadd.s32 %s86, 1
      %s88 = scalar_select %p85, %s86, %s87
      %p91 = pneg %p85
      %p92 = scmp.eq.s32.totalorder %s36, 1
      %p93 = por %p91, %p92
      %p94 = scmp.ne.s32.totalorder %s86, %s89
      %p95 = scmp.eq.s32.totalorder %s36, 0
      %p96 = por %p94, %p95
      %p97 = scmp.ne.s32.totalorder %s86, %s89
      %p98 = scmp.eq.s32.totalorder %s41, 1
      %p99 = por %p97, %p98
      %p100 = scmp.ne.s32.totalorder %s89, %s90
      %p101 = scmp.eq.s32.totalorder %s41, 0
      %p102 = por %p100, %p101
      %p103 = scmp.ne.s32.totalorder %s89, %s90
      %p104 = scmp.eq.s32.totalorder %s42, 1
      %p105 = por %p103, %p104
      %p107 = scmp.ne.s32.totalorder %s90, %s106
      %p108 = scmp.eq.s32.totalorder %s42, 0
      %p109 = por %p107, %p108
      %s110 = ssub.s32 %s43, %s55
      %p111 = scmp.eq.s32.totalorder %s110, 0
      %s113 = sadd.s32 %s112, 1
      %s114 = scalar_select %p111, %s112, %s113
      %p117 = pneg %p111
      %p118 = scmp.eq.s32.totalorder %s36, 1
      %p119 = por %p117, %p118
      %p120 = scmp.ne.s32.totalorder %s112, %s115
      %p121 = scmp.eq.s32.totalorder %s36, 0
      %p122 = por %p120, %p121
      %p123 = scmp.ne.s32.totalorder %s112, %s115
      %p124 = scmp.eq.s32.totalorder %s41, 1
      %p125 = por %p123, %p124
      %p126 = scmp.ne.s32.totalorder %s115, %s116
      %p127 = scmp.eq.s32.totalorder %s41, 0
      %p128 = por %p126, %p127
      %p129 = scmp.ne.s32.totalorder %s115, %s116
      %p130 = scmp.eq.s32.totalorder %s42, 1
      %p131 = por %p129, %p130
      %p133 = scmp.ne.s32.totalorder %s116, %s132
      %p134 = scmp.eq.s32.totalorder %s42, 0
      %p135 = por %p133, %p134
      %s137 = sadd.s32 %s136, 1
      %p140 = scmp.eq.s32.totalorder %s36, 1
      %p141 = scmp.ne.s32.totalorder %s136, %s138
      %p142 = scmp.eq.s32.totalorder %s36, 0
      %p143 = por %p141, %p142
      %p144 = scmp.ne.s32.totalorder %s136, %s138
      %p145 = scmp.eq.s32.totalorder %s41, 1
      %p146 = por %p144, %p145
      %p147 = scmp.ne.s32.totalorder %s138, %s139
      %p148 = scmp.eq.s32.totalorder %s41, 0
      %p149 = por %p147, %p148
      %p150 = scmp.ne.s32.totalorder %s138, %s139
      %p151 = scmp.eq.s32.totalorder %s42, 1
      %p152 = por %p150, %p151
      %p154 = scmp.ne.s32.totalorder %s139, %s153
      %p155 = scmp.eq.s32.totalorder %s42, 0
      %p156 = por %p154, %p155
      %s158 = sadd.s32 %s157, 1
      %p161 = scmp.eq.s32.totalorder %s36, 1
      %p162 = scmp.ne.s32.totalorder %s157, %s159
      %p163 = scmp.eq.s32.totalorder %s36, 0
      %p164 = por %p162, %p163
      %p165 = scmp.ne.s32.totalorder %s157, %s159
      %p166 = scmp.eq.s32.totalorder %s41, 1
      %p167 = por %p165, %p166
      %p168 = scmp.ne.s32.totalorder %s159, %s160
      %p169 = scmp.eq.s32.totalorder %s41, 0
      %p170 = por %p168, %p169
      %p171 = scmp.ne.s32.totalorder %s159, %s160
      %p172 = scmp.eq.s32.totalorder %s42, 1
      %p173 = por %p171, %p172
      %p175 = scmp.ne.s32.totalorder %s160, %s174
      %p176 = scmp.eq.s32.totalorder %s42, 0
      %p177 = por %p175, %p176
      %s179 = sadd.s32 %s178, 1
      %p182 = scmp.eq.s32.totalorder %s36, 1
      %p183 = scmp.ne.s32.totalorder %s178, %s180
      %p184 = scmp.eq.s32.totalorder %s36, 0
      %p185 = por %p183, %p184
      %p186 = scmp.ne.s32.totalorder %s178, %s180
      %p187 = scmp.eq.s32.totalorder %s41, 1
      %p188 = por %p186, %p187
      %p189 = scmp.ne.s32.totalorder %s180, %s181
      %p190 = scmp.eq.s32.totalorder %s41, 0
      %p191 = por %p189, %p190
      %p192 = scmp.ne.s32.totalorder %s180, %s181
      %p193 = scmp.eq.s32.totalorder %s42, 1
      %p194 = por %p192, %p193
      %p196 = scmp.ne.s32.totalorder %s181, %s195
      %p197 = scmp.eq.s32.totalorder %s42, 0
      %p198 = por %p196, %p197
      %s200 = sadd.s32 %s199, 1
      %p203 = scmp.eq.s32.totalorder %s36, 1
      %p204 = scmp.ne.s32.totalorder %s199, %s201
      %p205 = scmp.eq.s32.totalorder %s36, 0
      %p206 = por %p204, %p205
      %p207 = scmp.ne.s32.totalorder %s199, %s201
      %p208 = scmp.eq.s32.totalorder %s41, 1
      %p209 = por %p207, %p208
      %p210 = scmp.ne.s32.totalorder %s201, %s202
      %p211 = scmp.eq.s32.totalorder %s41, 0
      %p212 = por %p210, %p211
      %p213 = scmp.ne.s32.totalorder %s201, %s202
      %p214 = scmp.eq.s32.totalorder %s42, 1
      %p215 = por %p213, %p214
      %p217 = scmp.ne.s32.totalorder %s202, %s216
      %p218 = scmp.eq.s32.totalorder %s42, 0
      %p219 = por %p217, %p218
      %s221 = sadd.s32 %s220, 1
      %p224 = scmp.eq.s32.totalorder %s36, 1
      %p225 = scmp.ne.s32.totalorder %s220, %s222
      %p226 = scmp.eq.s32.totalorder %s36, 0
      %p227 = por %p225, %p226
      %p228 = scmp.ne.s32.totalorder %s220, %s222
      %p229 = scmp.eq.s32.totalorder %s41, 1
      %p230 = por %p228, %p229
      %p231 = scmp.ne.s32.totalorder %s222, %s223
      %p232 = scmp.eq.s32.totalorder %s41, 0
      %p233 = por %p231, %p232
      %p234 = scmp.ne.s32.totalorder %s222, %s223
      %p235 = scmp.eq.s32.totalorder %s42, 1
      %p236 = por %p234, %p235
      %p238 = scmp.ne.s32.totalorder %s223, %s237
      %p239 = scmp.eq.s32.totalorder %s42, 0
      %p240 = por %p238, %p239
      %s242 = sadd.s32 %s241, 1
      %p245 = scmp.eq.s32.totalorder %s36, 1
      %p246 = scmp.ne.s32.totalorder %s241, %s243
      %p247 = scmp.eq.s32.totalorder %s36, 0
      %p248 = por %p246, %p247
      %p249 = scmp.ne.s32.totalorder %s241, %s243
      %p250 = scmp.eq.s32.totalorder %s41, 1
      %p251 = por %p249, %p250
      %p252 = scmp.ne.s32.totalorder %s243, %s244
      %p253 = scmp.eq.s32.totalorder %s41, 0
      %p254 = por %p252, %p253
      %p255 = scmp.ne.s32.totalorder %s243, %s244
      %p256 = scmp.eq.s32.totalorder %s42, 1
      %p257 = por %p255, %p256
      %p259 = scmp.ne.s32.totalorder %s244, %s258
      %p260 = scmp.eq.s32.totalorder %s42, 0
      %p261 = por %p259, %p260
      %s263 = sadd.s32 %s262, 1
      %p266 = scmp.eq.s32.totalorder %s36, 1
      %p267 = scmp.ne.s32.totalorder %s262, %s264
      %p268 = scmp.eq.s32.totalorder %s36, 0
      %p269 = por %p267, %p268
      %p270 = scmp.ne.s32.totalorder %s262, %s264
      %p271 = scmp.eq.s32.totalorder %s41, 1
      %p272 = por %p270, %p271
      %p273 = scmp.ne.s32.totalorder %s264, %s265
      %p274 = scmp.eq.s32.totalorder %s41, 0
      %p275 = por %p273, %p274
      %p276 = scmp.ne.s32.totalorder %s264, %s265
      %p277 = scmp.eq.s32.totalorder %s42, 1
      %p278 = por %p276, %p277
      %p280 = scmp.ne.s32.totalorder %s265, %s279
      %p281 = scmp.eq.s32.totalorder %s42, 0
      %p282 = por %p280, %p281
      %s284 = sadd.s32 %s283, 1
      %p287 = scmp.eq.s32.totalorder %s36, 1
      %p288 = scmp.ne.s32.totalorder %s283, %s285
      %p289 = scmp.eq.s32.totalorder %s36, 0
      %p290 = por %p288, %p289
      %p291 = scmp.ne.s32.totalorder %s283, %s285
      %p292 = scmp.eq.s32.totalorder %s41, 1
      %p293 = por %p291, %p292
      %p294 = scmp.ne.s32.totalorder %s285, %s286
      %p295 = scmp.eq.s32.totalorder %s41, 0
      %p296 = por %p294, %p295
      %p297 = scmp.ne.s32.totalorder %s285, %s286
      %p298 = scmp.eq.s32.totalorder %s42, 1
      %p299 = por %p297, %p298
      %p301 = scmp.ne.s32.totalorder %s286, %s300
      %p302 = scmp.eq.s32.totalorder %s42, 0
      %p303 = por %p301, %p302
      %s305 = sadd.s32 %s304, 1
      %p308 = scmp.eq.s32.totalorder %s36, 1
      %p309 = scmp.ne.s32.totalorder %s304, %s306
      %p310 = scmp.eq.s32.totalorder %s36, 0
      %p311 = por %p309, %p310
      %p312 = scmp.ne.s32.totalorder %s304, %s306
      %p313 = scmp.eq.s32.totalorder %s41, 1
      %p314 = por %p312, %p313
      %p315 = scmp.ne.s32.totalorder %s306, %s307
      %p316 = scmp.eq.s32.totalorder %s41, 0
      %p317 = por %p315, %p316
      %p318 = scmp.ne.s32.totalorder %s306, %s307
      %p319 = scmp.eq.s32.totalorder %s42, 1
      %p320 = por %p318, %p319
      %p322 = scmp.ne.s32.totalorder %s307, %s321
      %p323 = scmp.eq.s32.totalorder %s42, 0
      %p324 = por %p322, %p323
      %s326 = sadd.s32 %s325, 1
      %p329 = scmp.eq.s32.totalorder %s36, 1
      %p330 = scmp.ne.s32.totalorder %s325, %s327
      %p331 = scmp.eq.s32.totalorder %s36, 0
      %p332 = por %p330, %p331
      %p333 = scmp.ne.s32.totalorder %s325, %s327
      %p334 = scmp.eq.s32.totalorder %s41, 1
      %p335 = por %p333, %p334
      %p336 = scmp.ne.s32.totalorder %s327, %s328
      %p337 = scmp.eq.s32.totalorder %s41, 0
      %p338 = por %p336, %p337
      %p339 = scmp.ne.s32.totalorder %s327, %s328
      %p340 = scmp.eq.s32.totalorder %s42, 1
      %p341 = por %p339, %p340
      %p343 = scmp.ne.s32.totalorder %s328, %s342
      %p344 = scmp.eq.s32.totalorder %s42, 0
      %p345 = por %p343, %p344
      %s347 = sadd.s32 %s346, 1
      %p350 = scmp.eq.s32.totalorder %s36, 1
      %p351 = scmp.ne.s32.totalorder %s346, %s348
      %p352 = scmp.eq.s32.totalorder %s36, 0
      %p353 = por %p351, %p352
      %p354 = scmp.ne.s32.totalorder %s346, %s348
      %p355 = scmp.eq.s32.totalorder %s41, 1
      %p356 = por %p354, %p355
      %p357 = scmp.ne.s32.totalorder %s348, %s349
      %p358 = scmp.eq.s32.totalorder %s41, 0
      %p359 = por %p357, %p358
      %p360 = scmp.ne.s32.totalorder %s348, %s349
      %p361 = scmp.eq.s32.totalorder %s42, 1
      %p362 = por %p360, %p361
      %p364 = scmp.ne.s32.totalorder %s349, %s363
      %p365 = scmp.eq.s32.totalorder %s42, 0
      %p366 = por %p364, %p365
      %s368 = sadd.s32 %s367, 1
      %p371 = scmp.eq.s32.totalorder %s36, 1
      %p372 = scmp.ne.s32.totalorder %s367, %s369
      %p373 = scmp.eq.s32.totalorder %s36, 0
      %p374 = por %p372, %p373
      %p375 = scmp.ne.s32.totalorder %s367, %s369
      %p376 = scmp.eq.s32.totalorder %s41, 1
      %p377 = por %p375, %p376
      %p378 = scmp.ne.s32.totalorder %s369, %s370
      %p379 = scmp.eq.s32.totalorder %s41, 0
      %p380 = por %p378, %p379
      %p381 = scmp.ne.s32.totalorder %s369, %s370
      %p382 = scmp.eq.s32.totalorder %s42, 1
      %p383 = por %p381, %p382
      %p385 = scmp.ne.s32.totalorder %s370, %s384
      %p386 = scmp.eq.s32.totalorder %s42, 0
      %p387 = por %p385, %p386
      %s388 = ssub.s32 %s43, %s55
      %s389 = ssub.s32 %s44, %s51
      %s390 = sor.u32 %s388, %s389
      %p391 = scmp.eq.s32.totalorder %s390, 0
      %s393 = sadd.s32 %s392, 1
      %s394 = scalar_select %p391, %s392, %s393
      %p397 = pneg %p391
      %p398 = scmp.eq.s32.totalorder %s36, 1
      %p399 = por %p397, %p398
      %p400 = scmp.ne.s32.totalorder %s392, %s395
      %p401 = scmp.eq.s32.totalorder %s36, 0
      %p402 = por %p400, %p401
      %p403 = scmp.ne.s32.totalorder %s392, %s395
      %p404 = scmp.eq.s32.totalorder %s41, 1
      %p405 = por %p403, %p404
      %p406 = scmp.ne.s32.totalorder %s395, %s396
      %p407 = scmp.eq.s32.totalorder %s41, 0
      %p408 = por %p406, %p407
      %p409 = scmp.ne.s32.totalorder %s395, %s396
      %p410 = scmp.eq.s32.totalorder %s42, 1
      %p411 = por %p409, %p410
      %p413 = scmp.ne.s32.totalorder %s396, %s412
      %p414 = scmp.eq.s32.totalorder %s42, 0
      %p415 = por %p413, %p414
      %p416 = scmp.le.s32.totalorder 1, %s36
      %p417 = scmp.lt.s32.totalorder %s36, 3
      %p418 = pnand %p416, %p417
      %p419 = pneg %p418
      // Predicated region
      $region9: #{tpu_custom_call.1} parent=5 // pred_check
        _
      $region10: #{tpu_custom_call.1} parent=5 // pred_check_branch
        %421 = sbr.rel (%p418) target = $region12
      $region11: #{tpu_custom_call.1} parent=5 // pred_region
        %s422 = ssub.s32 %s36, 1
        // Predicated region
        $region13: #{tpu_custom_call.1} parent=11 // pred_check
          %p423 = pneg %p149
        $region14: #{tpu_custom_call.1} parent=11 // pred_check_branch
          %425 = sbr.rel (%p423) target = $region16
        $region15: #{tpu_custom_call.1} parent=11 // pred_region
          %s427 = ssub.s32 256, 256
          %428 = vsyncadd [#allocation10], %s427
          %s429 = sshll.u32 [#allocation9], 4
          %s430 = int_to_ptr.vmem [resolvable:$true] %s429
          %435 = dma.hbm_to_vmem [thread:$0]  %s3, 256, %s430, [#allocation10], 64, 64, 4
        $region16: #{tpu_custom_call.1} parent=11 // pred_fallthru
          _
        // Predicated region
        $region17: #{tpu_custom_call.1} parent=11 // pred_check
          %p436 = pneg %p170
        $region18: #{tpu_custom_call.1} parent=11 // pred_check_branch
          %438 = sbr.rel (%p436) target = $region20
        $region19: #{tpu_custom_call.1} parent=11 // pred_region
          %s440 = ssub.s32 16, 16
          %441 = vsyncadd [#allocation10], %s440
          %s443 = sshll.u32 [#allocation11], 4
          %s444 = int_to_ptr.vmem [resolvable:$true] %s443
          %446 = dma.hbm_to_vmem [thread:$0]  %s4, 16, %s444, [#allocation10]
        $region20: #{tpu_custom_call.1} parent=11 // pred_fallthru
          _
        // Predicated region
        $region21: #{tpu_custom_call.1} parent=11 // pred_check
          %p447 = pneg %p191
        $region22: #{tpu_custom_call.1} parent=11 // pred_check_branch
          %449 = sbr.rel (%p447) target = $region24
        $region23: #{tpu_custom_call.1} parent=11 // pred_region
          %s451 = ssub.s32 256, 256
          %452 = vsyncadd [#allocation13], %s451
          %s453 = sshll.u32 [#allocation12], 4
          %s454 = int_to_ptr.vmem [resolvable:$true] %s453
          %459 = dma.hbm_to_vmem [thread:$0]  %s5, 256, %s454, [#allocation13], 64, 64, 4
        $region24: #{tpu_custom_call.1} parent=11 // pred_fallthru
          _
        // Predicated region
        $region25: #{tpu_custom_call.1} parent=11 // pred_check
          %p460 = pneg %p212
        $region26: #{tpu_custom_call.1} parent=11 // pred_check_branch
          %462 = sbr.rel (%p460) target = $region28
        $region27: #{tpu_custom_call.1} parent=11 // pred_region
          %s464 = ssub.s32 16, 16
          %465 = vsyncadd [#allocation13], %s464
          %s467 = sshll.u32 [#allocation14], 4
          %s468 = int_to_ptr.vmem [resolvable:$true] %s467
          %470 = dma.hbm_to_vmem [thread:$0]  %s6, 16, %s468, [#allocation13]
        $region28: #{tpu_custom_call.1} parent=11 // pred_fallthru
          _
        // Predicated region
        $region29: #{tpu_custom_call.1} parent=11 // pred_check
          %p471 = pneg %p233
        $region30: #{tpu_custom_call.1} parent=11 // pred_check_branch
          %473 = sbr.rel (%p471) target = $region32
        $region31: #{tpu_custom_call.1} parent=11 // pred_region
          %s475 = ssub.s32 16, 16
          %476 = vsyncadd [#allocation16], %s475
          %s478 = sshll.u32 [#allocation15], 4
          %s479 = int_to_ptr.vmem [resolvable:$true] %s478
          %481 = dma.hbm_to_vmem [thread:$0]  %s7, 16, %s479, [#allocation16]
        $region32: #{tpu_custom_call.1} parent=11 // pred_fallthru
          _
        // Predicated region
        $region33: #{tpu_custom_call.1} parent=11 // pred_check
          %p482 = pneg %p254
        $region34: #{tpu_custom_call.1} parent=11 // pred_check_branch
          %484 = sbr.rel (%p482) target = $region36
        $region35: #{tpu_custom_call.1} parent=11 // pred_region
          %s486 = ssub.s32 16, 16
          %487 = vsyncadd [#allocation16], %s486
          %s489 = sshll.u32 [#allocation17], 4
          %s490 = int_to_ptr.vmem [resolvable:$true] %s489
          %492 = dma.hbm_to_vmem [thread:$0]  %s8, 16, %s490, [#allocation16]
        $region36: #{tpu_custom_call.1} parent=11 // pred_fallthru
          _
        // Predicated region
        $region37: #{tpu_custom_call.1} parent=11 // pred_check
          %p493 = pneg %p275
        $region38: #{tpu_custom_call.1} parent=11 // pred_check_branch
          %495 = sbr.rel (%p493) target = $region40
        $region39: #{tpu_custom_call.1} parent=11 // pred_region
          %s497 = ssub.s32 16, 16
          %498 = vsyncadd [#allocation19], %s497
          %s500 = sshll.u32 [#allocation18], 4
          %s501 = int_to_ptr.vmem [resolvable:$true] %s500
          %503 = dma.hbm_to_vmem [thread:$0]  %s9, 16, %s501, [#allocation19]
        $region40: #{tpu_custom_call.1} parent=11 // pred_fallthru
          _
        // Predicated region
        $region41: #{tpu_custom_call.1} parent=11 // pred_check
          %p504 = pneg %p296
        $region42: #{tpu_custom_call.1} parent=11 // pred_check_branch
          %506 = sbr.rel (%p504) target = $region44
        $region43: #{tpu_custom_call.1} parent=11 // pred_region
          %s508 = ssub.s32 16, 16
          %509 = vsyncadd [#allocation19], %s508
          %s511 = sshll.u32 [#allocation20], 4
          %s512 = int_to_ptr.vmem [resolvable:$true] %s511
          %514 = dma.hbm_to_vmem [thread:$0]  %s10, 16, %s512, [#allocation19]
        $region44: #{tpu_custom_call.1} parent=11 // pred_fallthru
          _
        // Predicated region
        $region45: #{tpu_custom_call.1} parent=11 // pred_check
          %p515 = pneg %p317
        $region46: #{tpu_custom_call.1} parent=11 // pred_check_branch
          %517 = sbr.rel (%p515) target = $region48
        $region47: #{tpu_custom_call.1} parent=11 // pred_region
          %s519 = ssub.s32 256, 256
          %520 = vsyncadd [#allocation22], %s519
          %s521 = sshll.u32 [#allocation21], 4
          %s522 = int_to_ptr.vmem [resolvable:$true] %s521
          %527 = dma.hbm_to_vmem [thread:$0]  %s11, 256, %s522, [#allocation22], 64, 64, 4
        $region48: #{tpu_custom_call.1} parent=11 // pred_fallthru
          _
        // Predicated region
        $region49: #{tpu_custom_call.1} parent=11 // pred_check
          %p528 = pneg %p338
        $region50: #{tpu_custom_call.1} parent=11 // pred_check_branch
          %530 = sbr.rel (%p528) target = $region52
        $region51: #{tpu_custom_call.1} parent=11 // pred_region
          %s532 = ssub.s32 16, 16
          %533 = vsyncadd [#allocation22], %s532
          %s535 = sshll.u32 [#allocation23], 4
          %s536 = int_to_ptr.vmem [resolvable:$true] %s535
          %538 = dma.hbm_to_vmem [thread:$0]  %s12, 16, %s536, [#allocation22]
        $region52: #{tpu_custom_call.1} parent=11 // pred_fallthru
          _
        // Predicated region
        $region53: #{tpu_custom_call.1} parent=11 // pred_check
          %p539 = pneg %p359
        $region54: #{tpu_custom_call.1} parent=11 // pred_check_branch
          %541 = sbr.rel (%p539) target = $region56
        $region55: #{tpu_custom_call.1} parent=11 // pred_region
          %s543 = ssub.s32 512, 512
          %544 = vsyncadd [#allocation25], %s543
          %s545 = sshll.u32 [#allocation24], 4
          %s546 = int_to_ptr.vmem [resolvable:$true] %s545
          %551 = dma.hbm_to_vmem [thread:$0]  %s13, 512, %s546, [#allocation25], 64, 64, 4
        $region56: #{tpu_custom_call.1} parent=11 // pred_fallthru
          _
        // Predicated region
        $region57: #{tpu_custom_call.1} parent=11 // pred_check
          %p552 = pneg %p380
        $region58: #{tpu_custom_call.1} parent=11 // pred_check_branch
          %554 = sbr.rel (%p552) target = $region60
        $region59: #{tpu_custom_call.1} parent=11 // pred_region
          %s556 = ssub.s32 16, 16
          %557 = vsyncadd [#allocation25], %s556
          %s559 = sshll.u32 [#allocation26], 4
          %s560 = int_to_ptr.vmem [resolvable:$true] %s559
          %562 = dma.hbm_to_vmem [thread:$0]  %s14, 16, %s560, [#allocation25]
        $region60: #{tpu_custom_call.1} parent=11 // pred_fallthru
          _
      $region12: #{tpu_custom_call.1} parent=5 // pred_fallthru
        _
      %p563 = scmp.lt.s32.totalorder %s36, 2
      // Predicated region
      $region61: #{tpu_custom_call.1} parent=5 // pred_check
        %p564 = pneg %p563
      $region62: #{tpu_custom_call.1} parent=5 // pred_check_branch
        %566 = sbr.rel (%p564) target = $region64
      $region63: #{tpu_custom_call.1} parent=5 // pred_region
        // Predicated region
        $region65: #{tpu_custom_call.1} parent=63 // pred_check
          %p567 = pneg %p70
        $region66: #{tpu_custom_call.1} parent=63 // pred_check_branch
          %569 = sbr.rel (%p567) target = $region68
        $region67: #{tpu_custom_call.1} parent=63 // pred_region
          %s570 = sand.u32 %s60, 1
          %s571 = scalar_lea.sflag [#allocation4], %s570
          %s572 = sand.u32 %s60, 1
          %s573 = smul.addr %s572, 8
          %s574 = scalar_lea.vmem [#allocation3], %s573
          %s576 = ssub.s32 128, 128
          %577 = vsyncadd %s571, %s576
          %s578 = sadd.s32 %s44, %s43
          %s579 = smul.addr %s578, 128
          %s580 = scalar_lea.hbm %s0, %s579
          %s582 = sshll.u32 %s574, 4
          %s583 = int_to_ptr.vmem [resolvable:$true] %s582
          %585 = dma.hbm_to_vmem [thread:$0]  %s580, 128, %s583, %s571
        $region68: #{tpu_custom_call.1} parent=63 // pred_fallthru
          _
        // Predicated region
        $region69: #{tpu_custom_call.1} parent=63 // pred_check
          %p586 = pneg %p96
        $region70: #{tpu_custom_call.1} parent=63 // pred_check_branch
          %588 = sbr.rel (%p586) target = $region72
        $region71: #{tpu_custom_call.1} parent=63 // pred_region
          %s589 = sand.u32 %s36, 1
          %s590 = scalar_lea.sflag [#allocation7], %s589
          %s591 = sand.u32 %s86, 1
          %s592 = smul.addr %s591, 4
          %s593 = scalar_lea.vmem [#allocation6], %s592
          %s595 = ssub.s32 64, 64
          %596 = vsyncadd %s590, %s595
          %s597 = smul.addr %s43, 64
          %s598 = scalar_lea.hbm %s1, %s597
          %s600 = sshll.u32 %s593, 4
          %s601 = int_to_ptr.vmem [resolvable:$true] %s600
          %603 = dma.hbm_to_vmem [thread:$0]  %s598, 64, %s601, %s590
        $region72: #{tpu_custom_call.1} parent=63 // pred_fallthru
          _
        // Predicated region
        $region73: #{tpu_custom_call.1} parent=63 // pred_check
          %p604 = pneg %p122
        $region74: #{tpu_custom_call.1} parent=63 // pred_check_branch
          %606 = sbr.rel (%p604) target = $region76
        $region75: #{tpu_custom_call.1} parent=63 // pred_region
          %s607 = sand.u32 %s36, 1
          %s608 = scalar_lea.sflag [#allocation7], %s607
          %s609 = sand.u32 %s112, 1
          %s610 = smul.addr %s609, 4
          %s611 = scalar_lea.vmem [#allocation8], %s610
          %s613 = ssub.s32 64, 64
          %614 = vsyncadd %s608, %s613
          %s615 = smul.addr %s43, 64
          %s616 = scalar_lea.hbm %s2, %s615
          %s618 = sshll.u32 %s611, 4
          %s619 = int_to_ptr.vmem [resolvable:$true] %s618
          %621 = dma.hbm_to_vmem [thread:$0]  %s616, 64, %s619, %s608
        $region76: #{tpu_custom_call.1} parent=63 // pred_fallthru
          _
      $region64: #{tpu_custom_call.1} parent=5 // pred_fallthru
        _
      %p622 = scmp.le.s32.totalorder 1, %s36
      %p623 = scmp.lt.s32.totalorder %s36, 3
      %p624 = pnand %p622, %p623
      %p625 = pneg %p624
      // Predicated region
      $region77: #{tpu_custom_call.1} parent=5 // pred_check
        _
      $region78: #{tpu_custom_call.1} parent=5 // pred_check_branch
        %627 = sbr.rel (%p624) target = $region80
      $region79: #{tpu_custom_call.1} parent=5 // pred_region
        %s628 = ssub.s32 %s36, 1
        %s629 = sand.u32 %s63, 1
        %s630 = scalar_lea.sflag [#allocation4], %s629
        %s631 = sand.u32 %s63, 1
        %s632 = smul.addr %s631, 8
        %s633 = scalar_lea.vmem [#allocation3], %s632
        // Predicated region
        $region81: #{tpu_custom_call.1} parent=79 // pred_check
          %p634 = pneg %p76
        $region82: #{tpu_custom_call.1} parent=79 // pred_check_branch
          %636 = sbr.rel (%p634) target = $region84
        $region83: #{tpu_custom_call.1} parent=79 // pred_region
          %637 = dma.done %s630, 128
        $region84: #{tpu_custom_call.1} parent=79 // pred_fallthru
          _
        %s638 = sand.u32 %s41, 1
        %s639 = scalar_lea.sflag [#allocation7], %s638
        %s640 = sand.u32 %s89, 1
        %s641 = smul.addr %s640, 4
        %s642 = scalar_lea.vmem [#allocation6], %s641
        // Predicated region
        $region85: #{tpu_custom_call.1} parent=79 // pred_check
          %p643 = pneg %p102
        $region86: #{tpu_custom_call.1} parent=79 // pred_check_branch
          %645 = sbr.rel (%p643) target = $region88
        $region87: #{tpu_custom_call.1} parent=79 // pred_region
          %646 = dma.done %s639, 64
        $region88: #{tpu_custom_call.1} parent=79 // pred_fallthru
          _
        %s647 = sand.u32 %s41, 1
        %s648 = scalar_lea.sflag [#allocation7], %s647
        %s649 = sand.u32 %s115, 1
        %s650 = smul.addr %s649, 4
        %s651 = scalar_lea.vmem [#allocation8], %s650
        // Predicated region
        $region89: #{tpu_custom_call.1} parent=79 // pred_check
          %p652 = pneg %p128
        $region90: #{tpu_custom_call.1} parent=79 // pred_check_branch
          %654 = sbr.rel (%p652) target = $region92
        $region91: #{tpu_custom_call.1} parent=79 // pred_region
          %655 = dma.done %s648, 64
        $region92: #{tpu_custom_call.1} parent=79 // pred_fallthru
          _
        // Predicated region
        $region93: #{tpu_custom_call.1} parent=79 // pred_check
          %p656 = pneg %p149
        $region94: #{tpu_custom_call.1} parent=79 // pred_check_branch
          %658 = sbr.rel (%p656) target = $region96
        $region95: #{tpu_custom_call.1} parent=79 // pred_region
          %659 = dma.done [#allocation10], 256
        $region96: #{tpu_custom_call.1} parent=79 // pred_fallthru
          _
        // Predicated region
        $region97: #{tpu_custom_call.1} parent=79 // pred_check
          %p660 = pneg %p170
        $region98: #{tpu_custom_call.1} parent=79 // pred_check_branch
          %662 = sbr.rel (%p660) target = $region100
        $region99: #{tpu_custom_call.1} parent=79 // pred_region
          %663 = dma.done [#allocation10], 16
        $region100: #{tpu_custom_call.1} parent=79 // pred_fallthru
          _
        // Predicated region
        $region101: #{tpu_custom_call.1} parent=79 // pred_check
          %p664 = pneg %p191
        $region102: #{tpu_custom_call.1} parent=79 // pred_check_branch
          %666 = sbr.rel (%p664) target = $region104
        $region103: #{tpu_custom_call.1} parent=79 // pred_region
          %667 = dma.done [#allocation13], 256
        $region104: #{tpu_custom_call.1} parent=79 // pred_fallthru
          _
        // Predicated region
        $region105: #{tpu_custom_call.1} parent=79 // pred_check
          %p668 = pneg %p212
        $region106: #{tpu_custom_call.1} parent=79 // pred_check_branch
          %670 = sbr.rel (%p668) target = $region108
        $region107: #{tpu_custom_call.1} parent=79 // pred_region
          %671 = dma.done [#allocation13], 16
        $region108: #{tpu_custom_call.1} parent=79 // pred_fallthru
          _
        // Predicated region
        $region109: #{tpu_custom_call.1} parent=79 // pred_check
          %p672 = pneg %p233
        $region110: #{tpu_custom_call.1} parent=79 // pred_check_branch
          %674 = sbr.rel (%p672) target = $region112
        $region111: #{tpu_custom_call.1} parent=79 // pred_region
          %675 = dma.done [#allocation16], 16
        $region112: #{tpu_custom_call.1} parent=79 // pred_fallthru
          _
        // Predicated region
        $region113: #{tpu_custom_call.1} parent=79 // pred_check
          %p676 = pneg %p254
        $region114: #{tpu_custom_call.1} parent=79 // pred_check_branch
          %678 = sbr.rel (%p676) target = $region116
        $region115: #{tpu_custom_call.1} parent=79 // pred_region
          %679 = dma.done [#allocation16], 16
        $region116: #{tpu_custom_call.1} parent=79 // pred_fallthru
          _
        // Predicated region
        $region117: #{tpu_custom_call.1} parent=79 // pred_check
          %p680 = pneg %p275
        $region118: #{tpu_custom_call.1} parent=79 // pred_check_branch
          %682 = sbr.rel (%p680) target = $region120
        $region119: #{tpu_custom_call.1} parent=79 // pred_region
          %683 = dma.done [#allocation19], 16
        $region120: #{tpu_custom_call.1} parent=79 // pred_fallthru
          _
        // Predicated region
        $region121: #{tpu_custom_call.1} parent=79 // pred_check
          %p684 = pneg %p296
        $region122: #{tpu_custom_call.1} parent=79 // pred_check_branch
          %686 = sbr.rel (%p684) target = $region124
        $region123: #{tpu_custom_call.1} parent=79 // pred_region
          %687 = dma.done [#allocation19], 16
        $region124: #{tpu_custom_call.1} parent=79 // pred_fallthru
          _
        // Predicated region
        $region125: #{tpu_custom_call.1} parent=79 // pred_check
          %p688 = pneg %p317
        $region126: #{tpu_custom_call.1} parent=79 // pred_check_branch
          %690 = sbr.rel (%p688) target = $region128
        $region127: #{tpu_custom_call.1} parent=79 // pred_region
          %691 = dma.done [#allocation22], 256
        $region128: #{tpu_custom_call.1} parent=79 // pred_fallthru
          _
        // Predicated region
        $region129: #{tpu_custom_call.1} parent=79 // pred_check
          %p692 = pneg %p338
        $region130: #{tpu_custom_call.1} parent=79 // pred_check_branch
          %694 = sbr.rel (%p692) target = $region132
        $region131: #{tpu_custom_call.1} parent=79 // pred_region
          %695 = dma.done [#allocation22], 16
        $region132: #{tpu_custom_call.1} parent=79 // pred_fallthru
          _
        // Predicated region
        $region133: #{tpu_custom_call.1} parent=79 // pred_check
          %p696 = pneg %p359
        $region134: #{tpu_custom_call.1} parent=79 // pred_check_branch
          %698 = sbr.rel (%p696) target = $region136
        $region135: #{tpu_custom_call.1} parent=79 // pred_region
          %699 = dma.done [#allocation25], 512
        $region136: #{tpu_custom_call.1} parent=79 // pred_fallthru
          _
        // Predicated region
        $region137: #{tpu_custom_call.1} parent=79 // pred_check
          %p700 = pneg %p380
        $region138: #{tpu_custom_call.1} parent=79 // pred_check_branch
          %702 = sbr.rel (%p700) target = $region140
        $region139: #{tpu_custom_call.1} parent=79 // pred_region
          %703 = dma.done [#allocation25], 16
        $region140: #{tpu_custom_call.1} parent=79 // pred_fallthru
          _
        %s704 = sand.u32 %s63, 1
        %s705 = scalar_lea.sflag [#allocation4], %s704
        %s706 = sand.u32 %s63, 1
        %s707 = smul.addr %s706, 8
        %s708 = scalar_lea.vmem [#allocation3], %s707
        %p709 = pneg %p76
        %p710 = pneg %p73
        %s711 = sand.u32 %s41, 1
        %s712 = scalar_lea.sflag [#allocation7], %s711
        %s713 = sand.u32 %s89, 1
        %s714 = smul.addr %s713, 4
        %s715 = scalar_lea.vmem [#allocation6], %s714
        %p716 = pneg %p102
        %p717 = pneg %p99
        %s718 = sand.u32 %s41, 1
        %s719 = scalar_lea.sflag [#allocation7], %s718
        %s720 = sand.u32 %s115, 1
        %s721 = smul.addr %s720, 4
        %s722 = scalar_lea.vmem [#allocation8], %s721
        %p723 = pneg %p128
        %p724 = pneg %p125
        %p725 = pneg %p149
        %p726 = pneg %p146
        %p727 = pneg %p170
        %p728 = pneg %p167
        %p729 = pneg %p191
        %p730 = pneg %p188
        %p731 = pneg %p212
        %p732 = pneg %p209
        %p733 = pneg %p233
        %p734 = pneg %p230
        %p735 = pneg %p254
        %p736 = pneg %p251
        %p737 = pneg %p275
        %p738 = pneg %p272
        %p739 = pneg %p296
        %p740 = pneg %p293
        %p741 = pneg %p317
        %p742 = pneg %p314
        %p743 = pneg %p338
        %p744 = pneg %p335
        %p745 = pneg %p359
        %p746 = pneg %p356
        %p747 = pneg %p380
        %p748 = pneg %p377
        %p749 = pneg %p408
        %p750 = pneg %p405
        %s751 = sand.u32 %s395, 1
        %s752 = scalar_lea.sflag [#allocation5], %s751
        %s753 = sand.u32 %s395, 1
        %s754 = smul.addr %s753, 8
        %s755 = scalar_lea.vmem [#allocation27], %s754
        %v757 = vld [vmem:[%s633] sm:$0xff]
        %v758 = vpack.c.bf16 %v757, %v757
        %v759 = vld [vmem:[#allocation9] sm:$0xf]
        %v760 = vld [vmem:[#allocation9 + $0x4] sm:$0xf]
        %v761 = vld [vmem:[#allocation9 + $0x8] sm:$0xf]
        %v762 = vld [vmem:[#allocation9 + $0xc] sm:$0xf]
        %v763 = vld [vmem:[#allocation11] sm:$0x1]
        %v765 = vlaneseq
        %v766 = vshrl.u32 %v765, 7
        %v767 = vsub.s32 0, %v766
        %v768 = vrot.slane %v763, %v767
        %v774 = vunpack.c.l.b16 %v759
        %v775 = vunpack.c.l.b16 %v760
        %v776 = vunpack.c.l.b16 %v761
        %v777 = vunpack.c.l.b16 %v762
        %v778 = vpack.c.b16 %v775, %v774
        %v779 = vpack.c.b16 %v777, %v776
        %vm782 = vcmask 261120
        %v784 = vsel %vm782, %v758, 0
        %786 = vmatprep.subr.bf16.mxu0 0
        %787 = vmatpush1.bf16.msra.mxu0 %v778
        %788 = vmatprep.subr.bf16.mxu0 0
        %789 = vmatpush1.bf16.msra.mxu0 %v779
        %790 = vmatprep.subr.bf16.mxu0 0
        %791 = vmatpush1.bf16.msra.mxu0 0
        %792 = vmatprep.subr.bf16.mxu0 0
        %793 = vmatpush1.bf16.msra.mxu0 0
        %794 = vmatprep.subr.bf16.mxu0 0
        %795 = vmatpush1.bf16.msra.mxu0 0
        %796 = vmatprep.subr.bf16.mxu0 0
        %797 = vmatpush1.bf16.msra.mxu0 0
        %798 = vmatprep.subr.bf16.mxu0 0
        %799 = vmatpush1.bf16.msra.mxu0 0
        %800 = vmatprep.subr.bf16.mxu0 0
        %801 = vmatpush1.bf16.msra.mxu0 0
        %802 = vmatprep.subr.bf16.mxu0 0
        %803 = vmatpush1.bf16.msra.mxu0 0
        %804 = vmatprep.subr.bf16.mxu0 0
        %805 = vmatpush1.bf16.msra.mxu0 0
        %806 = vmatprep.subr.bf16.mxu0 0
        %807 = vmatpush1.bf16.msra.mxu0 0
        %808 = vmatprep.subr.bf16.mxu0 0
        %809 = vmatpush1.bf16.msra.mxu0 0
        %810 = vmatprep.subr.bf16.mxu0 0
        %811 = vmatpush1.bf16.msra.mxu0 0
        %812 = vmatprep.subr.bf16.mxu0 0
        %813 = vmatpush1.bf16.msra.mxu0 0
        %814 = vmatprep.subr.bf16.mxu0 0
        %815 = vmatpush1.bf16.msra.mxu0 0
        %816 = vmatprep.subr.bf16.mxu0 0
        %817 = vmatpush1.bf16.msra.mxu0 0
        %818 = vmatprep.mubr.bf16.mxu0 0
        %819 = vmatmul.mubr.bf16.gmra.mrb[0].mxu0 %v784
        %v820 = vpop.f32.mrb[0].mxu0
        %v821 = vadd.f32 %v768, %v820
        %v822 = vpop.f32.mrb[0].mxu0
        %v823 = vpop.f32.mrb[0].mxu0
        %v824 = vpop.f32.mrb[0].mxu0
        %825 = vdwg.mxu0
        %v826 = vmul.f32 %v821, 0.35355338
        %v827 = vpack.c.bf16 %v826, %v826
        %v828 = vld [vmem:[%s642] sm:$0xf]
        %v829 = vld [vmem:[%s651] sm:$0xf]
        %vm830 = vcmask 64512
        %v832 = vsel %vm830, %v827, 0
        %v835 = vsel %vm830, %v828, 0
        %837 = vmatprep.subr.bf16.mxu0 0
        %838 = vmatpush1.bf16.xpose.msra.mxu0 %v835
        %839 = vmatprep.subr.bf16.mxu0 0
        %840 = vmatpush1.bf16.xpose.msra.mxu0 0
        %841 = vmatprep.subr.bf16.mxu0 0
        %842 = vmatpush1.bf16.xpose.msra.mxu0 0
        %843 = vmatprep.subr.bf16.mxu0 0
        %844 = vmatpush1.bf16.xpose.msra.mxu0 0
        %845 = vmatprep.subr.bf16.mxu0 0
        %846 = vmatpush1.bf16.xpose.msra.mxu0 0
        %847 = vmatprep.subr.bf16.mxu0 0
        %848 = vmatpush1.bf16.xpose.msra.mxu0 0
        %849 = vmatprep.subr.bf16.mxu0 0
        %850 = vmatpush1.bf16.xpose.msra.mxu0 0
        %851 = vmatprep.subr.bf16.mxu0 0
        %852 = vmatpush1.bf16.xpose.msra.mxu0 0
        %853 = vmatprep.subr.bf16.mxu0 0
        %854 = vmatpush1.bf16.xpose.msra.mxu0 0
        %855 = vmatprep.subr.bf16.mxu0 0
        %856 = vmatpush1.bf16.xpose.msra.mxu0 0
        %857 = vmatprep.subr.bf16.mxu0 0
        %858 = vmatpush1.bf16.xpose.msra.mxu0 0
        %859 = vmatprep.subr.bf16.mxu0 0
        %860 = vmatpush1.bf16.xpose.msra.mxu0 0
        %861 = vmatprep.subr.bf16.mxu0 0
        %862 = vmatpush1.bf16.xpose.msra.mxu0 0
        %863 = vmatprep.subr.bf16.mxu0 0
        %864 = vmatpush1.bf16.xpose.msra.mxu0 0
        %865 = vmatprep.subr.bf16.mxu0 0
        %866 = vmatpush1.bf16.xpose.msra.mxu0 0
        %867 = vmatprep.subr.bf16.mxu0 0
        %868 = vmatpush1.bf16.xpose.msra.mxu0 0
        %869 = vmatprep.mubr.bf16.mxu0 0
        %870 = vmatmul.mubr.bf16.gmra.mrb[0].mxu0 %v832
        %v871 = vpop.f32.mrb[0].mxu0
        %v872 = vadd.f32 0.0, %v871
        %v873 = vpop.f32.mrb[0].mxu0
        %v874 = vpop.f32.mrb[0].mxu0
        %v875 = vpop.f32.mrb[0].mxu0
        %876 = vdwg.mxu0
        %v877 = vsel %vm830, %v872, -inf
        %878 = vmax.xlane.f32.xlu0 %v877
        %v879 = vpop.xlane.xlu0 %878
        %v880 = vsub.f32 %v872, %v879
        %v881 = vpack.c.bf16 %v880, %v880
        %v883 = vmul.bf16 %v881, 1069105081
        %v884 = vpow.bf16.pop %v883
        %v885 = vunpack.c.l.bf16 %v884
        %v886 = vsel %vm830, %v885, 0.0
        %887 = vadd.xlane.f32.xlu0 %v886
        %v888 = vpop.xlane.xlu0 %887
        %v889 = vrcp.pop %v888
        %v891 = vsel %vm830, %v884, 0
        %vm893 = vcmask 1043456
        %v895 = vsel %vm893, %v829, 0
        %897 = vmatprep.subr.bf16.mxu0 0
        %898 = vmatpush1.bf16.msra.mxu0 %v895
        %899 = vmatprep.subr.bf16.mxu0 0
        %900 = vmatpush1.bf16.msra.mxu0 0
        %901 = vmatprep.subr.bf16.mxu0 0
        %902 = vmatpush1.bf16.msra.mxu0 0
        %903 = vmatprep.subr.bf16.mxu0 0
        %904 = vmatpush1.bf16.msra.mxu0 0
        %905 = vmatprep.subr.bf16.mxu0 0
        %906 = vmatpush1.bf16.msra.mxu0 0
        %907 = vmatprep.subr.bf16.mxu0 0
        %908 = vmatpush1.bf16.msra.mxu0 0
        %909 = vmatprep.subr.bf16.mxu0 0
        %910 = vmatpush1.bf16.msra.mxu0 0
        %911 = vmatprep.subr.bf16.mxu0 0
        %912 = vmatpush1.bf16.msra.mxu0 0
        %913 = vmatprep.subr.bf16.mxu0 0
        %914 = vmatpush1.bf16.msra.mxu0 0
        %915 = vmatprep.subr.bf16.mxu0 0
        %916 = vmatpush1.bf16.msra.mxu0 0
        %917 = vmatprep.subr.bf16.mxu0 0
        %918 = vmatpush1.bf16.msra.mxu0 0
        %919 = vmatprep.subr.bf16.mxu0 0
        %920 = vmatpush1.bf16.msra.mxu0 0
        %921 = vmatprep.subr.bf16.mxu0 0
        %922 = vmatpush1.bf16.msra.mxu0 0
        %923 = vmatprep.subr.bf16.mxu0 0
        %924 = vmatpush1.bf16.msra.mxu0 0
        %925 = vmatprep.subr.bf16.mxu0 0
        %926 = vmatpush1.bf16.msra.mxu0 0
        %927 = vmatprep.subr.bf16.mxu0 0
        %928 = vmatpush1.bf16.msra.mxu0 0
        %929 = vmatprep.mubr.bf16.mxu0 0
        %930 = vmatmul.mubr.bf16.gmra.mrb[0].mxu0 %v891
        %v931 = vpop.f32.mrb[0].mxu0
        %v932 = vadd.f32 0.0, %v931
        %v933 = vpop.f32.mrb[0].mxu0
        %v934 = vpop.f32.mrb[0].mxu0
        %v935 = vpop.f32.mrb[0].mxu0
        %936 = vdwg.mxu0
        %v937 = vmul.f32 %v932, %v889
        %v938 = vpack.c.bf16 %v937, %v937
        %vm939 = vcmask 60416
        %940 = vst.msk [vmem:[#allocation2] sm:$0xf] %vm939, %v938
        %942 = vrot.lane.b32.xlu0 %v827, 120
        %v943 = vpop.permute.xlu0 %942
        %v945 = vunpack.c.l.b16 %v828
        %v946 = vpack.c.b16 %v945, %v945
        %947 = vrot.lane.b32.xlu0 %v946, 120
        %v948 = vpop.permute.xlu0 %947
        %v950 = vsel %vm830, %v943, 0
        %v953 = vsel %vm830, %v948, 0
        %955 = vmatprep.subr.bf16.mxu0 0
        %956 = vmatpush1.bf16.xpose.msra.mxu0 %v953
        %957 = vmatprep.subr.bf16.mxu0 0
        %958 = vmatpush1.bf16.xpose.msra.mxu0 0
        %959 = vmatprep.subr.bf16.mxu0 0
        %960 = vmatpush1.bf16.xpose.msra.mxu0 0
        %961 = vmatprep.subr.bf16.mxu0 0
        %962 = vmatpush1.bf16.xpose.msra.mxu0 0
        %963 = vmatprep.subr.bf16.mxu0 0
        %964 = vmatpush1.bf16.xpose.msra.mxu0 0
        %965 = vmatprep.subr.bf16.mxu0 0
        %966 = vmatpush1.bf16.xpose.msra.mxu0 0
        %967 = vmatprep.subr.bf16.mxu0 0
        %968 = vmatpush1.bf16.xpose.msra.mxu0 0
        %969 = vmatprep.subr.bf16.mxu0 0
        %970 = vmatpush1.bf16.xpose.msra.mxu0 0
        %971 = vmatprep.subr.bf16.mxu0 0
        %972 = vmatpush1.bf16.xpose.msra.mxu0 0
        %973 = vmatprep.subr.bf16.mxu0 0
        %974 = vmatpush1.bf16.xpose.msra.mxu0 0
        %975 = vmatprep.subr.bf16.mxu0 0
        %976 = vmatpush1.bf16.xpose.msra.mxu0 0
        %977 = vmatprep.subr.bf16.mxu0 0
        %978 = vmatpush1.bf16.xpose.msra.mxu0 0
        %979 = vmatprep.subr.bf16.mxu0 0
        %980 = vmatpush1.bf16.xpose.msra.mxu0 0
        %981 = vmatprep.subr.bf16.mxu0 0
        %982 = vmatpush1.bf16.xpose.msra.mxu0 0
        %983 = vmatprep.subr.bf16.mxu0 0
        %984 = vmatpush1.bf16.xpose.msra.mxu0 0
        %985 = vmatprep.subr.bf16.mxu0 0
        %986 = vmatpush1.bf16.xpose.msra.mxu0 0
        %987 = vmatprep.mubr.bf16.mxu0 0
        %988 = vmatmul.mubr.bf16.gmra.mrb[0].mxu0 %v950
        %v989 = vpop.f32.mrb[0].mxu0
        %v990 = vadd.f32 0.0, %v989
        %v991 = vpop.f32.mrb[0].mxu0
        %v992 = vpop.f32.mrb[0].mxu0
        %v993 = vpop.f32.mrb[0].mxu0
        %994 = vdwg.mxu0
        %v995 = vsel %vm830, %v990, -inf
        %996 = vmax.xlane.f32.xlu0 %v995
        %v997 = vpop.xlane.xlu0 %996
        %v998 = vsub.f32 %v990, %v997
        %v999 = vpack.c.bf16 %v998, %v998
        %v1001 = vmul.bf16 %v999, 1069105081
        %v1002 = vpow.bf16.pop %v1001
        %v1003 = vunpack.c.l.bf16 %v1002
        %v1004 = vsel %vm830, %v1003, 0.0
        %1005 = vadd.xlane.f32.xlu0 %v1004
        %v1006 = vpop.xlane.xlu0 %1005
        %v1007 = vrcp.pop %v1006
        %v1009 = vunpack.c.l.b16 %v829
        %v1010 = vpack.c.b16 %v1009, %v1009
        %1011 = vrot.lane.b32.xlu0 %v1010, 120
        %v1012 = vpop.permute.xlu0 %1011
        %v1014 = vsel %vm830, %v1002, 0
        %v1017 = vsel %vm893, %v1012, 0
        %1019 = vmatprep.subr.bf16.mxu0 0
        %1020 = vmatpush1.bf16.msra.mxu0 %v1017
        %1021 = vmatprep.subr.bf16.mxu0 0
        %1022 = vmatpush1.bf16.msra.mxu0 0
        %1023 = vmatprep.subr.bf16.mxu0 0
        %1024 = vmatpush1.bf16.msra.mxu0 0
        %1025 = vmatprep.subr.bf16.mxu0 0
        %1026 = vmatpush1.bf16.msra.mxu0 0
        %1027 = vmatprep.subr.bf16.mxu0 0
        %1028 = vmatpush1.bf16.msra.mxu0 0
        %1029 = vmatprep.subr.bf16.mxu0 0
        %1030 = vmatpush1.bf16.msra.mxu0 0
        %1031 = vmatprep.subr.bf16.mxu0 0
        %1032 = vmatpush1.bf16.msra.mxu0 0
        %1033 = vmatprep.subr.bf16.mxu0 0
        %1034 = vmatpush1.bf16.msra.mxu0 0
        %1035 = vmatprep.subr.bf16.mxu0 0
        %1036 = vmatpush1.bf16.msra.mxu0 0
        %1037 = vmatprep.subr.bf16.mxu0 0
        %1038 = vmatpush1.bf16.msra.mxu0 0
        %1039 = vmatprep.subr.bf16.mxu0 0
        %1040 = vmatpush1.bf16.msra.mxu0 0
        %1041 = vmatprep.subr.bf16.mxu0 0
        %1042 = vmatpush1.bf16.msra.mxu0 0
        %1043 = vmatprep.subr.bf16.mxu0 0
        %1044 = vmatpush1.bf16.msra.mxu0 0
        %1045 = vmatprep.subr.bf16.mxu0 0
        %1046 = vmatpush1.bf16.msra.mxu0 0
        %1047 = vmatprep.subr.bf16.mxu0 0
        %1048 = vmatpush1.bf16.msra.mxu0 0
        %1049 = vmatprep.subr.bf16.mxu0 0
        %1050 = vmatpush1.bf16.msra.mxu0 0
        %1051 = vmatprep.mubr.bf16.mxu0 0
        %1052 = vmatmul.mubr.bf16.gmra.mrb[0].mxu0 %v1014
        %v1053 = vpop.f32.mrb[0].mxu0
        %v1054 = vadd.f32 0.0, %v1053
        %v1055 = vpop.f32.mrb[0].mxu0
        %v1056 = vpop.f32.mrb[0].mxu0
        %v1057 = vpop.f32.mrb[0].mxu0
        %1058 = vdwg.mxu0
        %v1059 = vmul.f32 %v1054, %v1007
        %v1060 = vpack.c.bf16 %v1059, %v1059
        %v1062 = vunpack.c.l.b16 %v1060
        %v1063 = vpack.c.b16 %v1062, %v1062
        %1064 = vrot.lane.b32.xlu0 %v1063, 8
        %v1065 = vpop.permute.xlu0 %1064
        %vm1067 = vcmask 126016
        %1068 = vst.msk [vmem:[#allocation2] sm:$0xf] %vm1067, %v1065
        %1069 = vrot.lane.b32.xlu0 %v827, 112
        %v1070 = vpop.permute.xlu0 %1069
        %1071 = vrot.lane.b32.xlu0 %v946, 112
        %v1072 = vpop.permute.xlu0 %1071
        %v1074 = vsel %vm830, %v1070, 0
        %v1077 = vsel %vm830, %v1072, 0
        %1079 = vmatprep.subr.bf16.mxu0 0
        %1080 = vmatpush1.bf16.xpose.msra.mxu0 %v1077
        %1081 = vmatprep.subr.bf16.mxu0 0
        %1082 = vmatpush1.bf16.xpose.msra.mxu0 0
        %1083 = vmatprep.subr.bf16.mxu0 0
        %1084 = vmatpush1.bf16.xpose.msra.mxu0 0
        %1085 = vmatprep.subr.bf16.mxu0 0
        %1086 = vmatpush1.bf16.xpose.msra.mxu0 0
        %1087 = vmatprep.subr.bf16.mxu0 0
        %1088 = vmatpush1.bf16.xpose.msra.mxu0 0
        %1089 = vmatprep.subr.bf16.mxu0 0
        %1090 = vmatpush1.bf16.xpose.msra.mxu0 0
        %1091 = vmatprep.subr.bf16.mxu0 0
        %1092 = vmatpush1.bf16.xpose.msra.mxu0 0
        %1093 = vmatprep.subr.bf16.mxu0 0
        %1094 = vmatpush1.bf16.xpose.msra.mxu0 0
        %1095 = vmatprep.subr.bf16.mxu0 0
        %1096 = vmatpush1.bf16.xpose.msra.mxu0 0
        %1097 = vmatprep.subr.bf16.mxu0 0
        %1098 = vmatpush1.bf16.xpose.msra.mxu0 0
        %1099 = vmatprep.subr.bf16.mxu0 0
        %1100 = vmatpush1.bf16.xpose.msra.mxu0 0
        %1101 = vmatprep.subr.bf16.mxu0 0
        %1102 = vmatpush1.bf16.xpose.msra.mxu0 0
        %1103 = vmatprep.subr.bf16.mxu0 0
        %1104 = vmatpush1.bf16.xpose.msra.mxu0 0
        %1105 = vmatprep.subr.bf16.mxu0 0
        %1106 = vmatpush1.bf16.xpose.msra.mxu0 0
        %1107 = vmatprep.subr.bf16.mxu0 0
        %1108 = vmatpush1.bf16.xpose.msra.mxu0 0
        %1109 = vmatprep.subr.bf16.mxu0 0
        %1110 = vmatpush1.bf16.xpose.msra.mxu0 0
        %1111 = vmatprep.mubr.bf16.mxu0 0
        %1112 = vmatmul.mubr.bf16.gmra.mrb[0].mxu0 %v1074
        %v1113 = vpop.f32.mrb[0].mxu0
        %v1114 = vadd.f32 0.0, %v1113
        %v1115 = vpop.f32.mrb[0].mxu0
        %v1116 = vpop.f32.mrb[0].mxu0
        %v1117 = vpop.f32.mrb[0].mxu0
        %1118 = vdwg.mxu0
        %v1119 = vsel %vm830, %v1114, -inf
        %1120 = vmax.xlane.f32.xlu0 %v1119
        %v1121 = vpop.xlane.xlu0 %1120
        %v1122 = vsub.f32 %v1114, %v1121
        %v1123 = vpack.c.bf16 %v1122, %v1122
        %v1125 = vmul.bf16 %v1123, 1069105081
        %v1126 = vpow.bf16.pop %v1125
        %v1127 = vunpack.c.l.bf16 %v1126
        %v1128 = vsel %vm830, %v1127, 0.0
        %1129 = vadd.xlane.f32.xlu0 %v1128
        %v1130 = vpop.xlane.xlu0 %1129
        %v1131 = vrcp.pop %v1130
        %1132 = vrot.lane.b32.xlu0 %v1010, 112
        %v1133 = vpop.permute.xlu0 %1132
        %v1135 = vsel %vm830, %v1126, 0
        %v1138 = vsel %vm893, %v1133, 0
        %1140 = vmatprep.subr.bf16.mxu0 0
        %1141 = vmatpush1.bf16.msra.mxu0 %v1138
        %1142 = vmatprep.subr.bf16.mxu0 0
        %1143 = vmatpush1.bf16.msra.mxu0 0
        %1144 = vmatprep.subr.bf16.mxu0 0
        %1145 = vmatpush1.bf16.msra.mxu0 0
        %1146 = vmatprep.subr.bf16.mxu0 0
        %1147 = vmatpush1.bf16.msra.mxu0 0
        %1148 = vmatprep.subr.bf16.mxu0 0
        %1149 = vmatpush1.bf16.msra.mxu0 0
        %1150 = vmatprep.subr.bf16.mxu0 0
        %1151 = vmatpush1.bf16.msra.mxu0 0
        %1152 = vmatprep.subr.bf16.mxu0 0
        %1153 = vmatpush1.bf16.msra.mxu0 0
        %1154 = vmatprep.subr.bf16.mxu0 0
        %1155 = vmatpush1.bf16.msra.mxu0 0
        %1156 = vmatprep.subr.bf16.mxu0 0
        %1157 = vmatpush1.bf16.msra.mxu0 0
        %1158 = vmatprep.subr.bf16.mxu0 0
        %1159 = vmatpush1.bf16.msra.mxu0 0
        %1160 = vmatprep.subr.bf16.mxu0 0
        %1161 = vmatpush1.bf16.msra.mxu0 0
        %1162 = vmatprep.subr.bf16.mxu0 0
        %1163 = vmatpush1.bf16.msra.mxu0 0
        %1164 = vmatprep.subr.bf16.mxu0 0
        %1165 = vmatpush1.bf16.msra.mxu0 0
        %1166 = vmatprep.subr.bf16.mxu0 0
        %1167 = vmatpush1.bf16.msra.mxu0 0
        %1168 = vmatprep.subr.bf16.mxu0 0
        %1169 = vmatpush1.bf16.msra.mxu0 0
        %1170 = vmatprep.subr.bf16.mxu0 0
        %1171 = vmatpush1.bf16.msra.mxu0 0
        %1172 = vmatprep.mubr.bf16.mxu0 0
        %1173 = vmatmul.mubr.bf16.gmra.mrb[0].mxu0 %v1135
        %v1174 = vpop.f32.mrb[0].mxu0
        %v1175 = vadd.f32 0.0, %v1174
        %v1176 = vpop.f32.mrb[0].mxu0
        %v1177 = vpop.f32.mrb[0].mxu0
        %v1178 = vpop.f32.mrb[0].mxu0
        %1179 = vdwg.mxu0
        %v1180 = vmul.f32 %v1175, %v1131
        %v1181 = vpack.c.bf16 %v1180, %v1180
        %v1183 = vunpack.c.l.b16 %v1181
        %v1184 = vpack.c.b16 %v1183, %v1183
        %1185 = vrot.lane.b32.xlu0 %v1184, 16
        %v1186 = vpop.permute.xlu0 %1185
        %vm1188 = vcmask 191616
        %1189 = vst.msk [vmem:[#allocation2] sm:$0xf] %vm1188, %v1186
        %1190 = vrot.lane.b32.xlu0 %v827, 104
        %v1191 = vpop.permute.xlu0 %1190
        %1192 = vrot.lane.b32.xlu0 %v946, 104
        %v1193 = vpop.permute.xlu0 %1192
        %v1195 = vsel %vm830, %v1191, 0
        %v1198 = vsel %vm830, %v1193, 0
        %1200 = vmatprep.subr.bf16.mxu0 0
        %1201 = vmatpush1.bf16.xpose.msra.mxu0 %v1198
        %1202 = vmatprep.subr.bf16.mxu0 0
        %1203 = vmatpush1.bf16.xpose.msra.mxu0 0
        %1204 = vmatprep.subr.bf16.mxu0 0
        %1205 = vmatpush1.bf16.xpose.msra.mxu0 0
        %1206 = vmatprep.subr.bf16.mxu0 0
        %1207 = vmatpush1.bf16.xpose.msra.mxu0 0
        %1208 = vmatprep.subr.bf16.mxu0 0
        %1209 = vmatpush1.bf16.xpose.msra.mxu0 0
        %1210 = vmatprep.subr.bf16.mxu0 0
        %1211 = vmatpush1.bf16.xpose.msra.mxu0 0
        %1212 = vmatprep.subr.bf16.mxu0 0
        %1213 = vmatpush1.bf16.xpose.msra.mxu0 0
        %1214 = vmatprep.subr.bf16.mxu0 0
        %1215 = vmatpush1.bf16.xpose.msra.mxu0 0
        %1216 = vmatprep.subr.bf16.mxu0 0
        %1217 = vmatpush1.bf16.xpose.msra.mxu0 0
        %1218 = vmatprep.subr.bf16.mxu0 0
        %1219 = vmatpush1.bf16.xpose.msra.mxu0 0
        %1220 = vmatprep.subr.bf16.mxu0 0
        %1221 = vmatpush1.bf16.xpose.msra.mxu0 0
        %1222 = vmatprep.subr.bf16.mxu0 0
        %1223 = vmatpush1.bf16.xpose.msra.mxu0 0
        %1224 = vmatprep.subr.bf16.mxu0 0
        %1225 = vmatpush1.bf16.xpose.msra.mxu0 0
        %1226 = vmatprep.subr.bf16.mxu0 0
        %1227 = vmatpush1.bf16.xpose.msra.mxu0 0
        %1228 = vmatprep.subr.bf16.mxu0 0
        %1229 = vmatpush1.bf16.xpose.msra.mxu0 0
        %1230 = vmatprep.subr.bf16.mxu0 0
        %1231 = vmatpush1.bf16.xpose.msra.mxu0 0
        %1232 = vmatprep.mubr.bf16.mxu0 0
        %1233 = vmatmul.mubr.bf16.gmra.mrb[0].mxu0 %v1195
        %v1234 = vpop.f32.mrb[0].mxu0
        %v1235 = vadd.f32 0.0, %v1234
        %v1236 = vpop.f32.mrb[0].mxu0
        %v1237 = vpop.f32.mrb[0].mxu0
        %v1238 = vpop.f32.mrb[0].mxu0
        %1239 = vdwg.mxu0
        %v1240 = vsel %vm830, %v1235, -inf
        %1241 = vmax.xlane.f32.xlu0 %v1240
        %v1242 = vpop.xlane.xlu0 %1241
        %v1243 = vsub.f32 %v1235, %v1242
        %v1244 = vpack.c.bf16 %v1243, %v1243
        %v1246 = vmul.bf16 %v1244, 1069105081
        %v1247 = vpow.bf16.pop %v1246
        %v1248 = vunpack.c.l.bf16 %v1247
        %v1249 = vsel %vm830, %v1248, 0.0
        %1250 = vadd.xlane.f32.xlu0 %v1249
        %v1251 = vpop.xlane.xlu0 %1250
        %v1252 = vrcp.pop %v1251
        %1253 = vrot.lane.b32.xlu0 %v1010, 104
        %v1254 = vpop.permute.xlu0 %1253
        %v1256 = vsel %vm830, %v1247, 0
        %v1259 = vsel %vm893, %v1254, 0
        %1261 = vmatprep.subr.bf16.mxu0 0
        %1262 = vmatpush1.bf16.msra.mxu0 %v1259
        %1263 = vmatprep.subr.bf16.mxu0 0
        %1264 = vmatpush1.bf16.msra.mxu0 0
        %1265 = vmatprep.subr.bf16.mxu0 0
        %1266 = vmatpush1.bf16.msra.mxu0 0
        %1267 = vmatprep.subr.bf16.mxu0 0
        %1268 = vmatpush1.bf16.msra.mxu0 0
        %1269 = vmatprep.subr.bf16.mxu0 0
        %1270 = vmatpush1.bf16.msra.mxu0 0
        %1271 = vmatprep.subr.bf16.mxu0 0
        %1272 = vmatpush1.bf16.msra.mxu0 0
        %1273 = vmatprep.subr.bf16.mxu0 0
        %1274 = vmatpush1.bf16.msra.mxu0 0
        %1275 = vmatprep.subr.bf16.mxu0 0
        %1276 = vmatpush1.bf16.msra.mxu0 0
        %1277 = vmatprep.subr.bf16.mxu0 0
        %1278 = vmatpush1.bf16.msra.mxu0 0
        %1279 = vmatprep.subr.bf16.mxu0 0
        %1280 = vmatpush1.bf16.msra.mxu0 0
        %1281 = vmatprep.subr.bf16.mxu0 0
        %1282 = vmatpush1.bf16.msra.mxu0 0
        %1283 = vmatprep.subr.bf16.mxu0 0
        %1284 = vmatpush1.bf16.msra.mxu0 0
        %1285 = vmatprep.subr.bf16.mxu0 0
        %1286 = vmatpush1.bf16.msra.mxu0 0
        %1287 = vmatprep.subr.bf16.mxu0 0
        %1288 = vmatpush1.bf16.msra.mxu0 0
        %1289 = vmatprep.subr.bf16.mxu0 0
        %1290 = vmatpush1.bf16.msra.mxu0 0
        %1291 = vmatprep.subr.bf16.mxu0 0
        %1292 = vmatpush1.bf16.msra.mxu0 0
        %1293 = vmatprep.mubr.bf16.mxu0 0
        %1294 = vmatmul.mubr.bf16.gmra.mrb[0].mxu0 %v1256
        %v1295 = vpop.f32.mrb[0].mxu0
        %v1296 = vadd.f32 0.0, %v1295
        %v1297 = vpop.f32.mrb[0].mxu0
        %v1298 = vpop.f32.mrb[0].mxu0
        %v1299 = vpop.f32.mrb[0].mxu0
        %1300 = vdwg.mxu0
        %v1301 = vmul.f32 %v1296, %v1252
        %v1302 = vpack.c.bf16 %v1301, %v1301
        %v1304 = vunpack.c.l.b16 %v1302
        %v1305 = vpack.c.b16 %v1304, %v1304
        %1306 = vrot.lane.b32.xlu0 %v1305, 24
        %v1307 = vpop.permute.xlu0 %1306
        %vm1309 = vcmask 257216
        %1310 = vst.msk [vmem:[#allocation2] sm:$0xf] %vm1309, %v1307
        %v1311 = vld [vmem:[#allocation2] sm:$0xf]
        %v1312 = vld [vmem:[#allocation12] sm:$0xf]
        %v1313 = vld [vmem:[#allocation12 + $0x4] sm:$0xf]
        %v1314 = vld [vmem:[#allocation12 + $0x8] sm:$0xf]
        %v1315 = vld [vmem:[#allocation12 + $0xc] sm:$0xf]
        %v1316 = vld [vmem:[#allocation14] sm:$0x1]
        %v1318 = vlaneseq
        %v1319 = vshrl.u32 %v1318, 7
        %v1320 = vsub.s32 0, %v1319
        %v1321 = vrot.slane %v1316, %v1320
        %v1327 = vunpack.c.l.b16 %v1312
        %v1328 = vunpack.c.l.b16 %v1313
        %v1329 = vunpack.c.l.b16 %v1314
        %v1330 = vunpack.c.l.b16 %v1315
        %v1331 = vpack.c.b16 %v1328, %v1327
        %v1332 = vpack.c.b16 %v1330, %v1329
        %v1336 = vsel %vm782, %v1311, 0
        %1338 = vmatprep.subr.bf16.mxu0 0
        %1339 = vmatpush1.bf16.msra.mxu0 %v1331
        %1340 = vmatprep.subr.bf16.mxu0 0
        %1341 = vmatpush1.bf16.msra.mxu0 %v1332
        %1342 = vmatprep.subr.bf16.mxu0 0
        %1343 = vmatpush1.bf16.msra.mxu0 0
        %1344 = vmatprep.subr.bf16.mxu0 0
        %1345 = vmatpush1.bf16.msra.mxu0 0
        %1346 = vmatprep.subr.bf16.mxu0 0
        %1347 = vmatpush1.bf16.msra.mxu0 0
        %1348 = vmatprep.subr.bf16.mxu0 0
        %1349 = vmatpush1.bf16.msra.mxu0 0
        %1350 = vmatprep.subr.bf16.mxu0 0
        %1351 = vmatpush1.bf16.msra.mxu0 0
        %1352 = vmatprep.subr.bf16.mxu0 0
        %1353 = vmatpush1.bf16.msra.mxu0 0
        %1354 = vmatprep.subr.bf16.mxu0 0
        %1355 = vmatpush1.bf16.msra.mxu0 0
        %1356 = vmatprep.subr.bf16.mxu0 0
        %1357 = vmatpush1.bf16.msra.mxu0 0
        %1358 = vmatprep.subr.bf16.mxu0 0
        %1359 = vmatpush1.bf16.msra.mxu0 0
        %1360 = vmatprep.subr.bf16.mxu0 0
        %1361 = vmatpush1.bf16.msra.mxu0 0
        %1362 = vmatprep.subr.bf16.mxu0 0
        %1363 = vmatpush1.bf16.msra.mxu0 0
        %1364 = vmatprep.subr.bf16.mxu0 0
        %1365 = vmatpush1.bf16.msra.mxu0 0
        %1366 = vmatprep.subr.bf16.mxu0 0
        %1367 = vmatpush1.bf16.msra.mxu0 0
        %1368 = vmatprep.subr.bf16.mxu0 0
        %1369 = vmatpush1.bf16.msra.mxu0 0
        %1370 = vmatprep.mubr.bf16.mxu0 0
        %1371 = vmatmul.mubr.bf16.gmra.mrb[0].mxu0 %v1336
        %v1372 = vpop.f32.mrb[0].mxu0
        %v1373 = vadd.f32 %v1321, %v1372
        %v1374 = vpop.f32.mrb[0].mxu0
        %v1375 = vpop.f32.mrb[0].mxu0
        %v1376 = vpop.f32.mrb[0].mxu0
        %1377 = vdwg.mxu0
        %v1378 = vadd.f32 %v757, %v1373
        %v1379 = vld [vmem:[#allocation15] sm:$0x1]
        %v1380 = vld [vmem:[#allocation17] sm:$0x1]
        %v1381 = vsel %vm782, %v1378, 0.0
        %1382 = vadd.xlane.f32.xlu0 %v1381
        %v1383 = vpop.xlane.xlu0 %1382
        %v1384 = vrcp.pop 32.0
        %v1385 = vmul.f32 %v1383, %v1384
        %v1386 = vsub.f32 %v1378, %v1385
        %v1387 = vmul.f32 %v1386, %v1386
        %v1388 = vsel %vm782, %v1387, 0.0
        %1389 = vadd.xlane.f32.xlu0 %v1388
        %v1390 = vpop.xlane.xlu0 %1389
        %v1391 = vmul.f32 %v1390, %v1384
        %v1392 = vadd.f32 %v1391, 1e-05
        %v1393 = vrsqrt.pop %v1392
        %v1394 = vmul.f32 %v1386, %v1393
        %v1396 = vlaneseq
        %v1397 = vshrl.u32 %v1396, 7
        %v1398 = vsub.s32 0, %v1397
        %v1399 = vrot.slane %v1379, %v1398
        %v1401 = vmul.f32 %v1394, %v1399
        %v1403 = vlaneseq
        %v1404 = vshrl.u32 %v1403, 7
        %v1405 = vsub.s32 0, %v1404
        %v1406 = vrot.slane %v1380, %v1405
        %v1408 = vadd.f32 %v1401, %v1406
        %v1409 = vpack.c.bf16 %v1408, %v1408
        %v1410 = vld [vmem:[#allocation21] sm:$0xf]
        %v1411 = vld [vmem:[#allocation21 + $0x4] sm:$0xf]
        %v1412 = vld [vmem:[#allocation21 + $0x8] sm:$0xf]
        %v1413 = vld [vmem:[#allocation21 + $0xc] sm:$0xf]
        %v1414 = vld [vmem:[#allocation23] sm:$0x1]
        %v1416 = vlaneseq
        %v1417 = vshrl.u32 %v1416, 7
        %v1418 = vsub.s32 0, %v1417
        %v1419 = vrot.slane %v1414, %v1418
        %v1425 = vunpack.c.l.b16 %v1410
        %v1426 = vunpack.c.l.b16 %v1411
        %v1427 = vunpack.c.l.b16 %v1412
        %v1428 = vunpack.c.l.b16 %v1413
        %v1429 = vpack.c.b16 %v1426, %v1425
        %v1430 = vpack.c.b16 %v1428, %v1427
        %v1434 = vsel %vm782, %v1409, 0
        %1436 = vmatprep.subr.bf16.mxu0 0
        %1437 = vmatpush1.bf16.msra.mxu0 %v1429
        %1438 = vmatprep.subr.bf16.mxu0 0
        %1439 = vmatpush1.bf16.msra.mxu0 %v1430
        %1440 = vmatprep.subr.bf16.mxu0 0
        %1441 = vmatpush1.bf16.msra.mxu0 0
        %1442 = vmatprep.subr.bf16.mxu0 0
        %1443 = vmatpush1.bf16.msra.mxu0 0
        %1444 = vmatprep.subr.bf16.mxu0 0
        %1445 = vmatpush1.bf16.msra.mxu0 0
        %1446 = vmatprep.subr.bf16.mxu0 0
        %1447 = vmatpush1.bf16.msra.mxu0 0
        %1448 = vmatprep.subr.bf16.mxu0 0
        %1449 = vmatpush1.bf16.msra.mxu0 0
        %1450 = vmatprep.subr.bf16.mxu0 0
        %1451 = vmatpush1.bf16.msra.mxu0 0
        %1452 = vmatprep.subr.bf16.mxu0 0
        %1453 = vmatpush1.bf16.msra.mxu0 0
        %1454 = vmatprep.subr.bf16.mxu0 0
        %1455 = vmatpush1.bf16.msra.mxu0 0
        %1456 = vmatprep.subr.bf16.mxu0 0
        %1457 = vmatpush1.bf16.msra.mxu0 0
        %1458 = vmatprep.subr.bf16.mxu0 0
        %1459 = vmatpush1.bf16.msra.mxu0 0
        %1460 = vmatprep.subr.bf16.mxu0 0
        %1461 = vmatpush1.bf16.msra.mxu0 0
        %1462 = vmatprep.subr.bf16.mxu0 0
        %1463 = vmatpush1.bf16.msra.mxu0 0
        %1464 = vmatprep.subr.bf16.mxu0 0
        %1465 = vmatpush1.bf16.msra.mxu0 0
        %1466 = vmatprep.subr.bf16.mxu0 0
        %1467 = vmatpush1.bf16.msra.mxu0 0
        %1468 = vmatprep.mubr.bf16.mxu0 0
        %1469 = vmatmul.mubr.bf16.gmra.mrb[0].mxu0 %v1434
        %v1470 = vpop.f32.mrb[0].mxu0
        %v1471 = vadd.f32 %v1419, %v1470
        %v1472 = vpop.f32.mrb[0].mxu0
        %v1473 = vpop.f32.mrb[0].mxu0
        %v1474 = vpop.f32.mrb[0].mxu0
        %1475 = vdwg.mxu0
        %v1476 = vmax.f32 %v1471, 0.0
        %v1477 = vpack.c.bf16 %v1476, %v1476
        %v1478 = vld [vmem:[#allocation24] sm:$0xf]
        %v1479 = vld [vmem:[#allocation24 + $0x4] sm:$0xf]
        %v1480 = vld [vmem:[#allocation24 + $0x8] sm:$0xf]
        %v1481 = vld [vmem:[#allocation24 + $0xc] sm:$0xf]
        %v1482 = vld [vmem:[#allocation24 + $0x10] sm:$0xf]
        %v1483 = vld [vmem:[#allocation24 + $0x14] sm:$0xf]
        %v1484 = vld [vmem:[#allocation24 + $0x18] sm:$0xf]
        %v1485 = vld [vmem:[#allocation24 + $0x1c] sm:$0xf]
        %v1486 = vld [vmem:[#allocation26] sm:$0x1]
        %v1488 = vlaneseq
        %v1489 = vshrl.u32 %v1488, 7
        %v1490 = vsub.s32 0, %v1489
        %v1491 = vrot.slane %v1486, %v1490
        %v1501 = vunpack.c.l.b16 %v1478
        %v1502 = vunpack.c.l.b16 %v1479
        %v1503 = vunpack.c.l.b16 %v1480
        %v1504 = vunpack.c.l.b16 %v1481
        %v1505 = vunpack.c.l.b16 %v1482
        %v1506 = vunpack.c.l.b16 %v1483
        %v1507 = vunpack.c.l.b16 %v1484
        %v1508 = vunpack.c.l.b16 %v1485
        %v1509 = vpack.c.b16 %v1502, %v1501
        %v1510 = vpack.c.b16 %v1504, %v1503
        %v1511 = vpack.c.b16 %v1506, %v1505
        %v1512 = vpack.c.b16 %v1508, %v1507
        %vm1517 = vcmask 523264
        %v1519 = vsel %vm1517, %v1477, 0
        %1521 = vmatprep.subr.bf16.mxu0 0
        %1522 = vmatpush1.bf16.msra.mxu0 %v1509
        %1523 = vmatprep.subr.bf16.mxu0 0
        %1524 = vmatpush1.bf16.msra.mxu0 %v1510
        %1525 = vmatprep.subr.bf16.mxu0 0
        %1526 = vmatpush1.bf16.msra.mxu0 %v1511
        %1527 = vmatprep.subr.bf16.mxu0 0
        %1528 = vmatpush1.bf16.msra.mxu0 %v1512
        %1529 = vmatprep.subr.bf16.mxu0 0
        %1530 = vmatpush1.bf16.msra.mxu0 0
        %1531 = vmatprep.subr.bf16.mxu0 0
        %1532 = vmatpush1.bf16.msra.mxu0 0
        %1533 = vmatprep.subr.bf16.mxu0 0
        %1534 = vmatpush1.bf16.msra.mxu0 0
        %1535 = vmatprep.subr.bf16.mxu0 0
        %1536 = vmatpush1.bf16.msra.mxu0 0
        %1537 = vmatprep.subr.bf16.mxu0 0
        %1538 = vmatpush1.bf16.msra.mxu0 0
        %1539 = vmatprep.subr.bf16.mxu0 0
        %1540 = vmatpush1.bf16.msra.mxu0 0
        %1541 = vmatprep.subr.bf16.mxu0 0
        %1542 = vmatpush1.bf16.msra.mxu0 0
        %1543 = vmatprep.subr.bf16.mxu0 0
        %1544 = vmatpush1.bf16.msra.mxu0 0
        %1545 = vmatprep.subr.bf16.mxu0 0
        %1546 = vmatpush1.bf16.msra.mxu0 0
        %1547 = vmatprep.subr.bf16.mxu0 0
        %1548 = vmatpush1.bf16.msra.mxu0 0
        %1549 = vmatprep.subr.bf16.mxu0 0
        %1550 = vmatpush1.bf16.msra.mxu0 0
        %1551 = vmatprep.subr.bf16.mxu0 0
        %1552 = vmatpush1.bf16.msra.mxu0 0
        %1553 = vmatprep.mubr.bf16.mxu0 0
        %1554 = vmatmul.mubr.bf16.gmra.mrb[0].mxu0 %v1519
        %v1555 = vpop.f32.mrb[0].mxu0
        %v1556 = vadd.f32 %v1491, %v1555
        %v1557 = vpop.f32.mrb[0].mxu0
        %v1558 = vpop.f32.mrb[0].mxu0
        %v1559 = vpop.f32.mrb[0].mxu0
        %1560 = vdwg.mxu0
        %v1561 = vadd.f32 %v1408, %v1556
        %v1562 = vld [vmem:[#allocation18] sm:$0x1]
        %v1563 = vld [vmem:[#allocation20] sm:$0x1]
        %v1564 = vsel %vm782, %v1561, 0.0
        %1565 = vadd.xlane.f32.xlu0 %v1564
        %v1566 = vpop.xlane.xlu0 %1565
        %v1567 = vmul.f32 %v1566, %v1384
        %v1568 = vsub.f32 %v1561, %v1567
        %v1569 = vmul.f32 %v1568, %v1568
        %v1570 = vsel %vm782, %v1569, 0.0
        %1571 = vadd.xlane.f32.xlu0 %v1570
        %v1572 = vpop.xlane.xlu0 %1571
        %v1573 = vmul.f32 %v1572, %v1384
        %v1574 = vadd.f32 %v1573, 1e-05
        %v1575 = vrsqrt.pop %v1574
        %v1576 = vmul.f32 %v1568, %v1575
        %v1578 = vlaneseq
        %v1579 = vshrl.u32 %v1578, 7
        %v1580 = vsub.s32 0, %v1579
        %v1581 = vrot.slane %v1562, %v1580
        %v1583 = vmul.f32 %v1576, %v1581
        %v1585 = vlaneseq
        %v1586 = vshrl.u32 %v1585, 7
        %v1587 = vsub.s32 0, %v1586
        %v1588 = vrot.slane %v1563, %v1587
        %v1590 = vadd.f32 %v1583, %v1588
        %1591 = vst.msk [vmem:[%s755] sm:$0xff] %vm782, %v1590
        %s1592 = sand.u32 %s395, 1
        %s1593 = scalar_lea.sflag [#allocation5], %s1592
        %s1594 = sand.u32 %s395, 1
        %s1595 = smul.addr %s1594, 8
        %s1596 = scalar_lea.vmem [#allocation27], %s1595
        // Predicated region
        $region141: #{tpu_custom_call.1} parent=79 // pred_check
          %p1597 = pneg %p405
        $region142: #{tpu_custom_call.1} parent=79 // pred_check_branch
          %1599 = sbr.rel (%p1597) target = $region144
        $region143: #{tpu_custom_call.1} parent=79 // pred_region
          %s1601 = ssub.s32 128, 128
          %1602 = vsyncadd %s1593, %s1601
          %s1603 = sadd.s32 %s46, %s45
          %s1604 = smul.addr %s1603, 128
          %s1605 = scalar_lea.hbm %s15, %s1604
          %s1607 = sshll.u32 %s1596, 4
          %s1608 = int_to_ptr.vmem [resolvable:$true] %s1607
          %1610 = dma.vmem_to_hbm [thread:$0]  %s1608, 128, %s1605, %s1593
        $region144: #{tpu_custom_call.1} parent=79 // pred_fallthru
          _
      $region80: #{tpu_custom_call.1} parent=5 // pred_fallthru
        _
      %p1611 = scmp.le.s32.totalorder 2, %s36
      // Predicated region
      $region145: #{tpu_custom_call.1} parent=5 // pred_check
        %p1612 = pneg %p1611
      $region146: #{tpu_custom_call.1} parent=5 // pred_check_branch
        %1614 = sbr.rel (%p1612) target = $region148
      $region147: #{tpu_custom_call.1} parent=5 // pred_region
        %s1615 = ssub.s32 %s36, 2
        // Predicated region
        $region149: #{tpu_custom_call.1} parent=147 // pred_check
          %p1616 = pneg %p411
        $region150: #{tpu_custom_call.1} parent=147 // pred_check_branch
          %1618 = sbr.rel (%p1616) target = $region152
        $region151: #{tpu_custom_call.1} parent=147 // pred_region
          %s1619 = sand.u32 %s396, 1
          %s1620 = scalar_lea.sflag [#allocation5], %s1619
          %s1621 = sand.u32 %s396, 1
          %s1622 = smul.addr %s1621, 8
          %s1623 = scalar_lea.vmem [#allocation27], %s1622
          %1624 = dma.done %s1620, 128
        $region152: #{tpu_custom_call.1} parent=147 // pred_fallthru
          _
      $region148: #{tpu_custom_call.1} parent=5 // pred_fallthru
        _
    $region6: #{tpu_custom_call.1} parent=1 // loop_footer
      %s40 = sadd.s32 1, %s36
    $region7: #{tpu_custom_call.1} parent=1 // loop_footer_branch
      %35 = sbr.rel target = $region3
    $region8: #{tpu_custom_call.1} parent=1 // loop_exit
      _
    %1625 = vsyncpa [#allocation4], 1
    %s1626 = scalar_lea.sflag [#allocation4], 1
    %1627 = vsyncpa %s1626, 1
    %1628 = vsyncpa [#allocation7], 1
    %s1629 = scalar_lea.sflag [#allocation7], 1
    %1630 = vsyncpa %s1629, 1
    %1631 = vsyncpa [#allocation10], 1
    %1632 = vsyncpa [#allocation13], 1
    %1633 = vsyncpa [#allocation16], 1
    %1634 = vsyncpa [#allocation19], 1
    %1635 = vsyncpa [#allocation22], 1
    %1636 = vsyncpa [#allocation25], 1
    %1637 = vsyncpa [#allocation5], 1
    %s1638 = scalar_lea.sflag [#allocation5], 1
    %1639 = vsyncpa %s1638, 1

</llo_original>
